<compile_context>
chip_gen: v7x
topology: tpu7x:2x2x1
jax: 0.10.0
libtpu: 0.0.40
codegen_flags: <defaults>
</compile_context>

<pallas_src>
import functools
import math

import jax
import jax.numpy as jnp
from jax.experimental import pallas as pl
from jax.experimental.pallas import tpu as pltpu


# ----------------------------------------------------------------------------
# helpers
# ----------------------------------------------------------------------------

_BF16 = jnp.bfloat16
_VMEM_LIMIT = 32 * 1024 * 1024

_PARALLEL_1D = pltpu.CompilerParams(
    dimension_semantics=("parallel",), vmem_limit_bytes=_VMEM_LIMIT)
_SINGLE = pltpu.CompilerParams(
    dimension_semantics=("arbitrary",), vmem_limit_bytes=_VMEM_LIMIT)


def _round_up(x, m):
    return ((x + m - 1) // m) * m


def _gelu_tanh(x):
    # TODO(synk): PyTorch activation='gelu' is exact erf-GELU; the tanh
    # approximation is used for guaranteed Mosaic lowering (reference matches).
    c = math.sqrt(2.0 / math.pi)
    return 0.5 * x * (1.0 + jnp.tanh(c * (x + 0.044715 * x * x * x)))


def _layernorm(x, g, b, eps):
    mean = jnp.mean(x, axis=-1, keepdims=True)
    xc = x - mean
    var = jnp.mean(xc * xc, axis=-1, keepdims=True)
    return xc * jax.lax.rsqrt(var + eps) * g + b


# ----------------------------------------------------------------------------
# Pallas kernels
# ----------------------------------------------------------------------------

def _patch_embed_kernel(p_ref, w1_ref, b1_ref, w2_ref, b2_ref, base_ref, o_ref,
                        *, n_patches):
    """p_ref: [Sp, P] per batch (row 0 = cls slot, rows 1..N = patches, rest 0).
    base_ref: [Sp, E] = cls_token+pos[0] at row 0, pos[1..N] at rows 1..N.
    Output [Sp, E] = patch embedding (masked to patch rows) + base."""
    h = jnp.dot(p_ref[...].astype(_BF16), w1_ref[...],
                preferred_element_type=jnp.float32) + b1_ref[...]
    h = jnp.dot(h.astype(_BF16), w2_ref[...],
                preferred_element_type=jnp.float32) + b2_ref[...]
    row = jax.lax.broadcasted_iota(jnp.int32, h.shape, 0)
    is_patch = jnp.logical_and(row >= 1, row <= n_patches)
    o_ref[...] = (base_ref[...] + jnp.where(is_patch, h, 0.0)).astype(o_ref.dtype)


def _encoder_layer_kernel(x_ref, wqkv_ref, bqkv_ref, wout_ref, bout_ref,
                          ln1g_ref, ln1b_ref, w1_ref, b1_ref, w2_ref, b2_ref,
                          ln2g_ref, ln2b_ref, o_ref,
                          *, num_heads, seq_len, eps):
    """One full post-LN transformer encoder layer for a single batch element."""
    x = x_ref[...]                                        # [Sp, E] f32
    sp, e = x.shape
    dh = e // num_heads
    scale = 1.0 / math.sqrt(dh)

    # --- QKV projection (single MXU matmul, lane-dense [Sp, 3E]) ---
    qkv = jnp.dot(x.astype(_BF16), wqkv_ref[...],
                  preferred_element_type=jnp.float32) + bqkv_ref[...]

    # mask padded key rows (tokens >= seq_len)
    key_idx = jax.lax.broadcasted_iota(jnp.int32, (sp, sp), 1)
    key_valid = key_idx < seq_len

    # --- per-head attention; heads sliced in-kernel, merged lane-dense ---
    heads = []
    for h in range(num_heads):
        q = qkv[:, h * dh:(h + 1) * dh]
        k = qkv[:, e + h * dh:e + (h + 1) * dh]
        v = qkv[:, 2 * e + h * dh:2 * e + (h + 1) * dh]
        s = jax.lax.dot_general(
            q.astype(_BF16), k.astype(_BF16), (((1,), (1,)), ((), ())),
            preferred_element_type=jnp.float32) * scale           # [Sp, Sp]
        s = jnp.where(key_valid, s, -1e30)
        m = jnp.max(s, axis=-1, keepdims=True)
        p = jnp.exp(s - m)
        l = jnp.sum(p, axis=-1, keepdims=True)
        p = p * pl.reciprocal(l, approx=True)                     # EUP slot
        heads.append(jnp.dot(p.astype(_BF16), v.astype(_BF16),
                             preferred_element_type=jnp.float32))  # [Sp, dh]
    attn = jnp.concatenate(heads, axis=-1)                         # [Sp, E]

    # --- output projection + residual + LN1 ---
    proj = jnp.dot(attn.astype(_BF16), wout_ref[...],
                   preferred_element_type=jnp.float32) + bout_ref[...]
    h1 = _layernorm(x + proj, ln1g_ref[...], ln1b_ref[...], eps)

    # --- FFN (Linear -> GELU -> Linear) + residual + LN2 ---
    f = jnp.dot(h1.astype(_BF16), w1_ref[...],
                preferred_element_type=jnp.float32) + b1_ref[...]
    f = _gelu_tanh(f)
    f = jnp.dot(f.astype(_BF16), w2_ref[...],
                preferred_element_type=jnp.float32) + b2_ref[...]
    h2 = _layernorm(h1 + f, ln2g_ref[...], ln2b_ref[...], eps)

    o_ref[...] = h2.astype(o_ref.dtype)


def _head_kernel(x_ref, g_ref, b_ref, w_ref, bias_ref, o_ref, *, eps):
    """Final LayerNorm + classifier on the (padded) CLS rows."""
    ln = _layernorm(x_ref[...], g_ref[...], b_ref[...], eps)
    y = jnp.dot(ln.astype(_BF16), w_ref[...],
                preferred_element_type=jnp.float32) + bias_ref[...]
    o_ref[...] = y.astype(o_ref.dtype)


# ----------------------------------------------------------------------------
# pallas_call wrappers
# ----------------------------------------------------------------------------

def patch_embed(patches_tok, base, w1, b1, w2, b2, *, n_patches):
    B, Sp, P = patches_tok.shape
    E = w1.shape[1]
    return pl.pallas_call(
        functools.partial(_patch_embed_kernel, n_patches=n_patches),
        out_shape=jax.ShapeDtypeStruct((B, Sp, E), jnp.float32),
        grid=(B,),
        in_specs=[
            pl.BlockSpec((None, Sp, P), lambda b: (b, 0, 0)),
            pl.BlockSpec((P, E), lambda b: (0, 0)),
            pl.BlockSpec((1, E), lambda b: (0, 0)),
            pl.BlockSpec((E, E), lambda b: (0, 0)),
            pl.BlockSpec((1, E), lambda b: (0, 0)),
            pl.BlockSpec((Sp, E), lambda b: (0, 0)),
        ],
        out_specs=pl.BlockSpec((None, Sp, E), lambda b: (b, 0, 0)),
        compiler_params=_PARALLEL_1D,
    )(patches_tok, w1.astype(_BF16), b1, w2.astype(_BF16), b2, base)


def encoder_layer(xt, layer, *, num_heads, seq_len, eps=1e-5):
    B, Sp, E = xt.shape
    F = layer["ffn_w1"].shape[1]
    # TODO(synk): at production sizes (E>=768, F=4E) tile the FF dimension with
    # an "arbitrary" grid axis + f32 accumulator scratch instead of holding
    # w1/w2 fully resident (v7x only has 64 MiB VMEM); bf16 weights + the
    # 32 MiB scoped limit are ample at the sizes used here.
    return pl.pallas_call(
        functools.partial(_encoder_layer_kernel, num_heads=num_heads,
                          seq_len=seq_len, eps=eps),
        out_shape=jax.ShapeDtypeStruct((B, Sp, E), jnp.float32),
        grid=(B,),
        in_specs=[
            pl.BlockSpec((None, Sp, E), lambda b: (b, 0, 0)),
            pl.BlockSpec((E, 3 * E), lambda b: (0, 0)),
            pl.BlockSpec((1, 3 * E), lambda b: (0, 0)),
            pl.BlockSpec((E, E), lambda b: (0, 0)),
            pl.BlockSpec((1, E), lambda b: (0, 0)),
            pl.BlockSpec((1, E), lambda b: (0, 0)),
            pl.BlockSpec((1, E), lambda b: (0, 0)),
            pl.BlockSpec((E, F), lambda b: (0, 0)),
            pl.BlockSpec((1, F), lambda b: (0, 0)),
            pl.BlockSpec((F, E), lambda b: (0, 0)),
            pl.BlockSpec((1, E), lambda b: (0, 0)),
            pl.BlockSpec((1, E), lambda b: (0, 0)),
            pl.BlockSpec((1, E), lambda b: (0, 0)),
        ],
        out_specs=pl.BlockSpec((None, Sp, E), lambda b: (b, 0, 0)),
        compiler_params=_PARALLEL_1D,
    )(xt,
      layer["in_proj_w"].astype(_BF16), layer["in_proj_b"],
      layer["out_proj_w"].astype(_BF16), layer["out_proj_b"],
      layer["ln1_g"], layer["ln1_b"],
      layer["ffn_w1"].astype(_BF16), layer["ffn_b1"],
      layer["ffn_w2"].astype(_BF16), layer["ffn_b2"],
      layer["ln2_g"], layer["ln2_b"])


def final_head(cls_rows, norm_g, norm_b, cls_w, cls_b, *, eps=1e-5):
    B, E = cls_rows.shape
    C = cls_w.shape[1]
    Bp = _round_up(B, 8)
    Cp = _round_up(C, 128)          # lane-dense classifier output
    x = jnp.pad(cls_rows, ((0, Bp - B), (0, 0)))
    w = jnp.pad(cls_w, ((0, 0), (0, Cp - C))).astype(_BF16)
    bias = jnp.pad(cls_b, ((0, 0), (0, Cp - C)))
    out = pl.pallas_call(
        functools.partial(_head_kernel, eps=eps),
        out_shape=jax.ShapeDtypeStruct((Bp, Cp), jnp.float32),
        grid=(1,),
        in_specs=[
            pl.BlockSpec((Bp, E), lambda i: (0, 0)),
            pl.BlockSpec((1, E), lambda i: (0, 0)),
            pl.BlockSpec((1, E), lambda i: (0, 0)),
            pl.BlockSpec((E, Cp), lambda i: (0, 0)),
            pl.BlockSpec((1, Cp), lambda i: (0, 0)),
        ],
        out_specs=pl.BlockSpec((Bp, Cp), lambda i: (0, 0)),
        compiler_params=_SINGLE,
    )(x, norm_g, norm_b, w, bias)
    return out[:B, :C]


# ----------------------------------------------------------------------------
# model: parameters + forward
# ----------------------------------------------------------------------------

def patch_extract(x, patch_size):
    """[B, C, D, H, W] -> ([B, N, C*pd*ph*pw], grid). Equivalent to the
    Conv3d(k=stride=patch) im2row; pure data movement, done once in XLA."""
    B, C, D, H, W = x.shape
    pd, ph, pw = patch_size
    assert D % pd == 0 and H % ph == 0 and W % pw == 0, "non-divisible input"
    Dg, Hg, Wg = D // pd, H // ph, W // pw
    x = x.reshape(B, C, Dg, pd, Hg, ph, Wg, pw)
    x = x.transpose(0, 2, 4, 6, 1, 3, 5, 7)
    return x.reshape(B, Dg * Hg * Wg, C * pd * ph * pw), (Dg, Hg, Wg)


def _uniform(key, shape, fan_in):
    lim = 1.0 / math.sqrt(fan_in)
    return jax.random.uniform(key, shape, jnp.float32, -lim, lim)


def init_vit_params(key, *, in_channels, patch_size, embed_dim, num_heads,
                    depth, mlp_ratio, num_classes, num_patches):
    del num_heads  # head split handled at forward time
    pd, ph, pw = patch_size
    patch_vol = in_channels * pd * ph * pw
    ff_dim = int(embed_dim * mlp_ratio)
    keys = jax.random.split(key, 8 + depth)

    params = {
        "patch_proj_w": _uniform(keys[0], (patch_vol, embed_dim), patch_vol),
        "patch_proj_b": _uniform(keys[1], (1, embed_dim), patch_vol),
        "patch_mix_w": _uniform(keys[2], (embed_dim, embed_dim), embed_dim),
        "patch_mix_b": _uniform(keys[3], (1, embed_dim), embed_dim),
        "cls_token": 0.02 * jax.random.normal(keys[4], (1, 1, embed_dim), jnp.float32),
        "pos_embed": 0.02 * jax.random.normal(keys[5], (1, num_patches + 1, embed_dim), jnp.float32),
        "norm_g": jnp.ones((1, embed_dim), jnp.float32),
        "norm_b": jnp.zeros((1, embed_dim), jnp.float32),
        "cls_w": _uniform(keys[6], (embed_dim, num_classes), embed_dim),
        "cls_b": jnp.zeros((1, num_classes), jnp.float32),
        "layers": [],
    }
    for d in range(depth):
        lk = jax.random.split(keys[8 + d], 8)
        params["layers"].append({
            "in_proj_w": _uniform(lk[0], (embed_dim, 3 * embed_dim), embed_dim),
            "in_proj_b": _uniform(lk[1], (1, 3 * embed_dim), embed_dim),
            "out_proj_w": _uniform(lk[2], (embed_dim, embed_dim), embed_dim),
            "out_proj_b": _uniform(lk[3], (1, embed_dim), embed_dim),
            "ffn_w1": _uniform(lk[4], (embed_dim, ff_dim), embed_dim),
            "ffn_b1": _uniform(lk[5], (1, ff_dim), embed_dim),
            "ffn_w2": _uniform(lk[6], (ff_dim, embed_dim), ff_dim),
            "ffn_b2": _uniform(lk[7], (1, embed_dim), ff_dim),
            "ln1_g": jnp.ones((1, embed_dim), jnp.float32),
            "ln1_b": jnp.zeros((1, embed_dim), jnp.float32),
            "ln2_g": jnp.ones((1, embed_dim), jnp.float32),
            "ln2_b": jnp.zeros((1, embed_dim), jnp.float32),
        })
    return params


def vit3d_forward(params, x, *, patch_size, num_heads):
    """x: [B, C, D, H, W] -> [B, num_classes].  Inference; dropout = identity.
    ChannelAttention exists in the PyTorch module but is never used in its
    forward(), so it is intentionally omitted."""
    B = x.shape[0]
    patches, _ = patch_extract(x, patch_size)        # [B, N, P]
    N, P = patches.shape[1], patches.shape[2]
    E = params["patch_proj_w"].shape[1]
    S = N + 1
    Sp = _round_up(S, 8)                              # pad token dim ONCE

    # per-batch patch slab: row 0 = cls slot, rows 1..N = patches, rest zero.
    patches_tok = jnp.pad(patches, ((0, 0), (1, Sp - S), (0, 0)))   # [B, Sp, P]

    # cls token + positional embedding base, shared across batches.
    # TODO(synk): trilinear pos-embed resize for non-default grids not implemented.
    pos = params["pos_embed"][0]                      # [N+1, E]
    base = jnp.concatenate(
        [params["cls_token"][0, 0:1] + pos[0:1],
         pos[1:N + 1],
         jnp.zeros((Sp - S, E), jnp.float32)], axis=0)              # [Sp, E]

    xt = patch_embed(patches_tok, base,
                     params["patch_proj_w"], params["patch_proj_b"],
                     params["patch_mix_w"], params["patch_mix_b"],
                     n_patches=N)                                   # [B, Sp, E]

    for layer in params["layers"]:
        xt = encoder_layer(xt, layer, num_heads=num_heads, seq_len=S)

    cls_rows = xt[:, 0, :]                                          # [B, E]
    return final_head(cls_rows, params["norm_g"], params["norm_b"],
                      params["cls_w"], params["cls_b"])


# ----------------------------------------------------------------------------
# pure-JAX reference (same math incl. bf16 matmul operands) for verification
# ----------------------------------------------------------------------------

def _mm_ref(a, w, b=None):
    y = jnp.dot(a.astype(_BF16), w.astype(_BF16),
                preferred_element_type=jnp.float32)
    return y if b is None else y + b


def vit3d_reference(params, x, *, patch_size, num_heads):
    B = x.shape[0]
    patches, _ = patch_extract(x, patch_size)
    N = patches.shape[1]
    E = params["patch_proj_w"].shape[1]

    tok = _mm_ref(patches.reshape(B * N, -1), params["patch_proj_w"], params["patch_proj_b"])
    tok = _mm_ref(tok, params["patch_mix_w"], params["patch_mix_b"])
    tok = tok.reshape(B, N, E)

    cls = jnp.broadcast_to(params["cls_token"], (B, 1, E))
    xt = jnp.concatenate([cls, tok], axis=1) + params["pos_embed"]
    S = N + 1
    dh = E // num_heads
    scale = 1.0 / math.sqrt(dh)
    x2d = xt.reshape(B * S, E)

    for layer in params["layers"]:
        qkv = _mm_ref(x2d, layer["in_proj_w"], layer["in_proj_b"])
        qkv = qkv.reshape(B, S, 3, num_heads, dh)
        q = qkv[:, :, 0].transpose(0, 2, 1, 3)
        k = qkv[:, :, 1].transpose(0, 2, 1, 3)
        v = qkv[:, :, 2].transpose(0, 2, 1, 3)
        s = jnp.einsum("bhqd,bhkd->bhqk", q.astype(_BF16), k.astype(_BF16),
                       preferred_element_type=jnp.float32) * scale
        s = s - jnp.max(s, axis=-1, keepdims=True)
        p = jnp.exp(s)
        p = p / jnp.sum(p, axis=-1, keepdims=True)
        attn = jnp.einsum("bhqk,bhkd->bhqd", p.astype(_BF16), v.astype(_BF16),
                          preferred_element_type=jnp.float32)
        attn = attn.transpose(0, 2, 1, 3).reshape(B * S, E)
        attn = _mm_ref(attn, layer["out_proj_w"], layer["out_proj_b"])
        x2d = _layernorm(x2d + attn, layer["ln1_g"], layer["ln1_b"], 1e-5)

        h = _gelu_tanh(_mm_ref(x2d, layer["ffn_w1"], layer["ffn_b1"]))
        ff = _mm_ref(h, layer["ffn_w2"], layer["ffn_b2"])
        x2d = _layernorm(x2d + ff, layer["ln2_g"], layer["ln2_b"], 1e-5)

    x2d = _layernorm(x2d, params["norm_g"], params["norm_b"], 1e-5)
    cls_out = x2d.reshape(B, S, E)[:, 0, :]
    return _mm_ref(cls_out, params["cls_w"], params["cls_b"])


# ----------------------------------------------------------------------------
# main
# ----------------------------------------------------------------------------

if __name__ == "__main__":
    key = jax.random.PRNGKey(0)

    # Small shapes consistent with the module: patch_size (4,16,16), 1 channel.
    B = 2
    in_channels = 1
    D, H, W = 8, 32, 32                 # -> grid (2, 2, 2): 8 patches + cls = 9 tokens
    patch_size = (4, 16, 16)
    embed_dim = 128                     # lane-dense, divisible by num_heads
    num_heads = 4
    depth = 2
    mlp_ratio = 4.0
    num_classes = 32

    grid = (D // patch_size[0], H // patch_size[1], W // patch_size[2])
    num_patches = grid[0] * grid[1] * grid[2]

    kx, kp = jax.random.split(key)
    x = jax.random.normal(kx, (B, in_channels, D, H, W), dtype=jnp.float32)
    params = init_vit_params(
        kp, in_channels=in_channels, patch_size=patch_size, embed_dim=embed_dim,
        num_heads=num_heads, depth=depth, mlp_ratio=mlp_ratio,
        num_classes=num_classes, num_patches=num_patches)

    fwd = jax.jit(functools.partial(vit3d_forward, patch_size=patch_size,
                                    num_heads=num_heads))
    out = jax.block_until_ready(fwd(params, x))

    ref = vit3d_reference(params, x, patch_size=patch_size, num_heads=num_heads)

    assert out.shape == (B, num_classes), f"bad output shape {out.shape}"
    assert bool(jnp.all(jnp.isfinite(out))), "non-finite output"
    assert jnp.allclose(out, ref, atol=3e-2, rtol=3e-2), "mismatch vs JAX reference"

    print("KERNEL_OK")
</pallas_src>

<mosaic_0001>
module attributes {stable_mosaic.version = 11 : i64} {
  func.func @_patch_embed_kernel(%arg0: i32, %arg1: memref<1x16x1024xf32, #tpu.memory_space<vmem>>, %arg2: memref<1024x128xbf16, #tpu.memory_space<vmem>>, %arg3: memref<1x128xf32, #tpu.memory_space<vmem>>, %arg4: memref<128x128xbf16, #tpu.memory_space<vmem>>, %arg5: memref<1x128xf32, #tpu.memory_space<vmem>>, %arg6: memref<16x128xf32, #tpu.memory_space<vmem>>, %arg7: memref<1x16x128xf32, #tpu.memory_space<vmem>>) attributes {dimension_semantics = [#tpu.dimension_semantics<parallel>], iteration_bounds = array<i64: 2>, scalar_prefetch = 0 : i64, scratch_operands = 0 : i64, tpu.core_type = #tpu.core_type<tc>, window_params = [{transform_indices = @transform_0, window_bounds = array<i64: 1, 16, 1024>}, {pipeline_mode = #tpu.pipeline_mode<synchronous>, transform_indices = @transform_1, window_bounds = array<i64: 1024, 128>}, {pipeline_mode = #tpu.pipeline_mode<synchronous>, transform_indices = @transform_2, window_bounds = array<i64: 1, 128>}, {pipeline_mode = #tpu.pipeline_mode<synchronous>, transform_indices = @transform_3, window_bounds = array<i64: 128, 128>}, {pipeline_mode = #tpu.pipeline_mode<synchronous>, transform_indices = @transform_4, window_bounds = array<i64: 1, 128>}, {pipeline_mode = #tpu.pipeline_mode<synchronous>, transform_indices = @transform_5, window_bounds = array<i64: 16, 128>}, {transform_indices = @transform_6, window_bounds = array<i64: 1, 16, 128>}]} {
    %c0 = arith.constant 0 : index
    %c0_0 = arith.constant 0 : index
    %c0_1 = arith.constant 0 : index
    %0 = vector.load %arg1[%c0, %c0_0, %c0_1] : memref<1x16x1024xf32, #tpu.memory_space<vmem>>, vector<1x16x1024xf32>
    %1 = vector.shape_cast %0 : vector<1x16x1024xf32> to vector<16x1024xf32>
    %2 = arith.truncf %1 : vector<16x1024xf32> to vector<16x1024xbf16>
    %c0_2 = arith.constant 0 : index
    %c0_3 = arith.constant 0 : index
    %3 = vector.load %arg2[%c0_2, %c0_3] : memref<1024x128xbf16, #tpu.memory_space<vmem>>, vector<1024x128xbf16>
    %cst = arith.constant dense<0.000000e+00> : vector<16x128xf32>
    %4 = tpu.matmul %2, %3, %cst {dimension_numbers = #tpu.dot_dimension_numbers<[1], [0], [0], [1], [0, 0, 1, 1], [], []>} : vector<16x1024xbf16>, vector<1024x128xbf16>, vector<16x128xf32> -> vector<16x128xf32>
    %c0_4 = arith.constant 0 : index
    %c0_5 = arith.constant 0 : index
    %5 = vector.load %arg3[%c0_4, %c0_5] : memref<1x128xf32, #tpu.memory_space<vmem>>, vector<1x128xf32>
    %6 = vector.broadcast %5 : vector<1x128xf32> to vector<16x128xf32>
    %7 = arith.addf %4, %6 : vector<16x128xf32>
    %8 = arith.truncf %7 : vector<16x128xf32> to vector<16x128xbf16>
    %c0_6 = arith.constant 0 : index
    %c0_7 = arith.constant 0 : index
    %9 = vector.load %arg4[%c0_6, %c0_7] : memref<128x128xbf16, #tpu.memory_space<vmem>>, vector<128x128xbf16>
    %cst_8 = arith.constant dense<0.000000e+00> : vector<16x128xf32>
    %10 = tpu.matmul %8, %9, %cst_8 {dimension_numbers = #tpu.dot_dimension_numbers<[1], [0], [0], [1], [0, 0, 1, 1], [], []>} : vector<16x128xbf16>, vector<128x128xbf16>, vector<16x128xf32> -> vector<16x128xf32>
    %c0_9 = arith.constant 0 : index
    %c0_10 = arith.constant 0 : index
    %11 = vector.load %arg5[%c0_9, %c0_10] : memref<1x128xf32, #tpu.memory_space<vmem>>, vector<1x128xf32>
    %12 = vector.broadcast %11 : vector<1x128xf32> to vector<16x128xf32>
    %13 = arith.addf %10, %12 : vector<16x128xf32>
    %14 = tpu.iota {dimensions = array<i32: 0>} : vector<16x128xi32>
    %c1_i32 = arith.constant 1 : i32
    %15 = vector.broadcast %c1_i32 : i32 to vector<16x128xi32>
    %16 = arith.cmpi sge, %14, %15 : vector<16x128xi32>
    %c8_i32 = arith.constant 8 : i32
    %17 = vector.broadcast %c8_i32 : i32 to vector<16x128xi32>
    %18 = arith.cmpi sle, %14, %17 : vector<16x128xi32>
    %19 = arith.andi %16, %18 : vector<16x128xi1>
    %c0_11 = arith.constant 0 : index
    %c0_12 = arith.constant 0 : index
    %20 = vector.load %arg6[%c0_11, %c0_12] : memref<16x128xf32, #tpu.memory_space<vmem>>, vector<16x128xf32>
    %cst_13 = arith.constant 0.000000e+00 : f32
    %21 = vector.broadcast %cst_13 : f32 to vector<16x128xf32>
    %22 = arith.select %19, %13, %21 : vector<16x128xi1>, vector<16x128xf32>
    %23 = arith.addf %20, %22 : vector<16x128xf32>
    %c0_14 = arith.constant 0 : index
    %c0_15 = arith.constant 0 : index
    %c0_16 = arith.constant 0 : index
    %24 = vector.load %arg7[%c0_14, %c0_15, %c0_16] : memref<1x16x128xf32, #tpu.memory_space<vmem>>, vector<1x16x128xf32>
    %25 = vector.shape_cast %24 : vector<1x16x128xf32> to vector<16x128xf32>
    %26 = vector.shape_cast %23 : vector<16x128xf32> to vector<1x16x128xf32>
    tpu.vector_store %arg7[%c0_14, %c0_15, %c0_16], %26 {strides = array<i32>} : memref<1x16x128xf32, #tpu.memory_space<vmem>>, vector<1x16x128xf32>,
    return
  }
  func.func @transform_0(%arg0: i32) -> (i32, i32, i32) {
    %c0_i32 = arith.constant 0 : i32
    %c0_i32_0 = arith.constant 0 : i32
    %c0_i32_1 = arith.constant 0 : i32
    return %arg0, %c0_i32, %c0_i32_0 : i32, i32, i32
  }
  func.func @transform_1(%arg0: i32) -> (i32, i32) {
    %c0_i32 = arith.constant 0 : i32
    %c0_i32_0 = arith.constant 0 : i32
    %c0_i32_1 = arith.constant 0 : i32
    return %c0_i32, %c0_i32_0 : i32, i32
  }
  func.func @transform_2(%arg0: i32) -> (i32, i32) {
    %c0_i32 = arith.constant 0 : i32
    %c0_i32_0 = arith.constant 0 : i32
    %c0_i32_1 = arith.constant 0 : i32
    return %c0_i32, %c0_i32_0 : i32, i32
  }
  func.func @transform_3(%arg0: i32) -> (i32, i32) {
    %c0_i32 = arith.constant 0 : i32
    %c0_i32_0 = arith.constant 0 : i32
    %c0_i32_1 = arith.constant 0 : i32
    return %c0_i32, %c0_i32_0 : i32, i32
  }
  func.func @transform_4(%arg0: i32) -> (i32, i32) {
    %c0_i32 = arith.constant 0 : i32
    %c0_i32_0 = arith.constant 0 : i32
    %c0_i32_1 = arith.constant 0 : i32
    return %c0_i32, %c0_i32_0 : i32, i32
  }
  func.func @transform_5(%arg0: i32) -> (i32, i32) {
    %c0_i32 = arith.constant 0 : i32
    %c0_i32_0 = arith.constant 0 : i32
    %c0_i32_1 = arith.constant 0 : i32
    return %c0_i32, %c0_i32_0 : i32, i32
  }
  func.func @transform_6(%arg0: i32) -> (i32, i32, i32) {
    %c0_i32 = arith.constant 0 : i32
    %c0_i32_0 = arith.constant 0 : i32
    %c0_i32_1 = arith.constant 0 : i32
    return %arg0, %c0_i32, %c0_i32_0 : i32, i32, i32
  }
}

module attributes {stable_mosaic.version = 11 : i64} {
  func.func @_encoder_layer_kernel(%arg0: i32, %arg1: memref<1x16x128xf32, #tpu.memory_space<vmem>>, %arg2: memref<128x384xbf16, #tpu.memory_space<vmem>>, %arg3: memref<1x384xf32, #tpu.memory_space<vmem>>, %arg4: memref<128x128xbf16, #tpu.memory_space<vmem>>, %arg5: memref<1x128xf32, #tpu.memory_space<vmem>>, %arg6: memref<1x128xf32, #tpu.memory_space<vmem>>, %arg7: memref<1x128xf32, #tpu.memory_space<vmem>>, %arg8: memref<128x512xbf16, #tpu.memory_space<vmem>>, %arg9: memref<1x512xf32, #tpu.memory_space<vmem>>, %arg10: memref<512x128xbf16, #tpu.memory_space<vmem>>, %arg11: memref<1x128xf32, #tpu.memory_space<vmem>>, %arg12: memref<1x128xf32, #tpu.memory_space<vmem>>, %arg13: memref<1x128xf32, #tpu.memory_space<vmem>>, %arg14: memref<1x16x128xf32, #tpu.memory_space<vmem>>) attributes {dimension_semantics = [#tpu.dimension_semantics<parallel>], iteration_bounds = array<i64: 2>, scalar_prefetch = 0 : i64, scratch_operands = 0 : i64, tpu.core_type = #tpu.core_type<tc>, window_params = [{transform_indices = @transform_0, window_bounds = array<i64: 1, 16, 128>}, {pipeline_mode = #tpu.pipeline_mode<synchronous>, transform_indices = @transform_1, window_bounds = array<i64: 128, 384>}, {pipeline_mode = #tpu.pipeline_mode<synchronous>, transform_indices = @transform_2, window_bounds = array<i64: 1, 384>}, {pipeline_mode = #tpu.pipeline_mode<synchronous>, transform_indices = @transform_3, window_bounds = array<i64: 128, 128>}, {pipeline_mode = #tpu.pipeline_mode<synchronous>, transform_indices = @transform_4, window_bounds = array<i64: 1, 128>}, {pipeline_mode = #tpu.pipeline_mode<synchronous>, transform_indices = @transform_5, window_bounds = array<i64: 1, 128>}, {pipeline_mode = #tpu.pipeline_mode<synchronous>, transform_indices = @transform_6, window_bounds = array<i64: 1, 128>}, {pipeline_mode = #tpu.pipeline_mode<synchronous>, transform_indices = @transform_7, window_bounds = array<i64: 128, 512>}, {pipeline_mode = #tpu.pipeline_mode<synchronous>, transform_indices = @transform_8, window_bounds = array<i64: 1, 512>}, {pipeline_mode = #tpu.pipeline_mode<synchronous>, transform_indices = @transform_9, window_bounds = array<i64: 512, 128>}, {pipeline_mode = #tpu.pipeline_mode<synchronous>, transform_indices = @transform_10, window_bounds = array<i64: 1, 128>}, {pipeline_mode = #tpu.pipeline_mode<synchronous>, transform_indices = @transform_11, window_bounds = array<i64: 1, 128>}, {pipeline_mode = #tpu.pipeline_mode<synchronous>, transform_indices = @transform_12, window_bounds = array<i64: 1, 128>}, {transform_indices = @transform_13, window_bounds = array<i64: 1, 16, 128>}]} {
    %c0 = arith.constant 0 : index
    %c0_0 = arith.constant 0 : index
    %c0_1 = arith.constant 0 : index
    %0 = vector.load %arg1[%c0, %c0_0, %c0_1] : memref<1x16x128xf32, #tpu.memory_space<vmem>>, vector<1x16x128xf32>
    %1 = vector.shape_cast %0 : vector<1x16x128xf32> to vector<16x128xf32>
    %2 = arith.truncf %1 : vector<16x128xf32> to vector<16x128xbf16>
    %c0_2 = arith.constant 0 : index
    %c0_3 = arith.constant 0 : index
    %3 = vector.load %arg2[%c0_2, %c0_3] : memref<128x384xbf16, #tpu.memory_space<vmem>>, vector<128x384xbf16>
    %cst = arith.constant dense<0.000000e+00> : vector<16x384xf32>
    %4 = tpu.matmul %2, %3, %cst {dimension_numbers = #tpu.dot_dimension_numbers<[1], [0], [0], [1], [0, 0, 1, 1], [], []>} : vector<16x128xbf16>, vector<128x384xbf16>, vector<16x384xf32> -> vector<16x384xf32>
    %c0_4 = arith.constant 0 : index
    %c0_5 = arith.constant 0 : index
    %5 = vector.load %arg3[%c0_4, %c0_5] : memref<1x384xf32, #tpu.memory_space<vmem>>, vector<1x384xf32>
    %6 = vector.broadcast %5 : vector<1x384xf32> to vector<16x384xf32>
    %7 = arith.addf %4, %6 : vector<16x384xf32>
    %8 = tpu.iota {dimensions = array<i32: 1>} : vector<16x16xi32>
    %c9_i32 = arith.constant 9 : i32
    %9 = vector.broadcast %c9_i32 : i32 to vector<16x16xi32>
    %10 = arith.cmpi slt, %8, %9 : vector<16x16xi32>
    %11 = vector.extract_strided_slice %7 {offsets = [0, 0], sizes = [16, 32], strides = [1, 1]} : vector<16x384xf32> to vector<16x32xf32>
    %12 = vector.extract_strided_slice %7 {offsets = [0, 128], sizes = [16, 32], strides = [1, 1]} : vector<16x384xf32> to vector<16x32xf32>
    %13 = vector.extract_strided_slice %7 {offsets = [0, 256], sizes = [16, 32], strides = [1, 1]} : vector<16x384xf32> to vector<16x32xf32>
    %14 = arith.truncf %11 : vector<16x32xf32> to vector<16x32xbf16>
    %15 = arith.truncf %12 : vector<16x32xf32> to vector<16x32xbf16>
    %cst_6 = arith.constant dense<0.000000e+00> : vector<16x16xf32>
    %16 = tpu.matmul %14, %15, %cst_6 {dimension_numbers = #tpu.dot_dimension_numbers<[1], [1], [0], [0], [0, 0, 1, 0], [], []>} : vector<16x32xbf16>, vector<16x32xbf16>, vector<16x16xf32> -> vector<16x16xf32>
    %cst_7 = arith.constant 0.176776692 : f32
    %17 = vector.broadcast %cst_7 : f32 to vector<16x16xf32>
    %18 = arith.mulf %16, %17 : vector<16x16xf32>
    %cst_8 = arith.constant -1.000000e+30 : f32
    %19 = vector.broadcast %cst_8 : f32 to vector<16x16xf32>
    %20 = arith.select %10, %18, %19 : vector<16x16xi1>, vector<16x16xf32>
    %cst_9 = arith.constant dense<0xFF800000> : vector<16xf32>
    %21 = vector.multi_reduction <maximumf>, %20, %cst_9 [1] : vector<16x16xf32> to vector<16xf32>
    %22 = vector.shape_cast %21 : vector<16xf32> to vector<16x1xf32>
    %23 = vector.broadcast %22 : vector<16x1xf32> to vector<16x16xf32>
    %24 = arith.subf %20, %23 : vector<16x16xf32>
    %25 = math.exp %24 : vector<16x16xf32>
    %cst_10 = arith.constant dense<0.000000e+00> : vector<16xf32>
    %26 = vector.multi_reduction <add>, %25, %cst_10 [1] : vector<16x16xf32> to vector<16xf32>
    %27 = vector.shape_cast %26 : vector<16xf32> to vector<16x1xf32>
    %28 = tpu.reciprocal %27 {approx = true} : vector<16x1xf32> -> vector<16x1xf32>
    %29 = vector.broadcast %28 : vector<16x1xf32> to vector<16x16xf32>
    %30 = arith.mulf %25, %29 : vector<16x16xf32>
    %31 = arith.truncf %30 : vector<16x16xf32> to vector<16x16xbf16>
    %32 = arith.truncf %13 : vector<16x32xf32> to vector<16x32xbf16>
    %cst_11 = arith.constant dense<0.000000e+00> : vector<16x32xf32>
    %33 = tpu.matmul %31, %32, %cst_11 {dimension_numbers = #tpu.dot_dimension_numbers<[1], [0], [0], [1], [0, 0, 1, 1], [], []>} : vector<16x16xbf16>, vector<16x32xbf16>, vector<16x32xf32> -> vector<16x32xf32>
    %34 = vector.extract_strided_slice %7 {offsets = [0, 32], sizes = [16, 32], strides = [1, 1]} : vector<16x384xf32> to vector<16x32xf32>
    %35 = vector.extract_strided_slice %7 {offsets = [0, 160], sizes = [16, 32], strides = [1, 1]} : vector<16x384xf32> to vector<16x32xf32>
    %36 = vector.extract_strided_slice %7 {offsets = [0, 288], sizes = [16, 32], strides = [1, 1]} : vector<16x384xf32> to vector<16x32xf32>
    %37 = arith.truncf %34 : vector<16x32xf32> to vector<16x32xbf16>
    %38 = arith.truncf %35 : vector<16x32xf32> to vector<16x32xbf16>
    %cst_12 = arith.constant dense<0.000000e+00> : vector<16x16xf32>
    %39 = tpu.matmul %37, %38, %cst_12 {dimension_numbers = #tpu.dot_dimension_numbers<[1], [1], [0], [0], [0, 0, 1, 0], [], []>} : vector<16x32xbf16>, vector<16x32xbf16>, vector<16x16xf32> -> vector<16x16xf32>
    %cst_13 = arith.constant 0.176776692 : f32
    %40 = vector.broadcast %cst_13 : f32 to vector<16x16xf32>
    %41 = arith.mulf %39, %40 : vector<16x16xf32>
    %cst_14 = arith.constant -1.000000e+30 : f32
    %42 = vector.broadcast %cst_14 : f32 to vector<16x16xf32>
    %43 = arith.select %10, %41, %42 : vector<16x16xi1>, vector<16x16xf32>
    %cst_15 = arith.constant dense<0xFF800000> : vector<16xf32>
    %44 = vector.multi_reduction <maximumf>, %43, %cst_15 [1] : vector<16x16xf32> to vector<16xf32>
    %45 = vector.shape_cast %44 : vector<16xf32> to vector<16x1xf32>
    %46 = vector.broadcast %45 : vector<16x1xf32> to vector<16x16xf32>
    %47 = arith.subf %43, %46 : vector<16x16xf32>
    %48 = math.exp %47 : vector<16x16xf32>
    %cst_16 = arith.constant dense<0.000000e+00> : vector<16xf32>
    %49 = vector.multi_reduction <add>, %48, %cst_16 [1] : vector<16x16xf32> to vector<16xf32>
    %50 = vector.shape_cast %49 : vector<16xf32> to vector<16x1xf32>
    %51 = tpu.reciprocal %50 {approx = true} : vector<16x1xf32> -> vector<16x1xf32>
    %52 = vector.broadcast %51 : vector<16x1xf32> to vector<16x16xf32>
    %53 = arith.mulf %48, %52 : vector<16x16xf32>
    %54 = arith.truncf %53 : vector<16x16xf32> to vector<16x16xbf16>
    %55 = arith.truncf %36 : vector<16x32xf32> to vector<16x32xbf16>
    %cst_17 = arith.constant dense<0.000000e+00> : vector<16x32xf32>
    %56 = tpu.matmul %54, %55, %cst_17 {dimension_numbers = #tpu.dot_dimension_numbers<[1], [0], [0], [1], [0, 0, 1, 1], [], []>} : vector<16x16xbf16>, vector<16x32xbf16>, vector<16x32xf32> -> vector<16x32xf32>
    %57 = vector.extract_strided_slice %7 {offsets = [0, 64], sizes = [16, 32], strides = [1, 1]} : vector<16x384xf32> to vector<16x32xf32>
    %58 = vector.extract_strided_slice %7 {offsets = [0, 192], sizes = [16, 32], strides = [1, 1]} : vector<16x384xf32> to vector<16x32xf32>
    %59 = vector.extract_strided_slice %7 {offsets = [0, 320], sizes = [16, 32], strides = [1, 1]} : vector<16x384xf32> to vector<16x32xf32>
    %60 = arith.truncf %57 : vector<16x32xf32> to vector<16x32xbf16>
    %61 = arith.truncf %58 : vector<16x32xf32> to vector<16x32xbf16>
    %cst_18 = arith.constant dense<0.000000e+00> : vector<16x16xf32>
    %62 = tpu.matmul %60, %61, %cst_18 {dimension_numbers = #tpu.dot_dimension_numbers<[1], [1], [0], [0], [0, 0, 1, 0], [], []>} : vector<16x32xbf16>, vector<16x32xbf16>, vector<16x16xf32> -> vector<16x16xf32>
    %cst_19 = arith.constant 0.176776692 : f32
    %63 = vector.broadcast %cst_19 : f32 to vector<16x16xf32>
    %64 = arith.mulf %62, %63 : vector<16x16xf32>
    %cst_20 = arith.constant -1.000000e+30 : f32
    %65 = vector.broadcast %cst_20 : f32 to vector<16x16xf32>
    %66 = arith.select %10, %64, %65 : vector<16x16xi1>, vector<16x16xf32>
    %cst_21 = arith.constant dense<0xFF800000> : vector<16xf32>
    %67 = vector.multi_reduction <maximumf>, %66, %cst_21 [1] : vector<16x16xf32> to vector<16xf32>
    %68 = vector.shape_cast %67 : vector<16xf32> to vector<16x1xf32>
    %69 = vector.broadcast %68 : vector<16x1xf32> to vector<16x16xf32>
    %70 = arith.subf %66, %69 : vector<16x16xf32>
    %71 = math.exp %70 : vector<16x16xf32>
    %cst_22 = arith.constant dense<0.000000e+00> : vector<16xf32>
    %72 = vector.multi_reduction <add>, %71, %cst_22 [1] : vector<16x16xf32> to vector<16xf32>
    %73 = vector.shape_cast %72 : vector<16xf32> to vector<16x1xf32>
    %74 = tpu.reciprocal %73 {approx = true} : vector<16x1xf32> -> vector<16x1xf32>
    %75 = vector.broadcast %74 : vector<16x1xf32> to vector<16x16xf32>
    %76 = arith.mulf %71, %75 : vector<16x16xf32>
    %77 = arith.truncf %76 : vector<16x16xf32> to vector<16x16xbf16>
    %78 = arith.truncf %59 : vector<16x32xf32> to vector<16x32xbf16>
    %cst_23 = arith.constant dense<0.000000e+00> : vector<16x32xf32>
    %79 = tpu.matmul %77, %78, %cst_23 {dimension_numbers = #tpu.dot_dimension_numbers<[1], [0], [0], [1], [0, 0, 1, 1], [], []>} : vector<16x16xbf16>, vector<16x32xbf16>, vector<16x32xf32> -> vector<16x32xf32>
    %80 = vector.extract_strided_slice %7 {offsets = [0, 96], sizes = [16, 32], strides = [1, 1]} : vector<16x384xf32> to vector<16x32xf32>
    %81 = vector.extract_strided_slice %7 {offsets = [0, 224], sizes = [16, 32], strides = [1, 1]} : vector<16x384xf32> to vector<16x32xf32>
    %82 = vector.extract_strided_slice %7 {offsets = [0, 352], sizes = [16, 32], strides = [1, 1]} : vector<16x384xf32> to vector<16x32xf32>
    %83 = arith.truncf %80 : vector<16x32xf32> to vector<16x32xbf16>
    %84 = arith.truncf %81 : vector<16x32xf32> to vector<16x32xbf16>
    %cst_24 = arith.constant dense<0.000000e+00> : vector<16x16xf32>
    %85 = tpu.matmul %83, %84, %cst_24 {dimension_numbers = #tpu.dot_dimension_numbers<[1], [1], [0], [0], [0, 0, 1, 0], [], []>} : vector<16x32xbf16>, vector<16x32xbf16>, vector<16x16xf32> -> vector<16x16xf32>
    %cst_25 = arith.constant 0.176776692 : f32
    %86 = vector.broadcast %cst_25 : f32 to vector<16x16xf32>
    %87 = arith.mulf %85, %86 : vector<16x16xf32>
    %cst_26 = arith.constant -1.000000e+30 : f32
    %88 = vector.broadcast %cst_26 : f32 to vector<16x16xf32>
    %89 = arith.select %10, %87, %88 : vector<16x16xi1>, vector<16x16xf32>
    %cst_27 = arith.constant dense<0xFF800000> : vector<16xf32>
    %90 = vector.multi_reduction <maximumf>, %89, %cst_27 [1] : vector<16x16xf32> to vector<16xf32>
    %91 = vector.shape_cast %90 : vector<16xf32> to vector<16x1xf32>
    %92 = vector.broadcast %91 : vector<16x1xf32> to vector<16x16xf32>
    %93 = arith.subf %89, %92 : vector<16x16xf32>
    %94 = math.exp %93 : vector<16x16xf32>
    %cst_28 = arith.constant dense<0.000000e+00> : vector<16xf32>
    %95 = vector.multi_reduction <add>, %94, %cst_28 [1] : vector<16x16xf32> to vector<16xf32>
    %96 = vector.shape_cast %95 : vector<16xf32> to vector<16x1xf32>
    %97 = tpu.reciprocal %96 {approx = true} : vector<16x1xf32> -> vector<16x1xf32>
    %98 = vector.broadcast %97 : vector<16x1xf32> to vector<16x16xf32>
    %99 = arith.mulf %94, %98 : vector<16x16xf32>
    %100 = arith.truncf %99 : vector<16x16xf32> to vector<16x16xbf16>
    %101 = arith.truncf %82 : vector<16x32xf32> to vector<16x32xbf16>
    %cst_29 = arith.constant dense<0.000000e+00> : vector<16x32xf32>
    %102 = tpu.matmul %100, %101, %cst_29 {dimension_numbers = #tpu.dot_dimension_numbers<[1], [0], [0], [1], [0, 0, 1, 1], [], []>} : vector<16x16xbf16>, vector<16x32xbf16>, vector<16x32xf32> -> vector<16x32xf32>
    %103 = tpu.concatenate %33, %56, %79, %102 in 1 : vector<16x32xf32>, vector<16x32xf32>, vector<16x32xf32>, vector<16x32xf32> -> vector<16x128xf32>
    %104 = arith.truncf %103 : vector<16x128xf32> to vector<16x128xbf16>
    %c0_30 = arith.constant 0 : index
    %c0_31 = arith.constant 0 : index
    %105 = vector.load %arg4[%c0_30, %c0_31] : memref<128x128xbf16, #tpu.memory_space<vmem>>, vector<128x128xbf16>
    %cst_32 = arith.constant dense<0.000000e+00> : vector<16x128xf32>
    %106 = tpu.matmul %104, %105, %cst_32 {dimension_numbers = #tpu.dot_dimension_numbers<[1], [0], [0], [1], [0, 0, 1, 1], [], []>} : vector<16x128xbf16>, vector<128x128xbf16>, vector<16x128xf32> -> vector<16x128xf32>
    %c0_33 = arith.constant 0 : index
    %c0_34 = arith.constant 0 : index
    %107 = vector.load %arg5[%c0_33, %c0_34] : memref<1x128xf32, #tpu.memory_space<vmem>>, vector<1x128xf32>
    %108 = vector.broadcast %107 : vector<1x128xf32> to vector<16x128xf32>
    %109 = arith.addf %106, %108 : vector<16x128xf32>
    %110 = arith.addf %1, %109 : vector<16x128xf32>
    %c0_35 = arith.constant 0 : index
    %c0_36 = arith.constant 0 : index
    %111 = vector.load %arg6[%c0_35, %c0_36] : memref<1x128xf32, #tpu.memory_space<vmem>>, vector<1x128xf32>
    %c0_37 = arith.constant 0 : index
    %c0_38 = arith.constant 0 : index
    %112 = vector.load %arg7[%c0_37, %c0_38] : memref<1x128xf32, #tpu.memory_space<vmem>>, vector<1x128xf32>
    %cst_39 = arith.constant dense<0.000000e+00> : vector<16xf32>
    %113 = vector.multi_reduction <add>, %110, %cst_39 [1] : vector<16x128xf32> to vector<16xf32>
    %114 = vector.shape_cast %113 : vector<16xf32> to vector<16x1xf32>
    %cst_40 = arith.constant 1.280000e+02 : f32
    %115 = vector.broadcast %cst_40 : f32 to vector<16x1xf32>
    %116 = arith.divf %114, %115 : vector<16x1xf32>
    %117 = vector.broadcast %116 : vector<16x1xf32> to vector<16x128xf32>
    %118 = arith.subf %110, %117 : vector<16x128xf32>
    %119 = arith.mulf %118, %118 : vector<16x128xf32>
    %cst_41 = arith.constant dense<0.000000e+00> : vector<16xf32>
    %120 = vector.multi_reduction <add>, %119, %cst_41 [1] : vector<16x128xf32> to vector<16xf32>
    %121 = vector.shape_cast %120 : vector<16xf32> to vector<16x1xf32>
    %cst_42 = arith.constant 1.280000e+02 : f32
    %122 = vector.broadcast %cst_42 : f32 to vector<16x1xf32>
    %123 = arith.divf %121, %122 : vector<16x1xf32>
    %cst_43 = arith.constant 9.99999974E-6 : f32
    %124 = vector.broadcast %cst_43 : f32 to vector<16x1xf32>
    %125 = arith.addf %123, %124 : vector<16x1xf32>
    %126 = math.rsqrt %125 : vector<16x1xf32>
    %127 = vector.broadcast %126 : vector<16x1xf32> to vector<16x128xf32>
    %128 = arith.mulf %118, %127 : vector<16x128xf32>
    %129 = vector.broadcast %111 : vector<1x128xf32> to vector<16x128xf32>
    %130 = arith.mulf %128, %129 : vector<16x128xf32>
    %131 = vector.broadcast %112 : vector<1x128xf32> to vector<16x128xf32>
    %132 = arith.addf %130, %131 : vector<16x128xf32>
    %133 = arith.truncf %132 : vector<16x128xf32> to vector<16x128xbf16>
    %c0_44 = arith.constant 0 : index
    %c0_45 = arith.constant 0 : index
    %134 = vector.load %arg8[%c0_44, %c0_45] : memref<128x512xbf16, #tpu.memory_space<vmem>>, vector<128x512xbf16>
    %cst_46 = arith.constant dense<0.000000e+00> : vector<16x512xf32>
    %135 = tpu.matmul %133, %134, %cst_46 {dimension_numbers = #tpu.dot_dimension_numbers<[1], [0], [0], [1], [0, 0, 1, 1], [], []>} : vector<16x128xbf16>, vector<128x512xbf16>, vector<16x512xf32> -> vector<16x512xf32>
    %c0_47 = arith.constant 0 : index
    %c0_48 = arith.constant 0 : index
    %136 = vector.load %arg9[%c0_47, %c0_48] : memref<1x512xf32, #tpu.memory_space<vmem>>, vector<1x512xf32>
    %137 = vector.broadcast %136 : vector<1x512xf32> to vector<16x512xf32>
    %138 = arith.addf %135, %137 : vector<16x512xf32>
    %cst_49 = arith.constant 5.000000e-01 : f32
    %139 = vector.broadcast %cst_49 : f32 to vector<16x512xf32>
    %140 = arith.mulf %139, %138 : vector<16x512xf32>
    %cst_50 = arith.constant 4.471500e-02 : f32
    %141 = vector.broadcast %cst_50 : f32 to vector<16x512xf32>
    %142 = arith.mulf %141, %138 : vector<16x512xf32>
    %143 = arith.mulf %142, %138 : vector<16x512xf32>
    %144 = arith.mulf %143, %138 : vector<16x512xf32>
    %145 = arith.addf %138, %144 : vector<16x512xf32>
    %cst_51 = arith.constant 0.797884583 : f32
    %146 = vector.broadcast %cst_51 : f32 to vector<16x512xf32>
    %147 = arith.mulf %146, %145 : vector<16x512xf32>
    %148 = math.tanh %147 : vector<16x512xf32>
    %cst_52 = arith.constant 1.000000e+00 : f32
    %149 = vector.broadcast %cst_52 : f32 to vector<16x512xf32>
    %150 = arith.addf %149, %148 : vector<16x512xf32>
    %151 = arith.mulf %140, %150 : vector<16x512xf32>
    %152 = arith.truncf %151 : vector<16x512xf32> to vector<16x512xbf16>
    %c0_53 = arith.constant 0 : index
    %c0_54 = arith.constant 0 : index
    %153 = vector.load %arg10[%c0_53, %c0_54] : memref<512x128xbf16, #tpu.memory_space<vmem>>, vector<512x128xbf16>
    %cst_55 = arith.constant dense<0.000000e+00> : vector<16x128xf32>
    %154 = tpu.matmul %152, %153, %cst_55 {dimension_numbers = #tpu.dot_dimension_numbers<[1], [0], [0], [1], [0, 0, 1, 1], [], []>} : vector<16x512xbf16>, vector<512x128xbf16>, vector<16x128xf32> -> vector<16x128xf32>
    %c0_56 = arith.constant 0 : index
    %c0_57 = arith.constant 0 : index
    %155 = vector.load %arg11[%c0_56, %c0_57] : memref<1x128xf32, #tpu.memory_space<vmem>>, vector<1x128xf32>
    %156 = vector.broadcast %155 : vector<1x128xf32> to vector<16x128xf32>
    %157 = arith.addf %154, %156 : vector<16x128xf32>
    %158 = arith.addf %132, %157 : vector<16x128xf32>
    %c0_58 = arith.constant 0 : index
    %c0_59 = arith.constant 0 : index
    %159 = vector.load %arg12[%c0_58, %c0_59] : memref<1x128xf32, #tpu.memory_space<vmem>>, vector<1x128xf32>
    %c0_60 = arith.constant 0 : index
    %c0_61 = arith.constant 0 : index
    %160 = vector.load %arg13[%c0_60, %c0_61] : memref<1x128xf32, #tpu.memory_space<vmem>>, vector<1x128xf32>
    %cst_62 = arith.constant dense<0.000000e+00> : vector<16xf32>
    %161 = vector.multi_reduction <add>, %158, %cst_62 [1] : vector<16x128xf32> to vector<16xf32>
    %162 = vector.shape_cast %161 : vector<16xf32> to vector<16x1xf32>
    %cst_63 = arith.constant 1.280000e+02 : f32
    %163 = vector.broadcast %cst_63 : f32 to vector<16x1xf32>
    %164 = arith.divf %162, %163 : vector<16x1xf32>
    %165 = vector.broadcast %164 : vector<16x1xf32> to vector<16x128xf32>
    %166 = arith.subf %158, %165 : vector<16x128xf32>
    %167 = arith.mulf %166, %166 : vector<16x128xf32>
    %cst_64 = arith.constant dense<0.000000e+00> : vector<16xf32>
    %168 = vector.multi_reduction <add>, %167, %cst_64 [1] : vector<16x128xf32> to vector<16xf32>
    %169 = vector.shape_cast %168 : vector<16xf32> to vector<16x1xf32>
    %cst_65 = arith.constant 1.280000e+02 : f32
    %170 = vector.broadcast %cst_65 : f32 to vector<16x1xf32>
    %171 = arith.divf %169, %170 : vector<16x1xf32>
    %cst_66 = arith.constant 9.99999974E-6 : f32
    %172 = vector.broadcast %cst_66 : f32 to vector<16x1xf32>
    %173 = arith.addf %171, %172 : vector<16x1xf32>
    %174 = math.rsqrt %173 : vector<16x1xf32>
    %175 = vector.broadcast %174 : vector<16x1xf32> to vector<16x128xf32>
    %176 = arith.mulf %166, %175 : vector<16x128xf32>
    %177 = vector.broadcast %159 : vector<1x128xf32> to vector<16x128xf32>
    %178 = arith.mulf %176, %177 : vector<16x128xf32>
    %179 = vector.broadcast %160 : vector<1x128xf32> to vector<16x128xf32>
    %180 = arith.addf %178, %179 : vector<16x128xf32>
    %c0_67 = arith.constant 0 : index
    %c0_68 = arith.constant 0 : index
    %c0_69 = arith.constant 0 : index
    %181 = vector.load %arg14[%c0_67, %c0_68, %c0_69] : memref<1x16x128xf32, #tpu.memory_space<vmem>>, vector<1x16x128xf32>
    %182 = vector.shape_cast %181 : vector<1x16x128xf32> to vector<16x128xf32>
    %183 = vector.shape_cast %180 : vector<16x128xf32> to vector<1x16x128xf32>
    tpu.vector_store %arg14[%c0_67, %c0_68, %c0_69], %183 {strides = array<i32>} : memref<1x16x128xf32, #tpu.memory_space<vmem>>, vector<1x16x128xf32>,
    return
  }
  func.func @transform_0(%arg0: i32) -> (i32, i32, i32) {
    %c0_i32 = arith.constant 0 : i32
    %c0_i32_0 = arith.constant 0 : i32
    %c0_i32_1 = arith.constant 0 : i32
    return %arg0, %c0_i32, %c0_i32_0 : i32, i32, i32
  }
  func.func @transform_1(%arg0: i32) -> (i32, i32) {
    %c0_i32 = arith.constant 0 : i32
    %c0_i32_0 = arith.constant 0 : i32
    %c0_i32_1 = arith.constant 0 : i32
    return %c0_i32, %c0_i32_0 : i32, i32
  }
  func.func @transform_2(%arg0: i32) -> (i32, i32) {
    %c0_i32 = arith.constant 0 : i32
    %c0_i32_0 = arith.constant 0 : i32
    %c0_i32_1 = arith.constant 0 : i32
    return %c0_i32, %c0_i32_0 : i32, i32
  }
  func.func @transform_3(%arg0: i32) -> (i32, i32) {
    %c0_i32 = arith.constant 0 : i32
    %c0_i32_0 = arith.constant 0 : i32
    %c0_i32_1 = arith.constant 0 : i32
    return %c0_i32, %c0_i32_0 : i32, i32
  }
  func.func @transform_4(%arg0: i32) -> (i32, i32) {
    %c0_i32 = arith.constant 0 : i32
    %c0_i32_0 = arith.constant 0 : i32
    %c0_i32_1 = arith.constant 0 : i32
    return %c0_i32, %c0_i32_0 : i32, i32
  }
  func.func @transform_5(%arg0: i32) -> (i32, i32) {
    %c0_i32 = arith.constant 0 : i32
    %c0_i32_0 = arith.constant 0 : i32
    %c0_i32_1 = arith.constant 0 : i32
    return %c0_i32, %c0_i32_0 : i32, i32
  }
  func.func @transform_6(%arg0: i32) -> (i32, i32) {
    %c0_i32 = arith.constant 0 : i32
    %c0_i32_0 = arith.constant 0 : i32
    %c0_i32_1 = arith.constant 0 : i32
    return %c0_i32, %c0_i32_0 : i32, i32
  }
  func.func @transform_7(%arg0: i32) -> (i32, i32) {
    %c0_i32 = arith.constant 0 : i32
    %c0_i32_0 = arith.constant 0 : i32
    %c0_i32_1 = arith.constant 0 : i32
    return %c0_i32, %c0_i32_0 : i32, i32
  }
  func.func @transform_8(%arg0: i32) -> (i32, i32) {
    %c0_i32 = arith.constant 0 : i32
    %c0_i32_0 = arith.constant 0 : i32
    %c0_i32_1 = arith.constant 0 : i32
    return %c0_i32, %c0_i32_0 : i32, i32
  }
  func.func @transform_9(%arg0: i32) -> (i32, i32) {
    %c0_i32 = arith.constant 0 : i32
    %c0_i32_0 = arith.constant 0 : i32
    %c0_i32_1 = arith.constant 0 : i32
    return %c0_i32, %c0_i32_0 : i32, i32
  }
  func.func @transform_10(%arg0: i32) -> (i32, i32) {
    %c0_i32 = arith.constant 0 : i32
    %c0_i32_0 = arith.constant 0 : i32
    %c0_i32_1 = arith.constant 0 : i32
    return %c0_i32, %c0_i32_0 : i32, i32
  }
  func.func @transform_11(%arg0: i32) -> (i32, i32) {
    %c0_i32 = arith.constant 0 : i32
    %c0_i32_0 = arith.constant 0 : i32
    %c0_i32_1 = arith.constant 0 : i32
    return %c0_i32, %c0_i32_0 : i32, i32
  }
  func.func @transform_12(%arg0: i32) -> (i32, i32) {
    %c0_i32 = arith.constant 0 : i32
    %c0_i32_0 = arith.constant 0 : i32
    %c0_i32_1 = arith.constant 0 : i32
    return %c0_i32, %c0_i32_0 : i32, i32
  }
  func.func @transform_13(%arg0: i32) -> (i32, i32, i32) {
    %c0_i32 = arith.constant 0 : i32
    %c0_i32_0 = arith.constant 0 : i32
    %c0_i32_1 = arith.constant 0 : i32
    return %arg0, %c0_i32, %c0_i32_0 : i32, i32, i32
  }
}

module attributes {stable_mosaic.version = 11 : i64} {
  func.func @_head_kernel(%arg0: i32, %arg1: memref<8x128xf32, #tpu.memory_space<vmem>>, %arg2: memref<1x128xf32, #tpu.memory_space<vmem>>, %arg3: memref<1x128xf32, #tpu.memory_space<vmem>>, %arg4: memref<128x128xbf16, #tpu.memory_space<vmem>>, %arg5: memref<1x128xf32, #tpu.memory_space<vmem>>, %arg6: memref<8x128xf32, #tpu.memory_space<vmem>>) attributes {dimension_semantics = [#tpu.dimension_semantics<arbitrary>], iteration_bounds = array<i64: 1>, scalar_prefetch = 0 : i64, scratch_operands = 0 : i64, tpu.core_type = #tpu.core_type<tc>, window_params = [{pipeline_mode = #tpu.pipeline_mode<synchronous>, transform_indices = @transform_0, window_bounds = array<i64: 8, 128>}, {pipeline_mode = #tpu.pipeline_mode<synchronous>, transform_indices = @transform_1, window_bounds = array<i64: 1, 128>}, {pipeline_mode = #tpu.pipeline_mode<synchronous>, transform_indices = @transform_2, window_bounds = array<i64: 1, 128>}, {pipeline_mode = #tpu.pipeline_mode<synchronous>, transform_indices = @transform_3, window_bounds = array<i64: 128, 128>}, {pipeline_mode = #tpu.pipeline_mode<synchronous>, transform_indices = @transform_4, window_bounds = array<i64: 1, 128>}, {pipeline_mode = #tpu.pipeline_mode<synchronous>, transform_indices = @transform_5, window_bounds = array<i64: 8, 128>}]} {
    %c0 = arith.constant 0 : index
    %c0_0 = arith.constant 0 : index
    %0 = vector.load %arg1[%c0, %c0_0] : memref<8x128xf32, #tpu.memory_space<vmem>>, vector<8x128xf32>
    %c0_1 = arith.constant 0 : index
    %c0_2 = arith.constant 0 : index
    %1 = vector.load %arg2[%c0_1, %c0_2] : memref<1x128xf32, #tpu.memory_space<vmem>>, vector<1x128xf32>
    %c0_3 = arith.constant 0 : index
    %c0_4 = arith.constant 0 : index
    %2 = vector.load %arg3[%c0_3, %c0_4] : memref<1x128xf32, #tpu.memory_space<vmem>>, vector<1x128xf32>
    %cst = arith.constant dense<0.000000e+00> : vector<8xf32>
    %3 = vector.multi_reduction <add>, %0, %cst [1] : vector<8x128xf32> to vector<8xf32>
    %4 = vector.shape_cast %3 : vector<8xf32> to vector<8x1xf32>
    %cst_5 = arith.constant 1.280000e+02 : f32
    %5 = vector.broadcast %cst_5 : f32 to vector<8x1xf32>
    %6 = arith.divf %4, %5 : vector<8x1xf32>
    %7 = vector.broadcast %6 : vector<8x1xf32> to vector<8x128xf32>
    %8 = arith.subf %0, %7 : vector<8x128xf32>
    %9 = arith.mulf %8, %8 : vector<8x128xf32>
    %cst_6 = arith.constant dense<0.000000e+00> : vector<8xf32>
    %10 = vector.multi_reduction <add>, %9, %cst_6 [1] : vector<8x128xf32> to vector<8xf32>
    %11 = vector.shape_cast %10 : vector<8xf32> to vector<8x1xf32>
    %cst_7 = arith.constant 1.280000e+02 : f32
    %12 = vector.broadcast %cst_7 : f32 to vector<8x1xf32>
    %13 = arith.divf %11, %12 : vector<8x1xf32>
    %cst_8 = arith.constant 9.99999974E-6 : f32
    %14 = vector.broadcast %cst_8 : f32 to vector<8x1xf32>
    %15 = arith.addf %13, %14 : vector<8x1xf32>
    %16 = math.rsqrt %15 : vector<8x1xf32>
    %17 = vector.broadcast %16 : vector<8x1xf32> to vector<8x128xf32>
    %18 = arith.mulf %8, %17 : vector<8x128xf32>
    %19 = vector.broadcast %1 : vector<1x128xf32> to vector<8x128xf32>
    %20 = arith.mulf %18, %19 : vector<8x128xf32>
    %21 = vector.broadcast %2 : vector<1x128xf32> to vector<8x128xf32>
    %22 = arith.addf %20, %21 : vector<8x128xf32>
    %23 = arith.truncf %22 : vector<8x128xf32> to vector<8x128xbf16>
    %c0_9 = arith.constant 0 : index
    %c0_10 = arith.constant 0 : index
    %24 = vector.load %arg4[%c0_9, %c0_10] : memref<128x128xbf16, #tpu.memory_space<vmem>>, vector<128x128xbf16>
    %cst_11 = arith.constant dense<0.000000e+00> : vector<8x128xf32>
    %25 = tpu.matmul %23, %24, %cst_11 {dimension_numbers = #tpu.dot_dimension_numbers<[1], [0], [0], [1], [0, 0, 1, 1], [], []>} : vector<8x128xbf16>, vector<128x128xbf16>, vector<8x128xf32> -> vector<8x128xf32>
    %c0_12 = arith.constant 0 : index
    %c0_13 = arith.constant 0 : index
    %26 = vector.load %arg5[%c0_12, %c0_13] : memref<1x128xf32, #tpu.memory_space<vmem>>, vector<1x128xf32>
    %27 = vector.broadcast %26 : vector<1x128xf32> to vector<8x128xf32>
    %28 = arith.addf %25, %27 : vector<8x128xf32>
    %c0_14 = arith.constant 0 : index
    %c0_15 = arith.constant 0 : index
    %29 = vector.load %arg6[%c0_14, %c0_15] : memref<8x128xf32, #tpu.memory_space<vmem>>, vector<8x128xf32>
    tpu.vector_store %arg6[%c0_14, %c0_15], %28 {strides = array<i32>} : memref<8x128xf32, #tpu.memory_space<vmem>>, vector<8x128xf32>,
    return
  }
  func.func @transform_0(%arg0: i32) -> (i32, i32) {
    %c0_i32 = arith.constant 0 : i32
    %c0_i32_0 = arith.constant 0 : i32
    %c0_i32_1 = arith.constant 0 : i32
    return %c0_i32, %c0_i32_0 : i32, i32
  }
  func.func @transform_1(%arg0: i32) -> (i32, i32) {
    %c0_i32 = arith.constant 0 : i32
    %c0_i32_0 = arith.constant 0 : i32
    %c0_i32_1 = arith.constant 0 : i32
    return %c0_i32, %c0_i32_0 : i32, i32
  }
  func.func @transform_2(%arg0: i32) -> (i32, i32) {
    %c0_i32 = arith.constant 0 : i32
    %c0_i32_0 = arith.constant 0 : i32
    %c0_i32_1 = arith.constant 0 : i32
    return %c0_i32, %c0_i32_0 : i32, i32
  }
  func.func @transform_3(%arg0: i32) -> (i32, i32) {
    %c0_i32 = arith.constant 0 : i32
    %c0_i32_0 = arith.constant 0 : i32
    %c0_i32_1 = arith.constant 0 : i32
    return %c0_i32, %c0_i32_0 : i32, i32
  }
  func.func @transform_4(%arg0: i32) -> (i32, i32) {
    %c0_i32 = arith.constant 0 : i32
    %c0_i32_0 = arith.constant 0 : i32
    %c0_i32_1 = arith.constant 0 : i32
    return %c0_i32, %c0_i32_0 : i32, i32
  }
  func.func @transform_5(%arg0: i32) -> (i32, i32) {
    %c0_i32 = arith.constant 0 : i32
    %c0_i32_0 = arith.constant 0 : i32
    %c0_i32_1 = arith.constant 0 : i32
    return %c0_i32, %c0_i32_0 : i32, i32
  }
}

</mosaic_0001>

<llo_original>
// kernel: vit3d_forward.4
$region0: #{vit3d_forward.4}
  #allocation0 [shape = 'u32[]', space=smem, size = 0x4, offset = 0x4, fixed_abs, tag = 'smem constant byte address 0x4 - core index']
  #allocation1 [shape = 'u32[144,128]{1,0:T(1,128)}', space=vmem, size = 0x12000, scoped, tag = 'internal scratch']
  %s0 = inlined_call_operand.vmem [shape: f32[2,16,1024], index: 0, kind: input, shape index: {}]
  %s1 = inlined_call_operand.vmem [shape: bf16[1024,128], index: 1, kind: input, shape index: {}]
  %s2 = inlined_call_operand.vmem [shape: f32[1,128], index: 2, kind: input, shape index: {}]
  %s3 = inlined_call_operand.vmem [shape: bf16[128,128], index: 3, kind: input, shape index: {}]
  %s4 = inlined_call_operand.vmem [shape: f32[1,128], index: 4, kind: input, shape index: {}]
  %s5 = inlined_call_operand.vmem [shape: f32[16,128], index: 5, kind: input, shape index: {}]
  %s6 = inlined_call_operand.vmem [shape: f32[2,16,128], index: 6, kind: output, shape index: {}]
  %s7 = sld [smem:[#allocation0]]
  $region57: #{vit3d_forward.4} parent=0
    _
  %s9 = ssub.s32 1, %s7
  %s10 = scalar_select 0, %s9, %s7
  loop: start=0, step=1, limit=4
  $region2: #{vit3d_forward.4} parent=0 // loop_pre_header
    _
  $region3: #{vit3d_forward.4} parent=0 // loop_header
    %s12 = sphi 0, %s16
    %p13 = scmp.ge.s32.totalorder %s12, 4
    %s22 = sphi 0, %s24
    %s25 = sphi 0, %s22
    %s26 = sphi 0, %s25
    %s42 = sphi 0, %s26
    %s46 = sphi 0, %s46
    %s48 = sphi 0, %s46
    %s49 = sphi 0, %s48
    %s63 = sphi 0, %s49
    %s67 = sphi 0, %s67
    %s69 = sphi 0, %s67
    %s70 = sphi 0, %s69
    %s84 = sphi 0, %s70
    %s88 = sphi 0, %s88
    %s90 = sphi 0, %s88
    %s91 = sphi 0, %s90
    %s105 = sphi 0, %s91
    %s109 = sphi 0, %s109
    %s111 = sphi 0, %s109
    %s112 = sphi 0, %s111
    %s126 = sphi 0, %s112
    %s130 = sphi 0, %s130
    %s132 = sphi 0, %s130
    %s133 = sphi 0, %s132
    %s147 = sphi 0, %s133
    %s153 = sphi 0, %s155
    %s156 = sphi 0, %s153
    %s157 = sphi 0, %s156
    %s173 = sphi 0, %s157
  $region4: #{vit3d_forward.4} parent=0 // loop_header_branch
    %15 = sbr.rel (%p13) target = $region8
  $region5: #{vit3d_forward.4} parent=0 // loop_body
    %s17 = ssub.s32 %s12, 1
    %s18 = ssub.s32 %s12, 2
    %s19 = sadd.s32 %s12, 1
    %s20 = ssub.s32 %s12, %s19
    %p21 = scmp.eq.s32.totalorder %s20, 0
    %s23 = sadd.s32 %s22, 1
    %s24 = scalar_select %p21, %s22, %s23
    %p27 = pneg %p21
    %p28 = scmp.eq.s32.totalorder %s12, 1
    %p29 = por %p27, %p28
    %p30 = scmp.ne.s32.totalorder %s22, %s25
    %p31 = scmp.eq.s32.totalorder %s12, 0
    %p32 = por %p30, %p31
    %p33 = scmp.ne.s32.totalorder %s22, %s25
    %p34 = scmp.eq.s32.totalorder %s17, 1
    %p35 = por %p33, %p34
    %p36 = scmp.ne.s32.totalorder %s25, %s26
    %p37 = scmp.eq.s32.totalorder %s17, 0
    %p38 = por %p36, %p37
    %p39 = scmp.ne.s32.totalorder %s25, %s26
    %p40 = scmp.eq.s32.totalorder %s18, 1
    %p41 = por %p39, %p40
    %p43 = scmp.ne.s32.totalorder %s26, %s42
    %p44 = scmp.eq.s32.totalorder %s18, 0
    %p45 = por %p43, %p44
    %s47 = sadd.s32 %s46, 1
    %p50 = scmp.eq.s32.totalorder %s12, 1
    %p51 = scmp.ne.s32.totalorder %s46, %s48
    %p52 = scmp.eq.s32.totalorder %s12, 0
    %p53 = por %p51, %p52
    %p54 = scmp.ne.s32.totalorder %s46, %s48
    %p55 = scmp.eq.s32.totalorder %s17, 1
    %p56 = por %p54, %p55
    %p57 = scmp.ne.s32.totalorder %s48, %s49
    %p58 = scmp.eq.s32.totalorder %s17, 0
    %p59 = por %p57, %p58
    %p60 = scmp.ne.s32.totalorder %s48, %s49
    %p61 = scmp.eq.s32.totalorder %s18, 1
    %p62 = por %p60, %p61
    %p64 = scmp.ne.s32.totalorder %s49, %s63
    %p65 = scmp.eq.s32.totalorder %s18, 0
    %p66 = por %p64, %p65
    %s68 = sadd.s32 %s67, 1
    %p71 = scmp.eq.s32.totalorder %s12, 1
    %p72 = scmp.ne.s32.totalorder %s67, %s69
    %p73 = scmp.eq.s32.totalorder %s12, 0
    %p74 = por %p72, %p73
    %p75 = scmp.ne.s32.totalorder %s67, %s69
    %p76 = scmp.eq.s32.totalorder %s17, 1
    %p77 = por %p75, %p76
    %p78 = scmp.ne.s32.totalorder %s69, %s70
    %p79 = scmp.eq.s32.totalorder %s17, 0
    %p80 = por %p78, %p79
    %p81 = scmp.ne.s32.totalorder %s69, %s70
    %p82 = scmp.eq.s32.totalorder %s18, 1
    %p83 = por %p81, %p82
    %p85 = scmp.ne.s32.totalorder %s70, %s84
    %p86 = scmp.eq.s32.totalorder %s18, 0
    %p87 = por %p85, %p86
    %s89 = sadd.s32 %s88, 1
    %p92 = scmp.eq.s32.totalorder %s12, 1
    %p93 = scmp.ne.s32.totalorder %s88, %s90
    %p94 = scmp.eq.s32.totalorder %s12, 0
    %p95 = por %p93, %p94
    %p96 = scmp.ne.s32.totalorder %s88, %s90
    %p97 = scmp.eq.s32.totalorder %s17, 1
    %p98 = por %p96, %p97
    %p99 = scmp.ne.s32.totalorder %s90, %s91
    %p100 = scmp.eq.s32.totalorder %s17, 0
    %p101 = por %p99, %p100
    %p102 = scmp.ne.s32.totalorder %s90, %s91
    %p103 = scmp.eq.s32.totalorder %s18, 1
    %p104 = por %p102, %p103
    %p106 = scmp.ne.s32.totalorder %s91, %s105
    %p107 = scmp.eq.s32.totalorder %s18, 0
    %p108 = por %p106, %p107
    %s110 = sadd.s32 %s109, 1
    %p113 = scmp.eq.s32.totalorder %s12, 1
    %p114 = scmp.ne.s32.totalorder %s109, %s111
    %p115 = scmp.eq.s32.totalorder %s12, 0
    %p116 = por %p114, %p115
    %p117 = scmp.ne.s32.totalorder %s109, %s111
    %p118 = scmp.eq.s32.totalorder %s17, 1
    %p119 = por %p117, %p118
    %p120 = scmp.ne.s32.totalorder %s111, %s112
    %p121 = scmp.eq.s32.totalorder %s17, 0
    %p122 = por %p120, %p121
    %p123 = scmp.ne.s32.totalorder %s111, %s112
    %p124 = scmp.eq.s32.totalorder %s18, 1
    %p125 = por %p123, %p124
    %p127 = scmp.ne.s32.totalorder %s112, %s126
    %p128 = scmp.eq.s32.totalorder %s18, 0
    %p129 = por %p127, %p128
    %s131 = sadd.s32 %s130, 1
    %p134 = scmp.eq.s32.totalorder %s12, 1
    %p135 = scmp.ne.s32.totalorder %s130, %s132
    %p136 = scmp.eq.s32.totalorder %s12, 0
    %p137 = por %p135, %p136
    %p138 = scmp.ne.s32.totalorder %s130, %s132
    %p139 = scmp.eq.s32.totalorder %s17, 1
    %p140 = por %p138, %p139
    %p141 = scmp.ne.s32.totalorder %s132, %s133
    %p142 = scmp.eq.s32.totalorder %s17, 0
    %p143 = por %p141, %p142
    %p144 = scmp.ne.s32.totalorder %s132, %s133
    %p145 = scmp.eq.s32.totalorder %s18, 1
    %p146 = por %p144, %p145
    %p148 = scmp.ne.s32.totalorder %s133, %s147
    %p149 = scmp.eq.s32.totalorder %s18, 0
    %p150 = por %p148, %p149
    %s151 = ssub.s32 %s12, %s19
    %p152 = scmp.eq.s32.totalorder %s151, 0
    %s154 = sadd.s32 %s153, 1
    %s155 = scalar_select %p152, %s153, %s154
    %p158 = pneg %p152
    %p159 = scmp.eq.s32.totalorder %s12, 1
    %p160 = por %p158, %p159
    %p161 = scmp.ne.s32.totalorder %s153, %s156
    %p162 = scmp.eq.s32.totalorder %s12, 0
    %p163 = por %p161, %p162
    %p164 = scmp.ne.s32.totalorder %s153, %s156
    %p165 = scmp.eq.s32.totalorder %s17, 1
    %p166 = por %p164, %p165
    %p167 = scmp.ne.s32.totalorder %s156, %s157
    %p168 = scmp.eq.s32.totalorder %s17, 0
    %p169 = por %p167, %p168
    %p170 = scmp.ne.s32.totalorder %s156, %s157
    %p171 = scmp.eq.s32.totalorder %s18, 1
    %p172 = por %p170, %p171
    %p174 = scmp.ne.s32.totalorder %s157, %s173
    %p175 = scmp.eq.s32.totalorder %s18, 0
    %p176 = por %p174, %p175
    %p177 = scmp.le.s32.totalorder 1, %s12
    %p178 = scmp.lt.s32.totalorder %s12, 3
    %p179 = pnand %p177, %p178
    %p180 = pneg %p179
    // Predicated region
    $region9: #{vit3d_forward.4} parent=5 // pred_check
      _
    $region10: #{vit3d_forward.4} parent=5 // pred_check_branch
      %182 = sbr.rel (%p179) target = $region12
    $region11: #{vit3d_forward.4} parent=5 // pred_region
      %s183 = ssub.s32 %s12, 1
      // Predicated region
      $region13: #{vit3d_forward.4} parent=11 // pred_check
        %p184 = pneg %p59
      $region14: #{vit3d_forward.4} parent=11 // pred_check_branch
        %186 = sbr.rel (%p184) target = $region16
      $region15: #{vit3d_forward.4} parent=11 // pred_region
        _
      $region16: #{vit3d_forward.4} parent=11 // pred_fallthru
        _
      // Predicated region
      $region17: #{vit3d_forward.4} parent=11 // pred_check
        %p187 = pneg %p80
      $region18: #{vit3d_forward.4} parent=11 // pred_check_branch
        %189 = sbr.rel (%p187) target = $region20
      $region19: #{vit3d_forward.4} parent=11 // pred_region
        _
      $region20: #{vit3d_forward.4} parent=11 // pred_fallthru
        _
      // Predicated region
      $region21: #{vit3d_forward.4} parent=11 // pred_check
        %p190 = pneg %p101
      $region22: #{vit3d_forward.4} parent=11 // pred_check_branch
        %192 = sbr.rel (%p190) target = $region24
      $region23: #{vit3d_forward.4} parent=11 // pred_region
        _
      $region24: #{vit3d_forward.4} parent=11 // pred_fallthru
        _
      // Predicated region
      $region25: #{vit3d_forward.4} parent=11 // pred_check
        %p193 = pneg %p122
      $region26: #{vit3d_forward.4} parent=11 // pred_check_branch
        %195 = sbr.rel (%p193) target = $region28
      $region27: #{vit3d_forward.4} parent=11 // pred_region
        _
      $region28: #{vit3d_forward.4} parent=11 // pred_fallthru
        _
      // Predicated region
      $region29: #{vit3d_forward.4} parent=11 // pred_check
        %p196 = pneg %p143
      $region30: #{vit3d_forward.4} parent=11 // pred_check_branch
        %198 = sbr.rel (%p196) target = $region32
      $region31: #{vit3d_forward.4} parent=11 // pred_region
        _
      $region32: #{vit3d_forward.4} parent=11 // pred_fallthru
        _
    $region12: #{vit3d_forward.4} parent=5 // pred_fallthru
      _
    %p199 = scmp.lt.s32.totalorder %s12, 2
    // Predicated region
    $region33: #{vit3d_forward.4} parent=5 // pred_check
      %p200 = pneg %p199
    $region34: #{vit3d_forward.4} parent=5 // pred_check_branch
      %202 = sbr.rel (%p200) target = $region36
    $region35: #{vit3d_forward.4} parent=5 // pred_region
      // Predicated region
      $region37: #{vit3d_forward.4} parent=35 // pred_check
        %p203 = pneg %p32
      $region38: #{vit3d_forward.4} parent=35 // pred_check_branch
        %205 = sbr.rel (%p203) target = $region40
      $region39: #{vit3d_forward.4} parent=35 // pred_region
        %p206 = scmp.lt.s32.totalorder %s12, 1
        %s207 = scalar_select %p206, %s12, 1
        %s208 = smul.addr %s207, 16
        %s209 = smul.addr %s208, 8
        %s210 = scalar_lea.vmem %s0, %s209
      $region40: #{vit3d_forward.4} parent=35 // pred_fallthru
        _
    $region36: #{vit3d_forward.4} parent=5 // pred_fallthru
      _
    %p211 = scmp.le.s32.totalorder 1, %s12
    %p212 = scmp.lt.s32.totalorder %s12, 3
    %p213 = pnand %p211, %p212
    %p214 = pneg %p213
    // Predicated region
    $region41: #{vit3d_forward.4} parent=5 // pred_check
      _
    $region42: #{vit3d_forward.4} parent=5 // pred_check_branch
      %216 = sbr.rel (%p213) target = $region44
    $region43: #{vit3d_forward.4} parent=5 // pred_region
      %s217 = ssub.s32 %s12, 1
      %p218 = scmp.lt.s32.totalorder %s17, 1
      %s219 = scalar_select %p218, %s17, 1
      %s220 = smul.addr %s219, 16
      %s221 = smul.addr %s220, 8
      %s222 = scalar_lea.vmem %s0, %s221
      %p223 = pneg %p38
      %p224 = pneg %p35
      %p225 = pneg %p59
      %p226 = pneg %p56
      %p227 = pneg %p80
      %p228 = pneg %p77
      %p229 = pneg %p101
      %p230 = pneg %p98
      %p231 = pneg %p122
      %p232 = pneg %p119
      %p233 = pneg %p143
      %p234 = pneg %p140
      %p235 = pneg %p169
      %p236 = pneg %p166
      %p237 = scmp.lt.s32.totalorder %s17, 1
      %s238 = scalar_select %p237, %s17, 1
      %s239 = smul.addr %s238, 2
      %s240 = smul.addr %s239, 8
      %s241 = scalar_lea.vmem %s6, %s240
      %p242 = scmp.lt.s32.totalorder %s17, 1
      %s243 = scalar_select %p242, %s17, 1
      %s244 = smul.addr %s243, 16
      %s245 = smul.addr %s244, 8
      %s246 = scalar_lea.vmem %s0, %s245
      %p247 = scmp.lt.s32.totalorder %s17, 1
      %s248 = scalar_select %p247, %s17, 1
      %s249 = smul.addr %s248, 2
      %s250 = smul.addr %s249, 8
      %s251 = scalar_lea.vmem %s6, %s250
      %v253 = vld [vmem:[%s246] sm:$0xff]
      %v254 = vld [vmem:[%s246 + $0x8] sm:$0xff]
      %v255 = vld [vmem:[%s246 + $0x10] sm:$0xff]
      %v256 = vld [vmem:[%s246 + $0x18] sm:$0xff]
      %v257 = vld [vmem:[%s246 + $0x20] sm:$0xff]
      %v258 = vld [vmem:[%s246 + $0x28] sm:$0xff]
      %v259 = vld [vmem:[%s246 + $0x30] sm:$0xff]
      %v260 = vld [vmem:[%s246 + $0x38] sm:$0xff]
      %v261 = vld [vmem:[%s246 + $0x40] sm:$0xff]
      %v262 = vld [vmem:[%s246 + $0x48] sm:$0xff]
      %v263 = vld [vmem:[%s246 + $0x50] sm:$0xff]
      %v264 = vld [vmem:[%s246 + $0x58] sm:$0xff]
      %v265 = vld [vmem:[%s246 + $0x60] sm:$0xff]
      %v266 = vld [vmem:[%s246 + $0x68] sm:$0xff]
      %v267 = vld [vmem:[%s246 + $0x70] sm:$0xff]
      %v268 = vld [vmem:[%s246 + $0x78] sm:$0xff]
      %v269 = vpack.c.bf16 %v261, %v253
      %v270 = vpack.c.bf16 %v262, %v254
      %v271 = vpack.c.bf16 %v263, %v255
      %v272 = vpack.c.bf16 %v264, %v256
      %v273 = vpack.c.bf16 %v265, %v257
      %v274 = vpack.c.bf16 %v266, %v258
      %v275 = vpack.c.bf16 %v267, %v259
      %v276 = vpack.c.bf16 %v268, %v260
      %v277 = vld [vmem:[%s1] sm:$0xf]
      %v278 = vld [vmem:[%s1 + $0x4] sm:$0xf]
      %v279 = vld [vmem:[%s1 + $0x8] sm:$0xf]
      %v280 = vld [vmem:[%s1 + $0xc] sm:$0xf]
      %v281 = vld [vmem:[%s1 + $0x10] sm:$0xf]
      %v282 = vld [vmem:[%s1 + $0x14] sm:$0xf]
      %v283 = vld [vmem:[%s1 + $0x18] sm:$0xf]
      %v284 = vld [vmem:[%s1 + $0x1c] sm:$0xf]
      %v285 = vld [vmem:[%s1 + $0x20] sm:$0xf]
      %v286 = vld [vmem:[%s1 + $0x24] sm:$0xf]
      %v287 = vld [vmem:[%s1 + $0x28] sm:$0xf]
      %v288 = vld [vmem:[%s1 + $0x2c] sm:$0xf]
      %v289 = vld [vmem:[%s1 + $0x30] sm:$0xf]
      %v290 = vld [vmem:[%s1 + $0x34] sm:$0xf]
      %v291 = vld [vmem:[%s1 + $0x38] sm:$0xf]
      %v292 = vld [vmem:[%s1 + $0x3c] sm:$0xf]
      %v293 = vld [vmem:[%s1 + $0x40] sm:$0xf]
      %v294 = vld [vmem:[%s1 + $0x44] sm:$0xf]
      %v295 = vld [vmem:[%s1 + $0x48] sm:$0xf]
      %v296 = vld [vmem:[%s1 + $0x4c] sm:$0xf]
      %v297 = vld [vmem:[%s1 + $0x50] sm:$0xf]
      %v298 = vld [vmem:[%s1 + $0x54] sm:$0xf]
      %v299 = vld [vmem:[%s1 + $0x58] sm:$0xf]
      %v300 = vld [vmem:[%s1 + $0x5c] sm:$0xf]
      %v301 = vld [vmem:[%s1 + $0x60] sm:$0xf]
      %v302 = vld [vmem:[%s1 + $0x64] sm:$0xf]
      %v303 = vld [vmem:[%s1 + $0x68] sm:$0xf]
      %v304 = vld [vmem:[%s1 + $0x6c] sm:$0xf]
      %v305 = vld [vmem:[%s1 + $0x70] sm:$0xf]
      %v306 = vld [vmem:[%s1 + $0x74] sm:$0xf]
      %v307 = vld [vmem:[%s1 + $0x78] sm:$0xf]
      %v308 = vld [vmem:[%s1 + $0x7c] sm:$0xf]
      %v309 = vld [vmem:[%s1 + $0x80] sm:$0xf]
      %v310 = vld [vmem:[%s1 + $0x84] sm:$0xf]
      %v311 = vld [vmem:[%s1 + $0x88] sm:$0xf]
      %v312 = vld [vmem:[%s1 + $0x8c] sm:$0xf]
      %v313 = vld [vmem:[%s1 + $0x90] sm:$0xf]
      %v314 = vld [vmem:[%s1 + $0x94] sm:$0xf]
      %v315 = vld [vmem:[%s1 + $0x98] sm:$0xf]
      %v316 = vld [vmem:[%s1 + $0x9c] sm:$0xf]
      %v317 = vld [vmem:[%s1 + $0xa0] sm:$0xf]
      %v318 = vld [vmem:[%s1 + $0xa4] sm:$0xf]
      %v319 = vld [vmem:[%s1 + $0xa8] sm:$0xf]
      %v320 = vld [vmem:[%s1 + $0xac] sm:$0xf]
      %v321 = vld [vmem:[%s1 + $0xb0] sm:$0xf]
      %v322 = vld [vmem:[%s1 + $0xb4] sm:$0xf]
      %v323 = vld [vmem:[%s1 + $0xb8] sm:$0xf]
      %v324 = vld [vmem:[%s1 + $0xbc] sm:$0xf]
      %v325 = vld [vmem:[%s1 + $0xc0] sm:$0xf]
      %v326 = vld [vmem:[%s1 + $0xc4] sm:$0xf]
      %v327 = vld [vmem:[%s1 + $0xc8] sm:$0xf]
      %v328 = vld [vmem:[%s1 + $0xcc] sm:$0xf]
      %v329 = vld [vmem:[%s1 + $0xd0] sm:$0xf]
      %v330 = vld [vmem:[%s1 + $0xd4] sm:$0xf]
      %v331 = vld [vmem:[%s1 + $0xd8] sm:$0xf]
      %v332 = vld [vmem:[%s1 + $0xdc] sm:$0xf]
      %v333 = vld [vmem:[%s1 + $0xe0] sm:$0xf]
      %v334 = vld [vmem:[%s1 + $0xe4] sm:$0xf]
      %v335 = vld [vmem:[%s1 + $0xe8] sm:$0xf]
      %v336 = vld [vmem:[%s1 + $0xec] sm:$0xf]
      %v337 = vld [vmem:[%s1 + $0xf0] sm:$0xf]
      %v338 = vld [vmem:[%s1 + $0xf4] sm:$0xf]
      %v339 = vld [vmem:[%s1 + $0xf8] sm:$0xf]
      %v340 = vld [vmem:[%s1 + $0xfc] sm:$0xf]
      %v341 = vld [vmem:[%s1 + $0x100] sm:$0xf]
      %v342 = vld [vmem:[%s1 + $0x104] sm:$0xf]
      %v343 = vld [vmem:[%s1 + $0x108] sm:$0xf]
      %v344 = vld [vmem:[%s1 + $0x10c] sm:$0xf]
      %v345 = vld [vmem:[%s1 + $0x110] sm:$0xf]
      %v346 = vld [vmem:[%s1 + $0x114] sm:$0xf]
      %v347 = vld [vmem:[%s1 + $0x118] sm:$0xf]
      %v348 = vld [vmem:[%s1 + $0x11c] sm:$0xf]
      %v349 = vld [vmem:[%s1 + $0x120] sm:$0xf]
      %v350 = vld [vmem:[%s1 + $0x124] sm:$0xf]
      %v351 = vld [vmem:[%s1 + $0x128] sm:$0xf]
      %v352 = vld [vmem:[%s1 + $0x12c] sm:$0xf]
      %v353 = vld [vmem:[%s1 + $0x130] sm:$0xf]
      %v354 = vld [vmem:[%s1 + $0x134] sm:$0xf]
      %v355 = vld [vmem:[%s1 + $0x138] sm:$0xf]
      %v356 = vld [vmem:[%s1 + $0x13c] sm:$0xf]
      %v357 = vld [vmem:[%s1 + $0x140] sm:$0xf]
      %v358 = vld [vmem:[%s1 + $0x144] sm:$0xf]
      %v359 = vld [vmem:[%s1 + $0x148] sm:$0xf]
      %v360 = vld [vmem:[%s1 + $0x14c] sm:$0xf]
      %v361 = vld [vmem:[%s1 + $0x150] sm:$0xf]
      %v362 = vld [vmem:[%s1 + $0x154] sm:$0xf]
      %v363 = vld [vmem:[%s1 + $0x158] sm:$0xf]
      %v364 = vld [vmem:[%s1 + $0x15c] sm:$0xf]
      %v365 = vld [vmem:[%s1 + $0x160] sm:$0xf]
      %v366 = vld [vmem:[%s1 + $0x164] sm:$0xf]
      %v367 = vld [vmem:[%s1 + $0x168] sm:$0xf]
      %v368 = vld [vmem:[%s1 + $0x16c] sm:$0xf]
      %v369 = vld [vmem:[%s1 + $0x170] sm:$0xf]
      %v370 = vld [vmem:[%s1 + $0x174] sm:$0xf]
      %v371 = vld [vmem:[%s1 + $0x178] sm:$0xf]
      %v372 = vld [vmem:[%s1 + $0x17c] sm:$0xf]
      %v373 = vld [vmem:[%s1 + $0x180] sm:$0xf]
      %v374 = vld [vmem:[%s1 + $0x184] sm:$0xf]
      %v375 = vld [vmem:[%s1 + $0x188] sm:$0xf]
      %v376 = vld [vmem:[%s1 + $0x18c] sm:$0xf]
      %v377 = vld [vmem:[%s1 + $0x190] sm:$0xf]
      %v378 = vld [vmem:[%s1 + $0x194] sm:$0xf]
      %v379 = vld [vmem:[%s1 + $0x198] sm:$0xf]
      %v380 = vld [vmem:[%s1 + $0x19c] sm:$0xf]
      %v381 = vld [vmem:[%s1 + $0x1a0] sm:$0xf]
      %v382 = vld [vmem:[%s1 + $0x1a4] sm:$0xf]
      %v383 = vld [vmem:[%s1 + $0x1a8] sm:$0xf]
      %v384 = vld [vmem:[%s1 + $0x1ac] sm:$0xf]
      %v385 = vld [vmem:[%s1 + $0x1b0] sm:$0xf]
      %v386 = vld [vmem:[%s1 + $0x1b4] sm:$0xf]
      %v387 = vld [vmem:[%s1 + $0x1b8] sm:$0xf]
      %v388 = vld [vmem:[%s1 + $0x1bc] sm:$0xf]
      %v389 = vld [vmem:[%s1 + $0x1c0] sm:$0xf]
      %v390 = vld [vmem:[%s1 + $0x1c4] sm:$0xf]
      %v391 = vld [vmem:[%s1 + $0x1c8] sm:$0xf]
      %v392 = vld [vmem:[%s1 + $0x1cc] sm:$0xf]
      %v393 = vld [vmem:[%s1 + $0x1d0] sm:$0xf]
      %v394 = vld [vmem:[%s1 + $0x1d4] sm:$0xf]
      %v395 = vld [vmem:[%s1 + $0x1d8] sm:$0xf]
      %v396 = vld [vmem:[%s1 + $0x1dc] sm:$0xf]
      %v397 = vld [vmem:[%s1 + $0x1e0] sm:$0xf]
      %v398 = vld [vmem:[%s1 + $0x1e4] sm:$0xf]
      %v399 = vld [vmem:[%s1 + $0x1e8] sm:$0xf]
      %v400 = vld [vmem:[%s1 + $0x1ec] sm:$0xf]
      %v401 = vld [vmem:[%s1 + $0x1f0] sm:$0xf]
      %v402 = vld [vmem:[%s1 + $0x1f4] sm:$0xf]
      %v403 = vld [vmem:[%s1 + $0x1f8] sm:$0xf]
      %v404 = vld [vmem:[%s1 + $0x1fc] sm:$0xf]
      %v405 = vld [vmem:[%s2] sm:$0x1]
      %v407 = vlaneseq
      %v408 = vshrl.u32 %v407, 7
      %v409 = vsub.s32 0, %v408
      %v410 = vrot.slane %v405, %v409
      %v540 = vunpack.c.l.b16 %v277
      %v541 = vunpack.c.l.b16 %v278
      %v542 = vunpack.c.l.b16 %v279
      %v543 = vunpack.c.l.b16 %v280
      %v544 = vunpack.c.l.b16 %v281
      %v545 = vunpack.c.l.b16 %v282
      %v546 = vunpack.c.l.b16 %v283
      %v547 = vunpack.c.l.b16 %v284
      %v548 = vunpack.c.l.b16 %v285
      %v549 = vunpack.c.l.b16 %v286
      %v550 = vunpack.c.l.b16 %v287
      %v551 = vunpack.c.l.b16 %v288
      %v552 = vunpack.c.l.b16 %v289
      %v553 = vunpack.c.l.b16 %v290
      %v554 = vunpack.c.l.b16 %v291
      %v555 = vunpack.c.l.b16 %v292
      %v556 = vunpack.c.l.b16 %v293
      %v557 = vunpack.c.l.b16 %v294
      %v558 = vunpack.c.l.b16 %v295
      %v559 = vunpack.c.l.b16 %v296
      %v560 = vunpack.c.l.b16 %v297
      %v561 = vunpack.c.l.b16 %v298
      %v562 = vunpack.c.l.b16 %v299
      %v563 = vunpack.c.l.b16 %v300
      %v564 = vunpack.c.l.b16 %v301
      %v565 = vunpack.c.l.b16 %v302
      %v566 = vunpack.c.l.b16 %v303
      %v567 = vunpack.c.l.b16 %v304
      %v568 = vunpack.c.l.b16 %v305
      %v569 = vunpack.c.l.b16 %v306
      %v570 = vunpack.c.l.b16 %v307
      %v571 = vunpack.c.l.b16 %v308
      %v572 = vunpack.c.l.b16 %v309
      %v573 = vunpack.c.l.b16 %v310
      %v574 = vunpack.c.l.b16 %v311
      %v575 = vunpack.c.l.b16 %v312
      %v576 = vunpack.c.l.b16 %v313
      %v577 = vunpack.c.l.b16 %v314
      %v578 = vunpack.c.l.b16 %v315
      %v579 = vunpack.c.l.b16 %v316
      %v580 = vunpack.c.l.b16 %v317
      %v581 = vunpack.c.l.b16 %v318
      %v582 = vunpack.c.l.b16 %v319
      %v583 = vunpack.c.l.b16 %v320
      %v584 = vunpack.c.l.b16 %v321
      %v585 = vunpack.c.l.b16 %v322
      %v586 = vunpack.c.l.b16 %v323
      %v587 = vunpack.c.l.b16 %v324
      %v588 = vunpack.c.l.b16 %v325
      %v589 = vunpack.c.l.b16 %v326
      %v590 = vunpack.c.l.b16 %v327
      %v591 = vunpack.c.l.b16 %v328
      %v592 = vunpack.c.l.b16 %v329
      %v593 = vunpack.c.l.b16 %v330
      %v594 = vunpack.c.l.b16 %v331
      %v595 = vunpack.c.l.b16 %v332
      %v596 = vunpack.c.l.b16 %v333
      %v597 = vunpack.c.l.b16 %v334
      %v598 = vunpack.c.l.b16 %v335
      %v599 = vunpack.c.l.b16 %v336
      %v600 = vunpack.c.l.b16 %v337
      %v601 = vunpack.c.l.b16 %v338
      %v602 = vunpack.c.l.b16 %v339
      %v603 = vunpack.c.l.b16 %v340
      %v604 = vunpack.c.l.b16 %v341
      %v605 = vunpack.c.l.b16 %v342
      %v606 = vunpack.c.l.b16 %v343
      %v607 = vunpack.c.l.b16 %v344
      %v608 = vunpack.c.l.b16 %v345
      %v609 = vunpack.c.l.b16 %v346
      %v610 = vunpack.c.l.b16 %v347
      %v611 = vunpack.c.l.b16 %v348
      %v612 = vunpack.c.l.b16 %v349
      %v613 = vunpack.c.l.b16 %v350
      %v614 = vunpack.c.l.b16 %v351
      %v615 = vunpack.c.l.b16 %v352
      %v616 = vunpack.c.l.b16 %v353
      %v617 = vunpack.c.l.b16 %v354
      %v618 = vunpack.c.l.b16 %v355
      %v619 = vunpack.c.l.b16 %v356
      %v620 = vunpack.c.l.b16 %v357
      %v621 = vunpack.c.l.b16 %v358
      %v622 = vunpack.c.l.b16 %v359
      %v623 = vunpack.c.l.b16 %v360
      %v624 = vunpack.c.l.b16 %v361
      %v625 = vunpack.c.l.b16 %v362
      %v626 = vunpack.c.l.b16 %v363
      %v627 = vunpack.c.l.b16 %v364
      %v628 = vunpack.c.l.b16 %v365
      %v629 = vunpack.c.l.b16 %v366
      %v630 = vunpack.c.l.b16 %v367
      %v631 = vunpack.c.l.b16 %v368
      %v632 = vunpack.c.l.b16 %v369
      %v633 = vunpack.c.l.b16 %v370
      %v634 = vunpack.c.l.b16 %v371
      %v635 = vunpack.c.l.b16 %v372
      %v636 = vunpack.c.l.b16 %v373
      %v637 = vunpack.c.l.b16 %v374
      %v638 = vunpack.c.l.b16 %v375
      %v639 = vunpack.c.l.b16 %v376
      %v640 = vunpack.c.l.b16 %v377
      %v641 = vunpack.c.l.b16 %v378
      %v642 = vunpack.c.l.b16 %v379
      %v643 = vunpack.c.l.b16 %v380
      %v644 = vunpack.c.l.b16 %v381
      %v645 = vunpack.c.l.b16 %v382
      %v646 = vunpack.c.l.b16 %v383
      %v647 = vunpack.c.l.b16 %v384
      %v648 = vunpack.c.l.b16 %v385
      %v649 = vunpack.c.l.b16 %v386
      %v650 = vunpack.c.l.b16 %v387
      %v651 = vunpack.c.l.b16 %v388
      %v652 = vunpack.c.l.b16 %v389
      %v653 = vunpack.c.l.b16 %v390
      %v654 = vunpack.c.l.b16 %v391
      %v655 = vunpack.c.l.b16 %v392
      %v656 = vunpack.c.l.b16 %v393
      %v657 = vunpack.c.l.b16 %v394
      %v658 = vunpack.c.l.b16 %v395
      %v659 = vunpack.c.l.b16 %v396
      %v660 = vunpack.c.l.b16 %v397
      %v661 = vunpack.c.l.b16 %v398
      %v662 = vunpack.c.l.b16 %v399
      %v663 = vunpack.c.l.b16 %v400
      %v664 = vunpack.c.l.b16 %v401
      %v665 = vunpack.c.l.b16 %v402
      %v666 = vunpack.c.l.b16 %v403
      %v667 = vunpack.c.l.b16 %v404
      %v668 = vpack.c.b16 %v541, %v540
      %v669 = vpack.c.b16 %v543, %v542
      %v670 = vpack.c.b16 %v545, %v544
      %v671 = vpack.c.b16 %v547, %v546
      %v672 = vpack.c.b16 %v549, %v548
      %v673 = vpack.c.b16 %v551, %v550
      %v674 = vpack.c.b16 %v553, %v552
      %v675 = vpack.c.b16 %v555, %v554
      %v676 = vpack.c.b16 %v557, %v556
      %v677 = vpack.c.b16 %v559, %v558
      %v678 = vpack.c.b16 %v561, %v560
      %v679 = vpack.c.b16 %v563, %v562
      %v680 = vpack.c.b16 %v565, %v564
      %v681 = vpack.c.b16 %v567, %v566
      %v682 = vpack.c.b16 %v569, %v568
      %v683 = vpack.c.b16 %v571, %v570
      %v684 = vpack.c.b16 %v573, %v572
      %v685 = vpack.c.b16 %v575, %v574
      %v686 = vpack.c.b16 %v577, %v576
      %v687 = vpack.c.b16 %v579, %v578
      %v688 = vpack.c.b16 %v581, %v580
      %v689 = vpack.c.b16 %v583, %v582
      %v690 = vpack.c.b16 %v585, %v584
      %v691 = vpack.c.b16 %v587, %v586
      %v692 = vpack.c.b16 %v589, %v588
      %v693 = vpack.c.b16 %v591, %v590
      %v694 = vpack.c.b16 %v593, %v592
      %v695 = vpack.c.b16 %v595, %v594
      %v696 = vpack.c.b16 %v597, %v596
      %v697 = vpack.c.b16 %v599, %v598
      %v698 = vpack.c.b16 %v601, %v600
      %v699 = vpack.c.b16 %v603, %v602
      %v700 = vpack.c.b16 %v605, %v604
      %v701 = vpack.c.b16 %v607, %v606
      %v702 = vpack.c.b16 %v609, %v608
      %v703 = vpack.c.b16 %v611, %v610
      %v704 = vpack.c.b16 %v613, %v612
      %v705 = vpack.c.b16 %v615, %v614
      %v706 = vpack.c.b16 %v617, %v616
      %v707 = vpack.c.b16 %v619, %v618
      %v708 = vpack.c.b16 %v621, %v620
      %v709 = vpack.c.b16 %v623, %v622
      %v710 = vpack.c.b16 %v625, %v624
      %v711 = vpack.c.b16 %v627, %v626
      %v712 = vpack.c.b16 %v629, %v628
      %v713 = vpack.c.b16 %v631, %v630
      %v714 = vpack.c.b16 %v633, %v632
      %v715 = vpack.c.b16 %v635, %v634
      %v716 = vpack.c.b16 %v637, %v636
      %v717 = vpack.c.b16 %v639, %v638
      %v718 = vpack.c.b16 %v641, %v640
      %v719 = vpack.c.b16 %v643, %v642
      %v720 = vpack.c.b16 %v645, %v644
      %v721 = vpack.c.b16 %v647, %v646
      %v722 = vpack.c.b16 %v649, %v648
      %v723 = vpack.c.b16 %v651, %v650
      %v724 = vpack.c.b16 %v653, %v652
      %v725 = vpack.c.b16 %v655, %v654
      %v726 = vpack.c.b16 %v657, %v656
      %v727 = vpack.c.b16 %v659, %v658
      %v728 = vpack.c.b16 %v661, %v660
      %v729 = vpack.c.b16 %v663, %v662
      %v730 = vpack.c.b16 %v665, %v664
      %v731 = vpack.c.b16 %v667, %v666
      %796 = vmatprep.subr.bf16.mxu0 0
      %797 = vmatpush1.bf16.msra.mxu0 %v668
      %798 = vmatprep.subr.bf16.mxu0 0
      %799 = vmatpush1.bf16.msra.mxu0 %v669
      %800 = vmatprep.subr.bf16.mxu0 0
      %801 = vmatpush1.bf16.msra.mxu0 %v670
      %802 = vmatprep.subr.bf16.mxu0 0
      %803 = vmatpush1.bf16.msra.mxu0 %v671
      %804 = vmatprep.subr.bf16.mxu0 0
      %805 = vmatpush1.bf16.msra.mxu0 %v672
      %806 = vmatprep.subr.bf16.mxu0 0
      %807 = vmatpush1.bf16.msra.mxu0 %v673
      %808 = vmatprep.subr.bf16.mxu0 0
      %809 = vmatpush1.bf16.msra.mxu0 %v674
      %810 = vmatprep.subr.bf16.mxu0 0
      %811 = vmatpush1.bf16.msra.mxu0 %v675
      %812 = vmatprep.subr.bf16.mxu0 0
      %813 = vmatpush1.bf16.msra.mxu0 %v676
      %814 = vmatprep.subr.bf16.mxu0 0
      %815 = vmatpush1.bf16.msra.mxu0 %v677
      %816 = vmatprep.subr.bf16.mxu0 0
      %817 = vmatpush1.bf16.msra.mxu0 %v678
      %818 = vmatprep.subr.bf16.mxu0 0
      %819 = vmatpush1.bf16.msra.mxu0 %v679
      %820 = vmatprep.subr.bf16.mxu0 0
      %821 = vmatpush1.bf16.msra.mxu0 %v680
      %822 = vmatprep.subr.bf16.mxu0 0
      %823 = vmatpush1.bf16.msra.mxu0 %v681
      %824 = vmatprep.subr.bf16.mxu0 0
      %825 = vmatpush1.bf16.msra.mxu0 %v682
      %826 = vmatprep.subr.bf16.mxu0 0
      %827 = vmatpush1.bf16.msra.mxu0 %v683
      %828 = vmatprep.mubr.bf16.mxu0 %v270
      %829 = vmatmul.mubr.bf16.gmra.mrb[0].mxu0 %v269
      %v830 = vpop.f32.mrb[0].mxu0
      %v831 = vadd.f32 %v410, %v830
      %v832 = vpop.f32.mrb[0].mxu0
      %v833 = vpop.f32.mrb[0].mxu0
      %v834 = vadd.f32 %v410, %v833
      %v835 = vpop.f32.mrb[0].mxu0
      %836 = vdwg.mxu0
      %837 = vmatprep.subr.bf16.mxu0 0
      %838 = vmatpush1.bf16.msra.mxu0 %v684
      %839 = vmatprep.subr.bf16.mxu0 0
      %840 = vmatpush1.bf16.msra.mxu0 %v685
      %841 = vmatprep.subr.bf16.mxu0 0
      %842 = vmatpush1.bf16.msra.mxu0 %v686
      %843 = vmatprep.subr.bf16.mxu0 0
      %844 = vmatpush1.bf16.msra.mxu0 %v687
      %845 = vmatprep.subr.bf16.mxu0 0
      %846 = vmatpush1.bf16.msra.mxu0 %v688
      %847 = vmatprep.subr.bf16.mxu0 0
      %848 = vmatpush1.bf16.msra.mxu0 %v689
      %849 = vmatprep.subr.bf16.mxu0 0
      %850 = vmatpush1.bf16.msra.mxu0 %v690
      %851 = vmatprep.subr.bf16.mxu0 0
      %852 = vmatpush1.bf16.msra.mxu0 %v691
      %853 = vmatprep.subr.bf16.mxu0 0
      %854 = vmatpush1.bf16.msra.mxu0 %v692
      %855 = vmatprep.subr.bf16.mxu0 0
      %856 = vmatpush1.bf16.msra.mxu0 %v693
      %857 = vmatprep.subr.bf16.mxu0 0
      %858 = vmatpush1.bf16.msra.mxu0 %v694
      %859 = vmatprep.subr.bf16.mxu0 0
      %860 = vmatpush1.bf16.msra.mxu0 %v695
      %861 = vmatprep.subr.bf16.mxu0 0
      %862 = vmatpush1.bf16.msra.mxu0 %v696
      %863 = vmatprep.subr.bf16.mxu0 0
      %864 = vmatpush1.bf16.msra.mxu0 %v697
      %865 = vmatprep.subr.bf16.mxu0 0
      %866 = vmatpush1.bf16.msra.mxu0 %v698
      %867 = vmatprep.subr.bf16.mxu0 0
      %868 = vmatpush1.bf16.msra.mxu0 %v699
      %869 = vmatprep.mubr.bf16.mxu0 %v272
      %870 = vmatmul.mubr.bf16.gmra.mrb[0].mxu0 %v271
      %v871 = vpop.f32.mrb[0].mxu0
      %v872 = vadd.f32 %v831, %v871
      %v873 = vpop.f32.mrb[0].mxu0
      %v874 = vpop.f32.mrb[0].mxu0
      %v875 = vadd.f32 %v834, %v874
      %v876 = vpop.f32.mrb[0].mxu0
      %877 = vdwg.mxu0
      %878 = vmatprep.subr.bf16.mxu0 0
      %879 = vmatpush1.bf16.msra.mxu0 %v700
      %880 = vmatprep.subr.bf16.mxu0 0
      %881 = vmatpush1.bf16.msra.mxu0 %v701
      %882 = vmatprep.subr.bf16.mxu0 0
      %883 = vmatpush1.bf16.msra.mxu0 %v702
      %884 = vmatprep.subr.bf16.mxu0 0
      %885 = vmatpush1.bf16.msra.mxu0 %v703
      %886 = vmatprep.subr.bf16.mxu0 0
      %887 = vmatpush1.bf16.msra.mxu0 %v704
      %888 = vmatprep.subr.bf16.mxu0 0
      %889 = vmatpush1.bf16.msra.mxu0 %v705
      %890 = vmatprep.subr.bf16.mxu0 0
      %891 = vmatpush1.bf16.msra.mxu0 %v706
      %892 = vmatprep.subr.bf16.mxu0 0
      %893 = vmatpush1.bf16.msra.mxu0 %v707
      %894 = vmatprep.subr.bf16.mxu0 0
      %895 = vmatpush1.bf16.msra.mxu0 %v708
      %896 = vmatprep.subr.bf16.mxu0 0
      %897 = vmatpush1.bf16.msra.mxu0 %v709
      %898 = vmatprep.subr.bf16.mxu0 0
      %899 = vmatpush1.bf16.msra.mxu0 %v710
      %900 = vmatprep.subr.bf16.mxu0 0
      %901 = vmatpush1.bf16.msra.mxu0 %v711
      %902 = vmatprep.subr.bf16.mxu0 0
      %903 = vmatpush1.bf16.msra.mxu0 %v712
      %904 = vmatprep.subr.bf16.mxu0 0
      %905 = vmatpush1.bf16.msra.mxu0 %v713
      %906 = vmatprep.subr.bf16.mxu0 0
      %907 = vmatpush1.bf16.msra.mxu0 %v714
      %908 = vmatprep.subr.bf16.mxu0 0
      %909 = vmatpush1.bf16.msra.mxu0 %v715
      %910 = vmatprep.mubr.bf16.mxu0 %v274
      %911 = vmatmul.mubr.bf16.gmra.mrb[0].mxu0 %v273
      %v912 = vpop.f32.mrb[0].mxu0
      %v913 = vadd.f32 %v872, %v912
      %v914 = vpop.f32.mrb[0].mxu0
      %v915 = vpop.f32.mrb[0].mxu0
      %v916 = vadd.f32 %v875, %v915
      %v917 = vpop.f32.mrb[0].mxu0
      %918 = vdwg.mxu0
      %919 = vmatprep.subr.bf16.mxu0 0
      %920 = vmatpush1.bf16.msra.mxu0 %v716
      %921 = vmatprep.subr.bf16.mxu0 0
      %922 = vmatpush1.bf16.msra.mxu0 %v717
      %923 = vmatprep.subr.bf16.mxu0 0
      %924 = vmatpush1.bf16.msra.mxu0 %v718
      %925 = vmatprep.subr.bf16.mxu0 0
      %926 = vmatpush1.bf16.msra.mxu0 %v719
      %927 = vmatprep.subr.bf16.mxu0 0
      %928 = vmatpush1.bf16.msra.mxu0 %v720
      %929 = vmatprep.subr.bf16.mxu0 0
      %930 = vmatpush1.bf16.msra.mxu0 %v721
      %931 = vmatprep.subr.bf16.mxu0 0
      %932 = vmatpush1.bf16.msra.mxu0 %v722
      %933 = vmatprep.subr.bf16.mxu0 0
      %934 = vmatpush1.bf16.msra.mxu0 %v723
      %935 = vmatprep.subr.bf16.mxu0 0
      %936 = vmatpush1.bf16.msra.mxu0 %v724
      %937 = vmatprep.subr.bf16.mxu0 0
      %938 = vmatpush1.bf16.msra.mxu0 %v725
      %939 = vmatprep.subr.bf16.mxu0 0
      %940 = vmatpush1.bf16.msra.mxu0 %v726
      %941 = vmatprep.subr.bf16.mxu0 0
      %942 = vmatpush1.bf16.msra.mxu0 %v727
      %943 = vmatprep.subr.bf16.mxu0 0
      %944 = vmatpush1.bf16.msra.mxu0 %v728
      %945 = vmatprep.subr.bf16.mxu0 0
      %946 = vmatpush1.bf16.msra.mxu0 %v729
      %947 = vmatprep.subr.bf16.mxu0 0
      %948 = vmatpush1.bf16.msra.mxu0 %v730
      %949 = vmatprep.subr.bf16.mxu0 0
      %950 = vmatpush1.bf16.msra.mxu0 %v731
      %951 = vmatprep.mubr.bf16.mxu0 %v276
      %952 = vmatmul.mubr.bf16.gmra.mrb[0].mxu0 %v275
      %v953 = vpop.f32.mrb[0].mxu0
      %v954 = vadd.f32 %v913, %v953
      %v955 = vpop.f32.mrb[0].mxu0
      %v956 = vpop.f32.mrb[0].mxu0
      %v957 = vadd.f32 %v916, %v956
      %v958 = vpop.f32.mrb[0].mxu0
      %959 = vdwg.mxu0
      %v960 = vpack.c.bf16 %v957, %v954
      %v961 = vld [vmem:[%s3] sm:$0xf]
      %v962 = vld [vmem:[%s3 + $0x4] sm:$0xf]
      %v963 = vld [vmem:[%s3 + $0x8] sm:$0xf]
      %v964 = vld [vmem:[%s3 + $0xc] sm:$0xf]
      %v965 = vld [vmem:[%s3 + $0x10] sm:$0xf]
      %v966 = vld [vmem:[%s3 + $0x14] sm:$0xf]
      %v967 = vld [vmem:[%s3 + $0x18] sm:$0xf]
      %v968 = vld [vmem:[%s3 + $0x1c] sm:$0xf]
      %v969 = vld [vmem:[%s3 + $0x20] sm:$0xf]
      %v970 = vld [vmem:[%s3 + $0x24] sm:$0xf]
      %v971 = vld [vmem:[%s3 + $0x28] sm:$0xf]
      %v972 = vld [vmem:[%s3 + $0x2c] sm:$0xf]
      %v973 = vld [vmem:[%s3 + $0x30] sm:$0xf]
      %v974 = vld [vmem:[%s3 + $0x34] sm:$0xf]
      %v975 = vld [vmem:[%s3 + $0x38] sm:$0xf]
      %v976 = vld [vmem:[%s3 + $0x3c] sm:$0xf]
      %v977 = vld [vmem:[%s4] sm:$0x1]
      %v979 = vlaneseq
      %v980 = vshrl.u32 %v979, 7
      %v981 = vsub.s32 0, %v980
      %v982 = vrot.slane %v977, %v981
      %v1000 = vunpack.c.l.b16 %v961
      %v1001 = vunpack.c.l.b16 %v962
      %v1002 = vunpack.c.l.b16 %v963
      %v1003 = vunpack.c.l.b16 %v964
      %v1004 = vunpack.c.l.b16 %v965
      %v1005 = vunpack.c.l.b16 %v966
      %v1006 = vunpack.c.l.b16 %v967
      %v1007 = vunpack.c.l.b16 %v968
      %v1008 = vunpack.c.l.b16 %v969
      %v1009 = vunpack.c.l.b16 %v970
      %v1010 = vunpack.c.l.b16 %v971
      %v1011 = vunpack.c.l.b16 %v972
      %v1012 = vunpack.c.l.b16 %v973
      %v1013 = vunpack.c.l.b16 %v974
      %v1014 = vunpack.c.l.b16 %v975
      %v1015 = vunpack.c.l.b16 %v976
      %v1016 = vpack.c.b16 %v1001, %v1000
      %v1017 = vpack.c.b16 %v1003, %v1002
      %v1018 = vpack.c.b16 %v1005, %v1004
      %v1019 = vpack.c.b16 %v1007, %v1006
      %v1020 = vpack.c.b16 %v1009, %v1008
      %v1021 = vpack.c.b16 %v1011, %v1010
      %v1022 = vpack.c.b16 %v1013, %v1012
      %v1023 = vpack.c.b16 %v1015, %v1014
      %1032 = vmatprep.subr.bf16.mxu0 0
      %1033 = vmatpush1.bf16.msra.mxu0 %v1016
      %1034 = vmatprep.subr.bf16.mxu0 0
      %1035 = vmatpush1.bf16.msra.mxu0 %v1017
      %1036 = vmatprep.subr.bf16.mxu0 0
      %1037 = vmatpush1.bf16.msra.mxu0 %v1018
      %1038 = vmatprep.subr.bf16.mxu0 0
      %1039 = vmatpush1.bf16.msra.mxu0 %v1019
      %1040 = vmatprep.subr.bf16.mxu0 0
      %1041 = vmatpush1.bf16.msra.mxu0 %v1020
      %1042 = vmatprep.subr.bf16.mxu0 0
      %1043 = vmatpush1.bf16.msra.mxu0 %v1021
      %1044 = vmatprep.subr.bf16.mxu0 0
      %1045 = vmatpush1.bf16.msra.mxu0 %v1022
      %1046 = vmatprep.subr.bf16.mxu0 0
      %1047 = vmatpush1.bf16.msra.mxu0 %v1023
      %1048 = vmatprep.subr.bf16.mxu0 0
      %1049 = vmatpush1.bf16.msra.mxu0 0
      %1050 = vmatprep.subr.bf16.mxu0 0
      %1051 = vmatpush1.bf16.msra.mxu0 0
      %1052 = vmatprep.subr.bf16.mxu0 0
      %1053 = vmatpush1.bf16.msra.mxu0 0
      %1054 = vmatprep.subr.bf16.mxu0 0
      %1055 = vmatpush1.bf16.msra.mxu0 0
      %1056 = vmatprep.subr.bf16.mxu0 0
      %1057 = vmatpush1.bf16.msra.mxu0 0
      %1058 = vmatprep.subr.bf16.mxu0 0
      %1059 = vmatpush1.bf16.msra.mxu0 0
      %1060 = vmatprep.subr.bf16.mxu0 0
      %1061 = vmatpush1.bf16.msra.mxu0 0
      %1062 = vmatprep.subr.bf16.mxu0 0
      %1063 = vmatpush1.bf16.msra.mxu0 0
      %1064 = vmatprep.mubr.bf16.mxu0 0
      %1065 = vmatmul.mubr.bf16.gmra.mrb[0].mxu0 %v960
      %v1066 = vpop.f32.mrb[0].mxu0
      %v1067 = vadd.f32 %v982, %v1066
      %v1068 = vpop.f32.mrb[0].mxu0
      %v1069 = vpop.f32.mrb[0].mxu0
      %v1070 = vadd.f32 %v982, %v1069
      %v1071 = vpop.f32.mrb[0].mxu0
      %1072 = vdwg.mxu0
      %v1073 = vlaneseq
      %v1074 = vshrl.u32 %v1073, 7
      %v1075 = vadd.s32 %v1074, 8
      %vm1076 = vcmp.ge.s32.totalorder %v1074, 1
      %vm1077 = vcmp.ge.s32.totalorder %v1075, 1
      %vm1078 = vcmp.le.s32.totalorder %v1074, 8
      %vm1079 = vcmp.le.s32.totalorder %v1075, 8
      %vm1080 = vmand %vm1076, %vm1078
      %vm1081 = vmand %vm1077, %vm1079
      %v1082 = vld [vmem:[%s5] sm:$0xff]
      %v1083 = vld [vmem:[%s5 + $0x8] sm:$0xff]
      %v1084 = vsel %vm1080, %v1067, 0.0
      %v1085 = vsel %vm1081, %v1070, 0.0
      %v1086 = vadd.f32 %v1082, %v1084
      %v1087 = vadd.f32 %v1083, %v1085
      %1088 = vst [vmem:[%s251] sm:$0xff] %v1086
      %1089 = vst [vmem:[%s251 + $0x8] sm:$0xff] %v1087
      %p1090 = scmp.lt.s32.totalorder %s17, 1
      %s1091 = scalar_select %p1090, %s17, 1
      %s1092 = smul.addr %s1091, 2
      %s1093 = smul.addr %s1092, 8
      %s1094 = scalar_lea.vmem %s6, %s1093
      // Predicated region
      $region45: #{vit3d_forward.4} parent=43 // pred_check
        %p1095 = pneg %p166
      $region46: #{vit3d_forward.4} parent=43 // pred_check_branch
        %1097 = sbr.rel (%p1095) target = $region48
      $region47: #{vit3d_forward.4} parent=43 // pred_region
        _
      $region48: #{vit3d_forward.4} parent=43 // pred_fallthru
        _
    $region44: #{vit3d_forward.4} parent=5 // pred_fallthru
      _
    %p1098 = scmp.le.s32.totalorder 2, %s12
    // Predicated region
    $region49: #{vit3d_forward.4} parent=5 // pred_check
      %p1099 = pneg %p1098
    $region50: #{vit3d_forward.4} parent=5 // pred_check_branch
      %1101 = sbr.rel (%p1099) target = $region52
    $region51: #{vit3d_forward.4} parent=5 // pred_region
      %s1102 = ssub.s32 %s12, 2
      // Predicated region
      $region53: #{vit3d_forward.4} parent=51 // pred_check
        %p1103 = pneg %p172
      $region54: #{vit3d_forward.4} parent=51 // pred_check_branch
        %1105 = sbr.rel (%p1103) target = $region56
      $region55: #{vit3d_forward.4} parent=51 // pred_region
        %p1106 = scmp.lt.s32.totalorder %s18, 1
        %s1107 = scalar_select %p1106, %s18, 1
        %s1108 = smul.addr %s1107, 2
        %s1109 = smul.addr %s1108, 8
        %s1110 = scalar_lea.vmem %s6, %s1109
      $region56: #{vit3d_forward.4} parent=51 // pred_fallthru
        _
    $region52: #{vit3d_forward.4} parent=5 // pred_fallthru
      _
  $region6: #{vit3d_forward.4} parent=0 // loop_footer
    %s16 = sadd.s32 1, %s12
  $region7: #{vit3d_forward.4} parent=0 // loop_footer_branch
    %11 = sbr.rel target = $region3
  $region8: #{vit3d_forward.4} parent=0 // loop_exit
    _

// kernel: vit3d_forward.7
$region0: #{vit3d_forward.7}
  #allocation0 [shape = 'u32[]', space=smem, size = 0x4, offset = 0x4, fixed_abs, tag = 'smem constant byte address 0x4 - core index']
  #allocation1 [shape = 'u32[144,128]{1,0:T(1,128)}', space=vmem, size = 0x12000, scoped, tag = 'internal scratch']
  %s0 = inlined_call_operand.vmem [shape: f32[8,128], index: 0, kind: input, shape index: {}]
  %s1 = inlined_call_operand.vmem [shape: f32[1,128], index: 1, kind: input, shape index: {}]
  %s2 = inlined_call_operand.vmem [shape: f32[1,128], index: 2, kind: input, shape index: {}]
  %s3 = inlined_call_operand.vmem [shape: bf16[128,128], index: 3, kind: input, shape index: {}]
  %s4 = inlined_call_operand.vmem [shape: f32[1,128], index: 4, kind: input, shape index: {}]
  %s5 = inlined_call_operand.vmem [shape: f32[8,128], index: 5, kind: output, shape index: {}]
  %s6 = sld [smem:[#allocation0]]
  $region30: #{vit3d_forward.7} parent=0
    _
  %s8 = ssub.s32 1, %s6
  %s9 = scalar_select 0, %s8, %s6
  // Predicated region
  $region2: #{vit3d_forward.7} parent=0 // pred_check
    _
  $region3: #{vit3d_forward.7} parent=0 // pred_check_branch
    %11 = sbr.rel (0) target = $region5
  $region4: #{vit3d_forward.7} parent=0 // pred_region
    _
  $region5: #{vit3d_forward.7} parent=0 // pred_fallthru
    _
  // Predicated region
  $region6: #{vit3d_forward.7} parent=0 // pred_check
    _
  $region7: #{vit3d_forward.7} parent=0 // pred_check_branch
    %13 = sbr.rel (0) target = $region9
  $region8: #{vit3d_forward.7} parent=0 // pred_region
    _
  $region9: #{vit3d_forward.7} parent=0 // pred_fallthru
    _
  // Predicated region
  $region10: #{vit3d_forward.7} parent=0 // pred_check
    _
  $region11: #{vit3d_forward.7} parent=0 // pred_check_branch
    %15 = sbr.rel (0) target = $region13
  $region12: #{vit3d_forward.7} parent=0 // pred_region
    _
  $region13: #{vit3d_forward.7} parent=0 // pred_fallthru
    _
  // Predicated region
  $region14: #{vit3d_forward.7} parent=0 // pred_check
    _
  $region15: #{vit3d_forward.7} parent=0 // pred_check_branch
    %17 = sbr.rel (0) target = $region17
  $region16: #{vit3d_forward.7} parent=0 // pred_region
    _
  $region17: #{vit3d_forward.7} parent=0 // pred_fallthru
    _
  // Predicated region
  $region18: #{vit3d_forward.7} parent=0 // pred_check
    _
  $region19: #{vit3d_forward.7} parent=0 // pred_check_branch
    %19 = sbr.rel (0) target = $region21
  $region20: #{vit3d_forward.7} parent=0 // pred_region
    _
  $region21: #{vit3d_forward.7} parent=0 // pred_fallthru
    _
  %v21 = vld [vmem:[%s0] sm:$0xff]
  %v22 = vld [vmem:[%s1] sm:$0x1]
  %v23 = vld [vmem:[%s2] sm:$0x1]
  %24 = vadd.xlane.f32.xlu0 %v21
  %v25 = vpop.xlane.xlu0 %24
  %v26 = vrcp.pop 128.0
  %v27 = vmul.f32 %v25, %v26
  %v28 = vsub.f32 %v21, %v27
  %v29 = vmul.f32 %v28, %v28
  %30 = vadd.xlane.f32.xlu0 %v29
  %v31 = vpop.xlane.xlu0 %30
  %v32 = vmul.f32 %v31, %v26
  %v33 = vadd.f32 %v32, 1e-05
  %v34 = vrsqrt.pop %v33
  %v35 = vmul.f32 %v28, %v34
  %v37 = vlaneseq
  %v38 = vshrl.u32 %v37, 7
  %v39 = vsub.s32 0, %v38
  %v40 = vrot.slane %v22, %v39
  %v42 = vmul.f32 %v35, %v40
  %v44 = vlaneseq
  %v45 = vshrl.u32 %v44, 7
  %v46 = vsub.s32 0, %v45
  %v47 = vrot.slane %v23, %v46
  %v49 = vadd.f32 %v42, %v47
  %v50 = vpack.c.bf16 %v49, %v49
  %v51 = vld [vmem:[%s3] sm:$0xf]
  %v52 = vld [vmem:[%s3 + $0x4] sm:$0xf]
  %v53 = vld [vmem:[%s3 + $0x8] sm:$0xf]
  %v54 = vld [vmem:[%s3 + $0xc] sm:$0xf]
  %v55 = vld [vmem:[%s3 + $0x10] sm:$0xf]
  %v56 = vld [vmem:[%s3 + $0x14] sm:$0xf]
  %v57 = vld [vmem:[%s3 + $0x18] sm:$0xf]
  %v58 = vld [vmem:[%s3 + $0x1c] sm:$0xf]
  %v59 = vld [vmem:[%s3 + $0x20] sm:$0xf]
  %v60 = vld [vmem:[%s3 + $0x24] sm:$0xf]
  %v61 = vld [vmem:[%s3 + $0x28] sm:$0xf]
  %v62 = vld [vmem:[%s3 + $0x2c] sm:$0xf]
  %v63 = vld [vmem:[%s3 + $0x30] sm:$0xf]
  %v64 = vld [vmem:[%s3 + $0x34] sm:$0xf]
  %v65 = vld [vmem:[%s3 + $0x38] sm:$0xf]
  %v66 = vld [vmem:[%s3 + $0x3c] sm:$0xf]
  %v67 = vld [vmem:[%s4] sm:$0x1]
  %v69 = vlaneseq
  %v70 = vshrl.u32 %v69, 7
  %v71 = vsub.s32 0, %v70
  %v72 = vrot.slane %v67, %v71
  %v90 = vunpack.c.l.b16 %v51
  %v91 = vunpack.c.l.b16 %v52
  %v92 = vunpack.c.l.b16 %v53
  %v93 = vunpack.c.l.b16 %v54
  %v94 = vunpack.c.l.b16 %v55
  %v95 = vunpack.c.l.b16 %v56
  %v96 = vunpack.c.l.b16 %v57
  %v97 = vunpack.c.l.b16 %v58
  %v98 = vunpack.c.l.b16 %v59
  %v99 = vunpack.c.l.b16 %v60
  %v100 = vunpack.c.l.b16 %v61
  %v101 = vunpack.c.l.b16 %v62
  %v102 = vunpack.c.l.b16 %v63
  %v103 = vunpack.c.l.b16 %v64
  %v104 = vunpack.c.l.b16 %v65
  %v105 = vunpack.c.l.b16 %v66
  %v106 = vpack.c.b16 %v91, %v90
  %v107 = vpack.c.b16 %v93, %v92
  %v108 = vpack.c.b16 %v95, %v94
  %v109 = vpack.c.b16 %v97, %v96
  %v110 = vpack.c.b16 %v99, %v98
  %v111 = vpack.c.b16 %v101, %v100
  %v112 = vpack.c.b16 %v103, %v102
  %v113 = vpack.c.b16 %v105, %v104
  %122 = vmatprep.subr.bf16.mxu0 0
  %123 = vmatpush1.bf16.msra.mxu0 %v106
  %124 = vmatprep.subr.bf16.mxu0 0
  %125 = vmatpush1.bf16.msra.mxu0 %v107
  %126 = vmatprep.subr.bf16.mxu0 0
  %127 = vmatpush1.bf16.msra.mxu0 %v108
  %128 = vmatprep.subr.bf16.mxu0 0
  %129 = vmatpush1.bf16.msra.mxu0 %v109
  %130 = vmatprep.subr.bf16.mxu0 0
  %131 = vmatpush1.bf16.msra.mxu0 %v110
  %132 = vmatprep.subr.bf16.mxu0 0
  %133 = vmatpush1.bf16.msra.mxu0 %v111
  %134 = vmatprep.subr.bf16.mxu0 0
  %135 = vmatpush1.bf16.msra.mxu0 %v112
  %136 = vmatprep.subr.bf16.mxu0 0
  %137 = vmatpush1.bf16.msra.mxu0 %v113
  %138 = vmatprep.subr.bf16.mxu0 0
  %139 = vmatpush1.bf16.msra.mxu0 0
  %140 = vmatprep.subr.bf16.mxu0 0
  %141 = vmatpush1.bf16.msra.mxu0 0
  %142 = vmatprep.subr.bf16.mxu0 0
  %143 = vmatpush1.bf16.msra.mxu0 0
  %144 = vmatprep.subr.bf16.mxu0 0
  %145 = vmatpush1.bf16.msra.mxu0 0
  %146 = vmatprep.subr.bf16.mxu0 0
  %147 = vmatpush1.bf16.msra.mxu0 0
  %148 = vmatprep.subr.bf16.mxu0 0
  %149 = vmatpush1.bf16.msra.mxu0 0
  %150 = vmatprep.subr.bf16.mxu0 0
  %151 = vmatpush1.bf16.msra.mxu0 0
  %152 = vmatprep.subr.bf16.mxu0 0
  %153 = vmatpush1.bf16.msra.mxu0 0
  %154 = vmatprep.mubr.bf16.mxu0 0
  %155 = vmatmul.mubr.bf16.gmra.mrb[0].mxu0 %v50
  %v156 = vpop.f32.mrb[0].mxu0
  %v157 = vadd.f32 %v72, %v156
  %v158 = vpop.f32.mrb[0].mxu0
  %v159 = vpop.f32.mrb[0].mxu0
  %v160 = vpop.f32.mrb[0].mxu0
  %161 = vdwg.mxu0
  %162 = vst [vmem:[%s5] sm:$0xff] %v157
  // Predicated region
  $region22: #{vit3d_forward.7} parent=0 // pred_check
    _
  $region23: #{vit3d_forward.7} parent=0 // pred_check_branch
    %164 = sbr.rel (0) target = $region25
  $region24: #{vit3d_forward.7} parent=0 // pred_region
    _
  $region25: #{vit3d_forward.7} parent=0 // pred_fallthru
    _
  // Predicated region
  $region26: #{vit3d_forward.7} parent=0 // pred_check
    _
  $region27: #{vit3d_forward.7} parent=0 // pred_check_branch
    %166 = sbr.rel (0) target = $region29
  $region28: #{vit3d_forward.7} parent=0 // pred_region
    _
  $region29: #{vit3d_forward.7} parent=0 // pred_fallthru
    _

// kernel: vit3d_forward.5
$region0: #{vit3d_forward.5}
  #allocation0 [shape = 'u32[]', space=smem, size = 0x4, offset = 0x4, fixed_abs, tag = 'smem constant byte address 0x4 - core index']
  #allocation1 [shape = 'u32[144,128]{1,0:T(1,128)}', space=vmem, size = 0x12000, scoped, tag = 'internal scratch']
  %s0 = inlined_call_operand.vmem [shape: f32[2,16,128], index: 0, kind: input, shape index: {}]
  %s1 = inlined_call_operand.vmem [shape: bf16[128,384], index: 1, kind: input, shape index: {}]
  %s2 = inlined_call_operand.vmem [shape: f32[1,384], index: 2, kind: input, shape index: {}]
  %s3 = inlined_call_operand.vmem [shape: bf16[128,128], index: 3, kind: input, shape index: {}]
  %s4 = inlined_call_operand.vmem [shape: f32[1,128], index: 4, kind: input, shape index: {}]
  %s5 = inlined_call_operand.vmem [shape: f32[1,128], index: 5, kind: input, shape index: {}]
  %s6 = inlined_call_operand.vmem [shape: f32[1,128], index: 6, kind: input, shape index: {}]
  %s7 = inlined_call_operand.vmem [shape: bf16[128,512], index: 7, kind: input, shape index: {}]
  %s8 = inlined_call_operand.vmem [shape: f32[1,512], index: 8, kind: input, shape index: {}]
  %s9 = inlined_call_operand.vmem [shape: bf16[512,128], index: 9, kind: input, shape index: {}]
  %s10 = inlined_call_operand.vmem [shape: f32[1,128], index: 10, kind: input, shape index: {}]
  %s11 = inlined_call_operand.vmem [shape: f32[1,128], index: 11, kind: input, shape index: {}]
  %s12 = inlined_call_operand.vmem [shape: f32[1,128], index: 12, kind: input, shape index: {}]
  %s13 = inlined_call_operand.vmem [shape: f32[2,16,128], index: 13, kind: output, shape index: {}]
  %s14 = sld [smem:[#allocation0]]
  $region85: #{vit3d_forward.5} parent=0
    _
  %s16 = ssub.s32 1, %s14
  %s17 = scalar_select 0, %s16, %s14
  loop: start=0, step=1, limit=4
  $region2: #{vit3d_forward.5} parent=0 // loop_pre_header
    _
  $region3: #{vit3d_forward.5} parent=0 // loop_header
    %s19 = sphi 0, %s23
    %p20 = scmp.ge.s32.totalorder %s19, 4
    %s29 = sphi 0, %s31
    %s32 = sphi 0, %s29
    %s33 = sphi 0, %s32
    %s49 = sphi 0, %s33
    %s53 = sphi 0, %s53
    %s55 = sphi 0, %s53
    %s56 = sphi 0, %s55
    %s70 = sphi 0, %s56
    %s74 = sphi 0, %s74
    %s76 = sphi 0, %s74
    %s77 = sphi 0, %s76
    %s91 = sphi 0, %s77
    %s95 = sphi 0, %s95
    %s97 = sphi 0, %s95
    %s98 = sphi 0, %s97
    %s112 = sphi 0, %s98
    %s116 = sphi 0, %s116
    %s118 = sphi 0, %s116
    %s119 = sphi 0, %s118
    %s133 = sphi 0, %s119
    %s137 = sphi 0, %s137
    %s139 = sphi 0, %s137
    %s140 = sphi 0, %s139
    %s154 = sphi 0, %s140
    %s158 = sphi 0, %s158
    %s160 = sphi 0, %s158
    %s161 = sphi 0, %s160
    %s175 = sphi 0, %s161
    %s179 = sphi 0, %s179
    %s181 = sphi 0, %s179
    %s182 = sphi 0, %s181
    %s196 = sphi 0, %s182
    %s200 = sphi 0, %s200
    %s202 = sphi 0, %s200
    %s203 = sphi 0, %s202
    %s217 = sphi 0, %s203
    %s221 = sphi 0, %s221
    %s223 = sphi 0, %s221
    %s224 = sphi 0, %s223
    %s238 = sphi 0, %s224
    %s242 = sphi 0, %s242
    %s244 = sphi 0, %s242
    %s245 = sphi 0, %s244
    %s259 = sphi 0, %s245
    %s263 = sphi 0, %s263
    %s265 = sphi 0, %s263
    %s266 = sphi 0, %s265
    %s280 = sphi 0, %s266
    %s284 = sphi 0, %s284
    %s286 = sphi 0, %s284
    %s287 = sphi 0, %s286
    %s301 = sphi 0, %s287
    %s307 = sphi 0, %s309
    %s310 = sphi 0, %s307
    %s311 = sphi 0, %s310
    %s327 = sphi 0, %s311
  $region4: #{vit3d_forward.5} parent=0 // loop_header_branch
    %22 = sbr.rel (%p20) target = $region8
  $region5: #{vit3d_forward.5} parent=0 // loop_body
    %s24 = ssub.s32 %s19, 1
    %s25 = ssub.s32 %s19, 2
    %s26 = sadd.s32 %s19, 1
    %s27 = ssub.s32 %s19, %s26
    %p28 = scmp.eq.s32.totalorder %s27, 0
    %s30 = sadd.s32 %s29, 1
    %s31 = scalar_select %p28, %s29, %s30
    %p34 = pneg %p28
    %p35 = scmp.eq.s32.totalorder %s19, 1
    %p36 = por %p34, %p35
    %p37 = scmp.ne.s32.totalorder %s29, %s32
    %p38 = scmp.eq.s32.totalorder %s19, 0
    %p39 = por %p37, %p38
    %p40 = scmp.ne.s32.totalorder %s29, %s32
    %p41 = scmp.eq.s32.totalorder %s24, 1
    %p42 = por %p40, %p41
    %p43 = scmp.ne.s32.totalorder %s32, %s33
    %p44 = scmp.eq.s32.totalorder %s24, 0
    %p45 = por %p43, %p44
    %p46 = scmp.ne.s32.totalorder %s32, %s33
    %p47 = scmp.eq.s32.totalorder %s25, 1
    %p48 = por %p46, %p47
    %p50 = scmp.ne.s32.totalorder %s33, %s49
    %p51 = scmp.eq.s32.totalorder %s25, 0
    %p52 = por %p50, %p51
    %s54 = sadd.s32 %s53, 1
    %p57 = scmp.eq.s32.totalorder %s19, 1
    %p58 = scmp.ne.s32.totalorder %s53, %s55
    %p59 = scmp.eq.s32.totalorder %s19, 0
    %p60 = por %p58, %p59
    %p61 = scmp.ne.s32.totalorder %s53, %s55
    %p62 = scmp.eq.s32.totalorder %s24, 1
    %p63 = por %p61, %p62
    %p64 = scmp.ne.s32.totalorder %s55, %s56
    %p65 = scmp.eq.s32.totalorder %s24, 0
    %p66 = por %p64, %p65
    %p67 = scmp.ne.s32.totalorder %s55, %s56
    %p68 = scmp.eq.s32.totalorder %s25, 1
    %p69 = por %p67, %p68
    %p71 = scmp.ne.s32.totalorder %s56, %s70
    %p72 = scmp.eq.s32.totalorder %s25, 0
    %p73 = por %p71, %p72
    %s75 = sadd.s32 %s74, 1
    %p78 = scmp.eq.s32.totalorder %s19, 1
    %p79 = scmp.ne.s32.totalorder %s74, %s76
    %p80 = scmp.eq.s32.totalorder %s19, 0
    %p81 = por %p79, %p80
    %p82 = scmp.ne.s32.totalorder %s74, %s76
    %p83 = scmp.eq.s32.totalorder %s24, 1
    %p84 = por %p82, %p83
    %p85 = scmp.ne.s32.totalorder %s76, %s77
    %p86 = scmp.eq.s32.totalorder %s24, 0
    %p87 = por %p85, %p86
    %p88 = scmp.ne.s32.totalorder %s76, %s77
    %p89 = scmp.eq.s32.totalorder %s25, 1
    %p90 = por %p88, %p89
    %p92 = scmp.ne.s32.totalorder %s77, %s91
    %p93 = scmp.eq.s32.totalorder %s25, 0
    %p94 = por %p92, %p93
    %s96 = sadd.s32 %s95, 1
    %p99 = scmp.eq.s32.totalorder %s19, 1
    %p100 = scmp.ne.s32.totalorder %s95, %s97
    %p101 = scmp.eq.s32.totalorder %s19, 0
    %p102 = por %p100, %p101
    %p103 = scmp.ne.s32.totalorder %s95, %s97
    %p104 = scmp.eq.s32.totalorder %s24, 1
    %p105 = por %p103, %p104
    %p106 = scmp.ne.s32.totalorder %s97, %s98
    %p107 = scmp.eq.s32.totalorder %s24, 0
    %p108 = por %p106, %p107
    %p109 = scmp.ne.s32.totalorder %s97, %s98
    %p110 = scmp.eq.s32.totalorder %s25, 1
    %p111 = por %p109, %p110
    %p113 = scmp.ne.s32.totalorder %s98, %s112
    %p114 = scmp.eq.s32.totalorder %s25, 0
    %p115 = por %p113, %p114
    %s117 = sadd.s32 %s116, 1
    %p120 = scmp.eq.s32.totalorder %s19, 1
    %p121 = scmp.ne.s32.totalorder %s116, %s118
    %p122 = scmp.eq.s32.totalorder %s19, 0
    %p123 = por %p121, %p122
    %p124 = scmp.ne.s32.totalorder %s116, %s118
    %p125 = scmp.eq.s32.totalorder %s24, 1
    %p126 = por %p124, %p125
    %p127 = scmp.ne.s32.totalorder %s118, %s119
    %p128 = scmp.eq.s32.totalorder %s24, 0
    %p129 = por %p127, %p128
    %p130 = scmp.ne.s32.totalorder %s118, %s119
    %p131 = scmp.eq.s32.totalorder %s25, 1
    %p132 = por %p130, %p131
    %p134 = scmp.ne.s32.totalorder %s119, %s133
    %p135 = scmp.eq.s32.totalorder %s25, 0
    %p136 = por %p134, %p135
    %s138 = sadd.s32 %s137, 1
    %p141 = scmp.eq.s32.totalorder %s19, 1
    %p142 = scmp.ne.s32.totalorder %s137, %s139
    %p143 = scmp.eq.s32.totalorder %s19, 0
    %p144 = por %p142, %p143
    %p145 = scmp.ne.s32.totalorder %s137, %s139
    %p146 = scmp.eq.s32.totalorder %s24, 1
    %p147 = por %p145, %p146
    %p148 = scmp.ne.s32.totalorder %s139, %s140
    %p149 = scmp.eq.s32.totalorder %s24, 0
    %p150 = por %p148, %p149
    %p151 = scmp.ne.s32.totalorder %s139, %s140
    %p152 = scmp.eq.s32.totalorder %s25, 1
    %p153 = por %p151, %p152
    %p155 = scmp.ne.s32.totalorder %s140, %s154
    %p156 = scmp.eq.s32.totalorder %s25, 0
    %p157 = por %p155, %p156
    %s159 = sadd.s32 %s158, 1
    %p162 = scmp.eq.s32.totalorder %s19, 1
    %p163 = scmp.ne.s32.totalorder %s158, %s160
    %p164 = scmp.eq.s32.totalorder %s19, 0
    %p165 = por %p163, %p164
    %p166 = scmp.ne.s32.totalorder %s158, %s160
    %p167 = scmp.eq.s32.totalorder %s24, 1
    %p168 = por %p166, %p167
    %p169 = scmp.ne.s32.totalorder %s160, %s161
    %p170 = scmp.eq.s32.totalorder %s24, 0
    %p171 = por %p169, %p170
    %p172 = scmp.ne.s32.totalorder %s160, %s161
    %p173 = scmp.eq.s32.totalorder %s25, 1
    %p174 = por %p172, %p173
    %p176 = scmp.ne.s32.totalorder %s161, %s175
    %p177 = scmp.eq.s32.totalorder %s25, 0
    %p178 = por %p176, %p177
    %s180 = sadd.s32 %s179, 1
    %p183 = scmp.eq.s32.totalorder %s19, 1
    %p184 = scmp.ne.s32.totalorder %s179, %s181
    %p185 = scmp.eq.s32.totalorder %s19, 0
    %p186 = por %p184, %p185
    %p187 = scmp.ne.s32.totalorder %s179, %s181
    %p188 = scmp.eq.s32.totalorder %s24, 1
    %p189 = por %p187, %p188
    %p190 = scmp.ne.s32.totalorder %s181, %s182
    %p191 = scmp.eq.s32.totalorder %s24, 0
    %p192 = por %p190, %p191
    %p193 = scmp.ne.s32.totalorder %s181, %s182
    %p194 = scmp.eq.s32.totalorder %s25, 1
    %p195 = por %p193, %p194
    %p197 = scmp.ne.s32.totalorder %s182, %s196
    %p198 = scmp.eq.s32.totalorder %s25, 0
    %p199 = por %p197, %p198
    %s201 = sadd.s32 %s200, 1
    %p204 = scmp.eq.s32.totalorder %s19, 1
    %p205 = scmp.ne.s32.totalorder %s200, %s202
    %p206 = scmp.eq.s32.totalorder %s19, 0
    %p207 = por %p205, %p206
    %p208 = scmp.ne.s32.totalorder %s200, %s202
    %p209 = scmp.eq.s32.totalorder %s24, 1
    %p210 = por %p208, %p209
    %p211 = scmp.ne.s32.totalorder %s202, %s203
    %p212 = scmp.eq.s32.totalorder %s24, 0
    %p213 = por %p211, %p212
    %p214 = scmp.ne.s32.totalorder %s202, %s203
    %p215 = scmp.eq.s32.totalorder %s25, 1
    %p216 = por %p214, %p215
    %p218 = scmp.ne.s32.totalorder %s203, %s217
    %p219 = scmp.eq.s32.totalorder %s25, 0
    %p220 = por %p218, %p219
    %s222 = sadd.s32 %s221, 1
    %p225 = scmp.eq.s32.totalorder %s19, 1
    %p226 = scmp.ne.s32.totalorder %s221, %s223
    %p227 = scmp.eq.s32.totalorder %s19, 0
    %p228 = por %p226, %p227
    %p229 = scmp.ne.s32.totalorder %s221, %s223
    %p230 = scmp.eq.s32.totalorder %s24, 1
    %p231 = por %p229, %p230
    %p232 = scmp.ne.s32.totalorder %s223, %s224
    %p233 = scmp.eq.s32.totalorder %s24, 0
    %p234 = por %p232, %p233
    %p235 = scmp.ne.s32.totalorder %s223, %s224
    %p236 = scmp.eq.s32.totalorder %s25, 1
    %p237 = por %p235, %p236
    %p239 = scmp.ne.s32.totalorder %s224, %s238
    %p240 = scmp.eq.s32.totalorder %s25, 0
    %p241 = por %p239, %p240
    %s243 = sadd.s32 %s242, 1
    %p246 = scmp.eq.s32.totalorder %s19, 1
    %p247 = scmp.ne.s32.totalorder %s242, %s244
    %p248 = scmp.eq.s32.totalorder %s19, 0
    %p249 = por %p247, %p248
    %p250 = scmp.ne.s32.totalorder %s242, %s244
    %p251 = scmp.eq.s32.totalorder %s24, 1
    %p252 = por %p250, %p251
    %p253 = scmp.ne.s32.totalorder %s244, %s245
    %p254 = scmp.eq.s32.totalorder %s24, 0
    %p255 = por %p253, %p254
    %p256 = scmp.ne.s32.totalorder %s244, %s245
    %p257 = scmp.eq.s32.totalorder %s25, 1
    %p258 = por %p256, %p257
    %p260 = scmp.ne.s32.totalorder %s245, %s259
    %p261 = scmp.eq.s32.totalorder %s25, 0
    %p262 = por %p260, %p261
    %s264 = sadd.s32 %s263, 1
    %p267 = scmp.eq.s32.totalorder %s19, 1
    %p268 = scmp.ne.s32.totalorder %s263, %s265
    %p269 = scmp.eq.s32.totalorder %s19, 0
    %p270 = por %p268, %p269
    %p271 = scmp.ne.s32.totalorder %s263, %s265
    %p272 = scmp.eq.s32.totalorder %s24, 1
    %p273 = por %p271, %p272
    %p274 = scmp.ne.s32.totalorder %s265, %s266
    %p275 = scmp.eq.s32.totalorder %s24, 0
    %p276 = por %p274, %p275
    %p277 = scmp.ne.s32.totalorder %s265, %s266
    %p278 = scmp.eq.s32.totalorder %s25, 1
    %p279 = por %p277, %p278
    %p281 = scmp.ne.s32.totalorder %s266, %s280
    %p282 = scmp.eq.s32.totalorder %s25, 0
    %p283 = por %p281, %p282
    %s285 = sadd.s32 %s284, 1
    %p288 = scmp.eq.s32.totalorder %s19, 1
    %p289 = scmp.ne.s32.totalorder %s284, %s286
    %p290 = scmp.eq.s32.totalorder %s19, 0
    %p291 = por %p289, %p290
    %p292 = scmp.ne.s32.totalorder %s284, %s286
    %p293 = scmp.eq.s32.totalorder %s24, 1
    %p294 = por %p292, %p293
    %p295 = scmp.ne.s32.totalorder %s286, %s287
    %p296 = scmp.eq.s32.totalorder %s24, 0
    %p297 = por %p295, %p296
    %p298 = scmp.ne.s32.totalorder %s286, %s287
    %p299 = scmp.eq.s32.totalorder %s25, 1
    %p300 = por %p298, %p299
    %p302 = scmp.ne.s32.totalorder %s287, %s301
    %p303 = scmp.eq.s32.totalorder %s25, 0
    %p304 = por %p302, %p303
    %s305 = ssub.s32 %s19, %s26
    %p306 = scmp.eq.s32.totalorder %s305, 0
    %s308 = sadd.s32 %s307, 1
    %s309 = scalar_select %p306, %s307, %s308
    %p312 = pneg %p306
    %p313 = scmp.eq.s32.totalorder %s19, 1
    %p314 = por %p312, %p313
    %p315 = scmp.ne.s32.totalorder %s307, %s310
    %p316 = scmp.eq.s32.totalorder %s19, 0
    %p317 = por %p315, %p316
    %p318 = scmp.ne.s32.totalorder %s307, %s310
    %p319 = scmp.eq.s32.totalorder %s24, 1
    %p320 = por %p318, %p319
    %p321 = scmp.ne.s32.totalorder %s310, %s311
    %p322 = scmp.eq.s32.totalorder %s24, 0
    %p323 = por %p321, %p322
    %p324 = scmp.ne.s32.totalorder %s310, %s311
    %p325 = scmp.eq.s32.totalorder %s25, 1
    %p326 = por %p324, %p325
    %p328 = scmp.ne.s32.totalorder %s311, %s327
    %p329 = scmp.eq.s32.totalorder %s25, 0
    %p330 = por %p328, %p329
    %p331 = scmp.le.s32.totalorder 1, %s19
    %p332 = scmp.lt.s32.totalorder %s19, 3
    %p333 = pnand %p331, %p332
    %p334 = pneg %p333
    // Predicated region
    $region9: #{vit3d_forward.5} parent=5 // pred_check
      _
    $region10: #{vit3d_forward.5} parent=5 // pred_check_branch
      %336 = sbr.rel (%p333) target = $region12
    $region11: #{vit3d_forward.5} parent=5 // pred_region
      %s337 = ssub.s32 %s19, 1
      // Predicated region
      $region13: #{vit3d_forward.5} parent=11 // pred_check
        %p338 = pneg %p66
      $region14: #{vit3d_forward.5} parent=11 // pred_check_branch
        %340 = sbr.rel (%p338) target = $region16
      $region15: #{vit3d_forward.5} parent=11 // pred_region
        _
      $region16: #{vit3d_forward.5} parent=11 // pred_fallthru
        _
      // Predicated region
      $region17: #{vit3d_forward.5} parent=11 // pred_check
        %p341 = pneg %p87
      $region18: #{vit3d_forward.5} parent=11 // pred_check_branch
        %343 = sbr.rel (%p341) target = $region20
      $region19: #{vit3d_forward.5} parent=11 // pred_region
        _
      $region20: #{vit3d_forward.5} parent=11 // pred_fallthru
        _
      // Predicated region
      $region21: #{vit3d_forward.5} parent=11 // pred_check
        %p344 = pneg %p108
      $region22: #{vit3d_forward.5} parent=11 // pred_check_branch
        %346 = sbr.rel (%p344) target = $region24
      $region23: #{vit3d_forward.5} parent=11 // pred_region
        _
      $region24: #{vit3d_forward.5} parent=11 // pred_fallthru
        _
      // Predicated region
      $region25: #{vit3d_forward.5} parent=11 // pred_check
        %p347 = pneg %p129
      $region26: #{vit3d_forward.5} parent=11 // pred_check_branch
        %349 = sbr.rel (%p347) target = $region28
      $region27: #{vit3d_forward.5} parent=11 // pred_region
        _
      $region28: #{vit3d_forward.5} parent=11 // pred_fallthru
        _
      // Predicated region
      $region29: #{vit3d_forward.5} parent=11 // pred_check
        %p350 = pneg %p150
      $region30: #{vit3d_forward.5} parent=11 // pred_check_branch
        %352 = sbr.rel (%p350) target = $region32
      $region31: #{vit3d_forward.5} parent=11 // pred_region
        _
      $region32: #{vit3d_forward.5} parent=11 // pred_fallthru
        _
      // Predicated region
      $region33: #{vit3d_forward.5} parent=11 // pred_check
        %p353 = pneg %p171
      $region34: #{vit3d_forward.5} parent=11 // pred_check_branch
        %355 = sbr.rel (%p353) target = $region36
      $region35: #{vit3d_forward.5} parent=11 // pred_region
        _
      $region36: #{vit3d_forward.5} parent=11 // pred_fallthru
        _
      // Predicated region
      $region37: #{vit3d_forward.5} parent=11 // pred_check
        %p356 = pneg %p192
      $region38: #{vit3d_forward.5} parent=11 // pred_check_branch
        %358 = sbr.rel (%p356) target = $region40
      $region39: #{vit3d_forward.5} parent=11 // pred_region
        _
      $region40: #{vit3d_forward.5} parent=11 // pred_fallthru
        _
      // Predicated region
      $region41: #{vit3d_forward.5} parent=11 // pred_check
        %p359 = pneg %p213
      $region42: #{vit3d_forward.5} parent=11 // pred_check_branch
        %361 = sbr.rel (%p359) target = $region44
      $region43: #{vit3d_forward.5} parent=11 // pred_region
        _
      $region44: #{vit3d_forward.5} parent=11 // pred_fallthru
        _
      // Predicated region
      $region45: #{vit3d_forward.5} parent=11 // pred_check
        %p362 = pneg %p234
      $region46: #{vit3d_forward.5} parent=11 // pred_check_branch
        %364 = sbr.rel (%p362) target = $region48
      $region47: #{vit3d_forward.5} parent=11 // pred_region
        _
      $region48: #{vit3d_forward.5} parent=11 // pred_fallthru
        _
      // Predicated region
      $region49: #{vit3d_forward.5} parent=11 // pred_check
        %p365 = pneg %p255
      $region50: #{vit3d_forward.5} parent=11 // pred_check_branch
        %367 = sbr.rel (%p365) target = $region52
      $region51: #{vit3d_forward.5} parent=11 // pred_region
        _
      $region52: #{vit3d_forward.5} parent=11 // pred_fallthru
        _
      // Predicated region
      $region53: #{vit3d_forward.5} parent=11 // pred_check
        %p368 = pneg %p276
      $region54: #{vit3d_forward.5} parent=11 // pred_check_branch
        %370 = sbr.rel (%p368) target = $region56
      $region55: #{vit3d_forward.5} parent=11 // pred_region
        _
      $region56: #{vit3d_forward.5} parent=11 // pred_fallthru
        _
      // Predicated region
      $region57: #{vit3d_forward.5} parent=11 // pred_check
        %p371 = pneg %p297
      $region58: #{vit3d_forward.5} parent=11 // pred_check_branch
        %373 = sbr.rel (%p371) target = $region60
      $region59: #{vit3d_forward.5} parent=11 // pred_region
        _
      $region60: #{vit3d_forward.5} parent=11 // pred_fallthru
        _
    $region12: #{vit3d_forward.5} parent=5 // pred_fallthru
      _
    %p374 = scmp.lt.s32.totalorder %s19, 2
    // Predicated region
    $region61: #{vit3d_forward.5} parent=5 // pred_check
      %p375 = pneg %p374
    $region62: #{vit3d_forward.5} parent=5 // pred_check_branch
      %377 = sbr.rel (%p375) target = $region64
    $region63: #{vit3d_forward.5} parent=5 // pred_region
      // Predicated region
      $region65: #{vit3d_forward.5} parent=63 // pred_check
        %p378 = pneg %p39
      $region66: #{vit3d_forward.5} parent=63 // pred_check_branch
        %380 = sbr.rel (%p378) target = $region68
      $region67: #{vit3d_forward.5} parent=63 // pred_region
        %p381 = scmp.lt.s32.totalorder %s19, 1
        %s382 = scalar_select %p381, %s19, 1
        %s383 = smul.addr %s382, 2
        %s384 = smul.addr %s383, 8
        %s385 = scalar_lea.vmem %s0, %s384
      $region68: #{vit3d_forward.5} parent=63 // pred_fallthru
        _
    $region64: #{vit3d_forward.5} parent=5 // pred_fallthru
      _
    %p386 = scmp.le.s32.totalorder 1, %s19
    %p387 = scmp.lt.s32.totalorder %s19, 3
    %p388 = pnand %p386, %p387
    %p389 = pneg %p388
    // Predicated region
    $region69: #{vit3d_forward.5} parent=5 // pred_check
      _
    $region70: #{vit3d_forward.5} parent=5 // pred_check_branch
      %391 = sbr.rel (%p388) target = $region72
    $region71: #{vit3d_forward.5} parent=5 // pred_region
      %s392 = ssub.s32 %s19, 1
      %p393 = scmp.lt.s32.totalorder %s24, 1
      %s394 = scalar_select %p393, %s24, 1
      %s395 = smul.addr %s394, 2
      %s396 = smul.addr %s395, 8
      %s397 = scalar_lea.vmem %s0, %s396
      %p398 = pneg %p45
      %p399 = pneg %p42
      %p400 = pneg %p66
      %p401 = pneg %p63
      %p402 = pneg %p87
      %p403 = pneg %p84
      %p404 = pneg %p108
      %p405 = pneg %p105
      %p406 = pneg %p129
      %p407 = pneg %p126
      %p408 = pneg %p150
      %p409 = pneg %p147
      %p410 = pneg %p171
      %p411 = pneg %p168
      %p412 = pneg %p192
      %p413 = pneg %p189
      %p414 = pneg %p213
      %p415 = pneg %p210
      %p416 = pneg %p234
      %p417 = pneg %p231
      %p418 = pneg %p255
      %p419 = pneg %p252
      %p420 = pneg %p276
      %p421 = pneg %p273
      %p422 = pneg %p297
      %p423 = pneg %p294
      %p424 = pneg %p323
      %p425 = pneg %p320
      %p426 = scmp.lt.s32.totalorder %s24, 1
      %s427 = scalar_select %p426, %s24, 1
      %s428 = smul.addr %s427, 2
      %s429 = smul.addr %s428, 8
      %s430 = scalar_lea.vmem %s13, %s429
      %p431 = scmp.lt.s32.totalorder %s24, 1
      %s432 = scalar_select %p431, %s24, 1
      %s433 = smul.addr %s432, 2
      %s434 = smul.addr %s433, 8
      %s435 = scalar_lea.vmem %s0, %s434
      %p436 = scmp.lt.s32.totalorder %s24, 1
      %s437 = scalar_select %p436, %s24, 1
      %s438 = smul.addr %s437, 2
      %s439 = smul.addr %s438, 8
      %s440 = scalar_lea.vmem %s13, %s439
      %v442 = vld [vmem:[%s435] sm:$0xff]
      %v443 = vld [vmem:[%s435 + $0x8] sm:$0xff]
      %v444 = vpack.c.bf16 %v443, %v442
      %v445 = vld [vmem:[%s1] sm:$0xff]
      %v446 = vld [vmem:[%s1 + $0x8] sm:$0xf]
      %v447 = vld [vmem:[%s1 + $0xc] sm:$0xff]
      %v448 = vld [vmem:[%s1 + $0x14] sm:$0xf]
      %v449 = vld [vmem:[%s1 + $0x18] sm:$0xff]
      %v450 = vld [vmem:[%s1 + $0x20] sm:$0xf]
      %v451 = vld [vmem:[%s1 + $0x24] sm:$0xff]
      %v452 = vld [vmem:[%s1 + $0x2c] sm:$0xf]
      %v453 = vld [vmem:[%s1 + $0x30] sm:$0xff]
      %v454 = vld [vmem:[%s1 + $0x38] sm:$0xf]
      %v455 = vld [vmem:[%s1 + $0x3c] sm:$0xff]
      %v456 = vld [vmem:[%s1 + $0x44] sm:$0xf]
      %v457 = vld [vmem:[%s1 + $0x48] sm:$0xff]
      %v458 = vld [vmem:[%s1 + $0x50] sm:$0xf]
      %v459 = vld [vmem:[%s1 + $0x54] sm:$0xff]
      %v460 = vld [vmem:[%s1 + $0x5c] sm:$0xf]
      %v461 = vld [vmem:[%s1 + $0x60] sm:$0xff]
      %v462 = vld [vmem:[%s1 + $0x68] sm:$0xf]
      %v463 = vld [vmem:[%s1 + $0x6c] sm:$0xff]
      %v464 = vld [vmem:[%s1 + $0x74] sm:$0xf]
      %v465 = vld [vmem:[%s1 + $0x78] sm:$0xff]
      %v466 = vld [vmem:[%s1 + $0x80] sm:$0xf]
      %v467 = vld [vmem:[%s1 + $0x84] sm:$0xff]
      %v468 = vld [vmem:[%s1 + $0x8c] sm:$0xf]
      %v469 = vld [vmem:[%s1 + $0x90] sm:$0xff]
      %v470 = vld [vmem:[%s1 + $0x98] sm:$0xf]
      %v471 = vld [vmem:[%s1 + $0x9c] sm:$0xff]
      %v472 = vld [vmem:[%s1 + $0xa4] sm:$0xf]
      %v473 = vld [vmem:[%s1 + $0xa8] sm:$0xff]
      %v474 = vld [vmem:[%s1 + $0xb0] sm:$0xf]
      %v475 = vld [vmem:[%s1 + $0xb4] sm:$0xff]
      %v476 = vld [vmem:[%s1 + $0xbc] sm:$0xf]
      %v477 = vld [vmem:[%s2] sm:$0x7]
      %v479 = vlaneseq
      %v480 = vshrl.u32 %v479, 7
      %v481 = vsub.s32 0, %v480
      %v482 = vrot.slane %v477, %v481
      %v483 = vlaneseq
      %v484 = vshrl.u32 %v483, 7
      %v485 = vsub.s32 1, %v484
      %v486 = vrot.slane %v477, %v485
      %v487 = vlaneseq
      %v488 = vshrl.u32 %v487, 7
      %v489 = vsub.s32 2, %v488
      %v490 = vrot.slane %v477, %v489
      %v526 = vunpack.c.l.b16 %v445
      %v527 = vunpack.c.h.b16 %v445
      %v528 = vunpack.c.l.b16 %v446
      %v529 = vunpack.c.l.b16 %v447
      %v530 = vunpack.c.h.b16 %v447
      %v531 = vunpack.c.l.b16 %v448
      %v532 = vunpack.c.l.b16 %v449
      %v533 = vunpack.c.h.b16 %v449
      %v534 = vunpack.c.l.b16 %v450
      %v535 = vunpack.c.l.b16 %v451
      %v536 = vunpack.c.h.b16 %v451
      %v537 = vunpack.c.l.b16 %v452
      %v538 = vunpack.c.l.b16 %v453
      %v539 = vunpack.c.h.b16 %v453
      %v540 = vunpack.c.l.b16 %v454
      %v541 = vunpack.c.l.b16 %v455
      %v542 = vunpack.c.h.b16 %v455
      %v543 = vunpack.c.l.b16 %v456
      %v544 = vunpack.c.l.b16 %v457
      %v545 = vunpack.c.h.b16 %v457
      %v546 = vunpack.c.l.b16 %v458
      %v547 = vunpack.c.l.b16 %v459
      %v548 = vunpack.c.h.b16 %v459
      %v549 = vunpack.c.l.b16 %v460
      %v550 = vunpack.c.l.b16 %v461
      %v551 = vunpack.c.h.b16 %v461
      %v552 = vunpack.c.l.b16 %v462
      %v553 = vunpack.c.l.b16 %v463
      %v554 = vunpack.c.h.b16 %v463
      %v555 = vunpack.c.l.b16 %v464
      %v556 = vunpack.c.l.b16 %v465
      %v557 = vunpack.c.h.b16 %v465
      %v558 = vunpack.c.l.b16 %v466
      %v559 = vunpack.c.l.b16 %v467
      %v560 = vunpack.c.h.b16 %v467
      %v561 = vunpack.c.l.b16 %v468
      %v562 = vunpack.c.l.b16 %v469
      %v563 = vunpack.c.h.b16 %v469
      %v564 = vunpack.c.l.b16 %v470
      %v565 = vunpack.c.l.b16 %v471
      %v566 = vunpack.c.h.b16 %v471
      %v567 = vunpack.c.l.b16 %v472
      %v568 = vunpack.c.l.b16 %v473
      %v569 = vunpack.c.h.b16 %v473
      %v570 = vunpack.c.l.b16 %v474
      %v571 = vunpack.c.l.b16 %v475
      %v572 = vunpack.c.h.b16 %v475
      %v573 = vunpack.c.l.b16 %v476
      %v574 = vpack.c.b16 %v529, %v526
      %v575 = vpack.c.b16 %v530, %v527
      %v576 = vpack.c.b16 %v531, %v528
      %v577 = vpack.c.b16 %v535, %v532
      %v578 = vpack.c.b16 %v536, %v533
      %v579 = vpack.c.b16 %v537, %v534
      %v580 = vpack.c.b16 %v541, %v538
      %v581 = vpack.c.b16 %v542, %v539
      %v582 = vpack.c.b16 %v543, %v540
      %v583 = vpack.c.b16 %v547, %v544
      %v584 = vpack.c.b16 %v548, %v545
      %v585 = vpack.c.b16 %v549, %v546
      %v586 = vpack.c.b16 %v553, %v550
      %v587 = vpack.c.b16 %v554, %v551
      %v588 = vpack.c.b16 %v555, %v552
      %v589 = vpack.c.b16 %v559, %v556
      %v590 = vpack.c.b16 %v560, %v557
      %v591 = vpack.c.b16 %v561, %v558
      %v592 = vpack.c.b16 %v565, %v562
      %v593 = vpack.c.b16 %v566, %v563
      %v594 = vpack.c.b16 %v567, %v564
      %v595 = vpack.c.b16 %v571, %v568
      %v596 = vpack.c.b16 %v572, %v569
      %v597 = vpack.c.b16 %v573, %v570
      %622 = vmatprep.subr.bf16.mxu0 %v575
      %623 = vmatpush1.bf16.msra.mxu0 %v574
      %624 = vmatprep.subr.bf16.mxu0 %v578
      %625 = vmatpush1.bf16.msra.mxu0 %v577
      %626 = vmatprep.subr.bf16.mxu0 %v581
      %627 = vmatpush1.bf16.msra.mxu0 %v580
      %628 = vmatprep.subr.bf16.mxu0 %v584
      %629 = vmatpush1.bf16.msra.mxu0 %v583
      %630 = vmatprep.subr.bf16.mxu0 %v587
      %631 = vmatpush1.bf16.msra.mxu0 %v586
      %632 = vmatprep.subr.bf16.mxu0 %v590
      %633 = vmatpush1.bf16.msra.mxu0 %v589
      %634 = vmatprep.subr.bf16.mxu0 %v593
      %635 = vmatpush1.bf16.msra.mxu0 %v592
      %636 = vmatprep.subr.bf16.mxu0 %v596
      %637 = vmatpush1.bf16.msra.mxu0 %v595
      %638 = vmatprep.subr.bf16.mxu0 0
      %639 = vmatpush1.bf16.msra.mxu0 0
      %640 = vmatprep.subr.bf16.mxu0 0
      %641 = vmatpush1.bf16.msra.mxu0 0
      %642 = vmatprep.subr.bf16.mxu0 0
      %643 = vmatpush1.bf16.msra.mxu0 0
      %644 = vmatprep.subr.bf16.mxu0 0
      %645 = vmatpush1.bf16.msra.mxu0 0
      %646 = vmatprep.subr.bf16.mxu0 0
      %647 = vmatpush1.bf16.msra.mxu0 0
      %648 = vmatprep.subr.bf16.mxu0 0
      %649 = vmatpush1.bf16.msra.mxu0 0
      %650 = vmatprep.subr.bf16.mxu0 0
      %651 = vmatpush1.bf16.msra.mxu0 0
      %652 = vmatprep.subr.bf16.mxu0 0
      %653 = vmatpush1.bf16.msra.mxu0 0
      %654 = vmatprep.mubr.bf16.mxu0 0
      %655 = vmatmul.mubr.bf16.gmra.mrb[0].mxu0 %v444
      %v656 = vpop.f32.mrb[0].mxu0
      %v657 = vadd.f32 %v482, %v656
      %v658 = vpop.f32.mrb[0].mxu0
      %v659 = vadd.f32 %v486, %v658
      %v660 = vpop.f32.mrb[0].mxu0
      %v661 = vadd.f32 %v482, %v660
      %v662 = vpop.f32.mrb[0].mxu0
      %v663 = vadd.f32 %v486, %v662
      %664 = vdwg.mxu0
      %665 = vmatprep.subr.bf16.mxu0 0
      %666 = vmatpush1.bf16.msra.mxu0 %v576
      %667 = vmatprep.subr.bf16.mxu0 0
      %668 = vmatpush1.bf16.msra.mxu0 %v579
      %669 = vmatprep.subr.bf16.mxu0 0
      %670 = vmatpush1.bf16.msra.mxu0 %v582
      %671 = vmatprep.subr.bf16.mxu0 0
      %672 = vmatpush1.bf16.msra.mxu0 %v585
      %673 = vmatprep.subr.bf16.mxu0 0
      %674 = vmatpush1.bf16.msra.mxu0 %v588
      %675 = vmatprep.subr.bf16.mxu0 0
      %676 = vmatpush1.bf16.msra.mxu0 %v591
      %677 = vmatprep.subr.bf16.mxu0 0
      %678 = vmatpush1.bf16.msra.mxu0 %v594
      %679 = vmatprep.subr.bf16.mxu0 0
      %680 = vmatpush1.bf16.msra.mxu0 %v597
      %681 = vmatprep.subr.bf16.mxu0 0
      %682 = vmatpush1.bf16.msra.mxu0 0
      %683 = vmatprep.subr.bf16.mxu0 0
      %684 = vmatpush1.bf16.msra.mxu0 0
      %685 = vmatprep.subr.bf16.mxu0 0
      %686 = vmatpush1.bf16.msra.mxu0 0
      %687 = vmatprep.subr.bf16.mxu0 0
      %688 = vmatpush1.bf16.msra.mxu0 0
      %689 = vmatprep.subr.bf16.mxu0 0
      %690 = vmatpush1.bf16.msra.mxu0 0
      %691 = vmatprep.subr.bf16.mxu0 0
      %692 = vmatpush1.bf16.msra.mxu0 0
      %693 = vmatprep.subr.bf16.mxu0 0
      %694 = vmatpush1.bf16.msra.mxu0 0
      %695 = vmatprep.subr.bf16.mxu0 0
      %696 = vmatpush1.bf16.msra.mxu0 0
      %697 = vmatprep.mubr.bf16.mxu0 0
      %698 = vmatmul.mubr.bf16.gmra.mrb[0].mxu0 %v444
      %v699 = vpop.f32.mrb[0].mxu0
      %v700 = vadd.f32 %v490, %v699
      %v701 = vpop.f32.mrb[0].mxu0
      %v702 = vpop.f32.mrb[0].mxu0
      %v703 = vadd.f32 %v490, %v702
      %v704 = vpop.f32.mrb[0].mxu0
      %705 = vdwg.mxu0
      %v706 = vlaneseq
      %v707 = vand.u32 %v706, 127
      %vm708 = vcmp.lt.s32.totalorder %v707, 9
      %v709 = vpack.c.bf16 %v661, %v657
      %v710 = vpack.c.bf16 %v663, %v659
      %vm711 = vcmask 261120
      %v713 = vsel %vm711, %v709, 0
      %v716 = vsel %vm711, %v710, 0
      %718 = vmatprep.subr.bf16.mxu0 0
      %719 = vmatpush1.bf16.xpose.msra.mxu0 %v716
      %720 = vmatprep.subr.bf16.mxu0 0
      %721 = vmatpush1.bf16.xpose.msra.mxu0 0
      %722 = vmatprep.subr.bf16.mxu0 0
      %723 = vmatpush1.bf16.xpose.msra.mxu0 0
      %724 = vmatprep.subr.bf16.mxu0 0
      %725 = vmatpush1.bf16.xpose.msra.mxu0 0
      %726 = vmatprep.subr.bf16.mxu0 0
      %727 = vmatpush1.bf16.xpose.msra.mxu0 0
      %728 = vmatprep.subr.bf16.mxu0 0
      %729 = vmatpush1.bf16.xpose.msra.mxu0 0
      %730 = vmatprep.subr.bf16.mxu0 0
      %731 = vmatpush1.bf16.xpose.msra.mxu0 0
      %732 = vmatprep.subr.bf16.mxu0 0
      %733 = vmatpush1.bf16.xpose.msra.mxu0 0
      %734 = vmatprep.subr.bf16.mxu0 0
      %735 = vmatpush1.bf16.xpose.msra.mxu0 0
      %736 = vmatprep.subr.bf16.mxu0 0
      %737 = vmatpush1.bf16.xpose.msra.mxu0 0
      %738 = vmatprep.subr.bf16.mxu0 0
      %739 = vmatpush1.bf16.xpose.msra.mxu0 0
      %740 = vmatprep.subr.bf16.mxu0 0
      %741 = vmatpush1.bf16.xpose.msra.mxu0 0
      %742 = vmatprep.subr.bf16.mxu0 0
      %743 = vmatpush1.bf16.xpose.msra.mxu0 0
      %744 = vmatprep.subr.bf16.mxu0 0
      %745 = vmatpush1.bf16.xpose.msra.mxu0 0
      %746 = vmatprep.subr.bf16.mxu0 0
      %747 = vmatpush1.bf16.xpose.msra.mxu0 0
      %748 = vmatprep.subr.bf16.mxu0 0
      %749 = vmatpush1.bf16.xpose.msra.mxu0 0
      %750 = vmatprep.mubr.bf16.mxu0 0
      %751 = vmatmul.mubr.bf16.gmra.mrb[0].mxu0 %v713
      %v752 = vpop.f32.mrb[0].mxu0
      %v753 = vadd.f32 0.0, %v752
      %v754 = vpop.f32.mrb[0].mxu0
      %v755 = vpop.f32.mrb[0].mxu0
      %v756 = vadd.f32 0.0, %v755
      %v757 = vpop.f32.mrb[0].mxu0
      %758 = vdwg.mxu0
      %v759 = vmul.f32 %v753, 0.17677669
      %v760 = vmul.f32 %v756, 0.17677669
      %v761 = vsel %vm708, %v759, -1e+30
      %v762 = vsel %vm708, %v760, -1e+30
      %vm763 = vcmask 130048
      %v764 = vsel %vm763, %v761, -inf
      %765 = vmax.xlane.f32.xlu0 %v764
      %v766 = vpop.xlane.xlu0 %765
      %v767 = vsel %vm763, %v762, -inf
      %768 = vmax.xlane.f32.xlu0 %v767
      %v769 = vpop.xlane.xlu0 %768
      %v770 = vsub.f32 %v761, %v766
      %v771 = vsub.f32 %v762, %v769
      %v772 = vmul.f32 %v770, 1.442695
      %v773 = vpow.pop %v772
      %v774 = vmul.f32 %v771, 1.442695
      %v775 = vpow.pop %v774
      %v776 = vsel %vm763, %v773, 0.0
      %777 = vadd.xlane.f32.xlu0 %v776
      %v778 = vpop.xlane.xlu0 %777
      %v779 = vsel %vm763, %v775, 0.0
      %780 = vadd.xlane.f32.xlu0 %v779
      %v781 = vpop.xlane.xlu0 %780
      %v782 = vrcp.pop %v778
      %v783 = vrcp.pop %v781
      %v784 = vmul.f32 %v773, %v782
      %v785 = vmul.f32 %v775, %v783
      %v786 = vpack.c.bf16 %v785, %v784
      %v787 = vpack.c.bf16 %v703, %v700
      %v789 = vsel %vm763, %v786, 0
      %791 = vmatprep.subr.bf16.mxu0 0
      %792 = vmatpush1.bf16.msra.mxu0 %v787
      %793 = vmatprep.subr.bf16.mxu0 0
      %794 = vmatpush1.bf16.msra.mxu0 0
      %795 = vmatprep.subr.bf16.mxu0 0
      %796 = vmatpush1.bf16.msra.mxu0 0
      %797 = vmatprep.subr.bf16.mxu0 0
      %798 = vmatpush1.bf16.msra.mxu0 0
      %799 = vmatprep.subr.bf16.mxu0 0
      %800 = vmatpush1.bf16.msra.mxu0 0
      %801 = vmatprep.subr.bf16.mxu0 0
      %802 = vmatpush1.bf16.msra.mxu0 0
      %803 = vmatprep.subr.bf16.mxu0 0
      %804 = vmatpush1.bf16.msra.mxu0 0
      %805 = vmatprep.subr.bf16.mxu0 0
      %806 = vmatpush1.bf16.msra.mxu0 0
      %807 = vmatprep.subr.bf16.mxu0 0
      %808 = vmatpush1.bf16.msra.mxu0 0
      %809 = vmatprep.subr.bf16.mxu0 0
      %810 = vmatpush1.bf16.msra.mxu0 0
      %811 = vmatprep.subr.bf16.mxu0 0
      %812 = vmatpush1.bf16.msra.mxu0 0
      %813 = vmatprep.subr.bf16.mxu0 0
      %814 = vmatpush1.bf16.msra.mxu0 0
      %815 = vmatprep.subr.bf16.mxu0 0
      %816 = vmatpush1.bf16.msra.mxu0 0
      %817 = vmatprep.subr.bf16.mxu0 0
      %818 = vmatpush1.bf16.msra.mxu0 0
      %819 = vmatprep.subr.bf16.mxu0 0
      %820 = vmatpush1.bf16.msra.mxu0 0
      %821 = vmatprep.subr.bf16.mxu0 0
      %822 = vmatpush1.bf16.msra.mxu0 0
      %823 = vmatprep.mubr.bf16.mxu0 0
      %824 = vmatmul.mubr.bf16.gmra.mrb[0].mxu0 %v789
      %v825 = vpop.f32.mrb[0].mxu0
      %v826 = vadd.f32 0.0, %v825
      %v827 = vpop.f32.mrb[0].mxu0
      %v828 = vpop.f32.mrb[0].mxu0
      %v829 = vadd.f32 0.0, %v828
      %v830 = vpop.f32.mrb[0].mxu0
      %831 = vdwg.mxu0
      %833 = vrot.lane.b32.xlu0 %v709, 96
      %v834 = vpop.permute.xlu0 %833
      %836 = vrot.lane.b32.xlu0 %v710, 96
      %v837 = vpop.permute.xlu0 %836
      %v839 = vsel %vm711, %v834, 0
      %v842 = vsel %vm711, %v837, 0
      %844 = vmatprep.subr.bf16.mxu0 0
      %845 = vmatpush1.bf16.xpose.msra.mxu0 %v842
      %846 = vmatprep.subr.bf16.mxu0 0
      %847 = vmatpush1.bf16.xpose.msra.mxu0 0
      %848 = vmatprep.subr.bf16.mxu0 0
      %849 = vmatpush1.bf16.xpose.msra.mxu0 0
      %850 = vmatprep.subr.bf16.mxu0 0
      %851 = vmatpush1.bf16.xpose.msra.mxu0 0
      %852 = vmatprep.subr.bf16.mxu0 0
      %853 = vmatpush1.bf16.xpose.msra.mxu0 0
      %854 = vmatprep.subr.bf16.mxu0 0
      %855 = vmatpush1.bf16.xpose.msra.mxu0 0
      %856 = vmatprep.subr.bf16.mxu0 0
      %857 = vmatpush1.bf16.xpose.msra.mxu0 0
      %858 = vmatprep.subr.bf16.mxu0 0
      %859 = vmatpush1.bf16.xpose.msra.mxu0 0
      %860 = vmatprep.subr.bf16.mxu0 0
      %861 = vmatpush1.bf16.xpose.msra.mxu0 0
      %862 = vmatprep.subr.bf16.mxu0 0
      %863 = vmatpush1.bf16.xpose.msra.mxu0 0
      %864 = vmatprep.subr.bf16.mxu0 0
      %865 = vmatpush1.bf16.xpose.msra.mxu0 0
      %866 = vmatprep.subr.bf16.mxu0 0
      %867 = vmatpush1.bf16.xpose.msra.mxu0 0
      %868 = vmatprep.subr.bf16.mxu0 0
      %869 = vmatpush1.bf16.xpose.msra.mxu0 0
      %870 = vmatprep.subr.bf16.mxu0 0
      %871 = vmatpush1.bf16.xpose.msra.mxu0 0
      %872 = vmatprep.subr.bf16.mxu0 0
      %873 = vmatpush1.bf16.xpose.msra.mxu0 0
      %874 = vmatprep.subr.bf16.mxu0 0
      %875 = vmatpush1.bf16.xpose.msra.mxu0 0
      %876 = vmatprep.mubr.bf16.mxu0 0
      %877 = vmatmul.mubr.bf16.gmra.mrb[0].mxu0 %v839
      %v878 = vpop.f32.mrb[0].mxu0
      %v879 = vadd.f32 0.0, %v878
      %v880 = vpop.f32.mrb[0].mxu0
      %v881 = vpop.f32.mrb[0].mxu0
      %v882 = vadd.f32 0.0, %v881
      %v883 = vpop.f32.mrb[0].mxu0
      %884 = vdwg.mxu0
      %v885 = vmul.f32 %v879, 0.17677669
      %v886 = vmul.f32 %v882, 0.17677669
      %v887 = vsel %vm708, %v885, -1e+30
      %v888 = vsel %vm708, %v886, -1e+30
      %v889 = vsel %vm763, %v887, -inf
      %890 = vmax.xlane.f32.xlu0 %v889
      %v891 = vpop.xlane.xlu0 %890
      %v892 = vsel %vm763, %v888, -inf
      %893 = vmax.xlane.f32.xlu0 %v892
      %v894 = vpop.xlane.xlu0 %893
      %v895 = vsub.f32 %v887, %v891
      %v896 = vsub.f32 %v888, %v894
      %v897 = vmul.f32 %v895, 1.442695
      %v898 = vpow.pop %v897
      %v899 = vmul.f32 %v896, 1.442695
      %v900 = vpow.pop %v899
      %v901 = vsel %vm763, %v898, 0.0
      %902 = vadd.xlane.f32.xlu0 %v901
      %v903 = vpop.xlane.xlu0 %902
      %v904 = vsel %vm763, %v900, 0.0
      %905 = vadd.xlane.f32.xlu0 %v904
      %v906 = vpop.xlane.xlu0 %905
      %v907 = vrcp.pop %v903
      %v908 = vrcp.pop %v906
      %v909 = vmul.f32 %v898, %v907
      %v910 = vmul.f32 %v900, %v908
      %v911 = vpack.c.bf16 %v910, %v909
      %913 = vrot.lane.b32.xlu0 %v787, 96
      %v914 = vpop.permute.xlu0 %913
      %v917 = vsel %vm763, %v911, 0
      %919 = vmatprep.subr.bf16.mxu0 0
      %920 = vmatpush1.bf16.msra.mxu0 %v914
      %921 = vmatprep.subr.bf16.mxu0 0
      %922 = vmatpush1.bf16.msra.mxu0 0
      %923 = vmatprep.subr.bf16.mxu0 0
      %924 = vmatpush1.bf16.msra.mxu0 0
      %925 = vmatprep.subr.bf16.mxu0 0
      %926 = vmatpush1.bf16.msra.mxu0 0
      %927 = vmatprep.subr.bf16.mxu0 0
      %928 = vmatpush1.bf16.msra.mxu0 0
      %929 = vmatprep.subr.bf16.mxu0 0
      %930 = vmatpush1.bf16.msra.mxu0 0
      %931 = vmatprep.subr.bf16.mxu0 0
      %932 = vmatpush1.bf16.msra.mxu0 0
      %933 = vmatprep.subr.bf16.mxu0 0
      %934 = vmatpush1.bf16.msra.mxu0 0
      %935 = vmatprep.subr.bf16.mxu0 0
      %936 = vmatpush1.bf16.msra.mxu0 0
      %937 = vmatprep.subr.bf16.mxu0 0
      %938 = vmatpush1.bf16.msra.mxu0 0
      %939 = vmatprep.subr.bf16.mxu0 0
      %940 = vmatpush1.bf16.msra.mxu0 0
      %941 = vmatprep.subr.bf16.mxu0 0
      %942 = vmatpush1.bf16.msra.mxu0 0
      %943 = vmatprep.subr.bf16.mxu0 0
      %944 = vmatpush1.bf16.msra.mxu0 0
      %945 = vmatprep.subr.bf16.mxu0 0
      %946 = vmatpush1.bf16.msra.mxu0 0
      %947 = vmatprep.subr.bf16.mxu0 0
      %948 = vmatpush1.bf16.msra.mxu0 0
      %949 = vmatprep.subr.bf16.mxu0 0
      %950 = vmatpush1.bf16.msra.mxu0 0
      %951 = vmatprep.mubr.bf16.mxu0 0
      %952 = vmatmul.mubr.bf16.gmra.mrb[0].mxu0 %v917
      %v953 = vpop.f32.mrb[0].mxu0
      %v954 = vadd.f32 0.0, %v953
      %v955 = vpop.f32.mrb[0].mxu0
      %v956 = vpop.f32.mrb[0].mxu0
      %v957 = vadd.f32 0.0, %v956
      %v958 = vpop.f32.mrb[0].mxu0
      %959 = vdwg.mxu0
      %960 = vrot.lane.b32.xlu0 %v709, 64
      %v961 = vpop.permute.xlu0 %960
      %962 = vrot.lane.b32.xlu0 %v710, 64
      %v963 = vpop.permute.xlu0 %962
      %v965 = vsel %vm711, %v961, 0
      %v968 = vsel %vm711, %v963, 0
      %970 = vmatprep.subr.bf16.mxu0 0
      %971 = vmatpush1.bf16.xpose.msra.mxu0 %v968
      %972 = vmatprep.subr.bf16.mxu0 0
      %973 = vmatpush1.bf16.xpose.msra.mxu0 0
      %974 = vmatprep.subr.bf16.mxu0 0
      %975 = vmatpush1.bf16.xpose.msra.mxu0 0
      %976 = vmatprep.subr.bf16.mxu0 0
      %977 = vmatpush1.bf16.xpose.msra.mxu0 0
      %978 = vmatprep.subr.bf16.mxu0 0
      %979 = vmatpush1.bf16.xpose.msra.mxu0 0
      %980 = vmatprep.subr.bf16.mxu0 0
      %981 = vmatpush1.bf16.xpose.msra.mxu0 0
      %982 = vmatprep.subr.bf16.mxu0 0
      %983 = vmatpush1.bf16.xpose.msra.mxu0 0
      %984 = vmatprep.subr.bf16.mxu0 0
      %985 = vmatpush1.bf16.xpose.msra.mxu0 0
      %986 = vmatprep.subr.bf16.mxu0 0
      %987 = vmatpush1.bf16.xpose.msra.mxu0 0
      %988 = vmatprep.subr.bf16.mxu0 0
      %989 = vmatpush1.bf16.xpose.msra.mxu0 0
      %990 = vmatprep.subr.bf16.mxu0 0
      %991 = vmatpush1.bf16.xpose.msra.mxu0 0
      %992 = vmatprep.subr.bf16.mxu0 0
      %993 = vmatpush1.bf16.xpose.msra.mxu0 0
      %994 = vmatprep.subr.bf16.mxu0 0
      %995 = vmatpush1.bf16.xpose.msra.mxu0 0
      %996 = vmatprep.subr.bf16.mxu0 0
      %997 = vmatpush1.bf16.xpose.msra.mxu0 0
      %998 = vmatprep.subr.bf16.mxu0 0
      %999 = vmatpush1.bf16.xpose.msra.mxu0 0
      %1000 = vmatprep.subr.bf16.mxu0 0
      %1001 = vmatpush1.bf16.xpose.msra.mxu0 0
      %1002 = vmatprep.mubr.bf16.mxu0 0
      %1003 = vmatmul.mubr.bf16.gmra.mrb[0].mxu0 %v965
      %v1004 = vpop.f32.mrb[0].mxu0
      %v1005 = vadd.f32 0.0, %v1004
      %v1006 = vpop.f32.mrb[0].mxu0
      %v1007 = vpop.f32.mrb[0].mxu0
      %v1008 = vadd.f32 0.0, %v1007
      %v1009 = vpop.f32.mrb[0].mxu0
      %1010 = vdwg.mxu0
      %v1011 = vmul.f32 %v1005, 0.17677669
      %v1012 = vmul.f32 %v1008, 0.17677669
      %v1013 = vsel %vm708, %v1011, -1e+30
      %v1014 = vsel %vm708, %v1012, -1e+30
      %v1015 = vsel %vm763, %v1013, -inf
      %1016 = vmax.xlane.f32.xlu0 %v1015
      %v1017 = vpop.xlane.xlu0 %1016
      %v1018 = vsel %vm763, %v1014, -inf
      %1019 = vmax.xlane.f32.xlu0 %v1018
      %v1020 = vpop.xlane.xlu0 %1019
      %v1021 = vsub.f32 %v1013, %v1017
      %v1022 = vsub.f32 %v1014, %v1020
      %v1023 = vmul.f32 %v1021, 1.442695
      %v1024 = vpow.pop %v1023
      %v1025 = vmul.f32 %v1022, 1.442695
      %v1026 = vpow.pop %v1025
      %v1027 = vsel %vm763, %v1024, 0.0
      %1028 = vadd.xlane.f32.xlu0 %v1027
      %v1029 = vpop.xlane.xlu0 %1028
      %v1030 = vsel %vm763, %v1026, 0.0
      %1031 = vadd.xlane.f32.xlu0 %v1030
      %v1032 = vpop.xlane.xlu0 %1031
      %v1033 = vrcp.pop %v1029
      %v1034 = vrcp.pop %v1032
      %v1035 = vmul.f32 %v1024, %v1033
      %v1036 = vmul.f32 %v1026, %v1034
      %v1037 = vpack.c.bf16 %v1036, %v1035
      %1038 = vrot.lane.b32.xlu0 %v787, 64
      %v1039 = vpop.permute.xlu0 %1038
      %v1042 = vsel %vm763, %v1037, 0
      %1044 = vmatprep.subr.bf16.mxu0 0
      %1045 = vmatpush1.bf16.msra.mxu0 %v1039
      %1046 = vmatprep.subr.bf16.mxu0 0
      %1047 = vmatpush1.bf16.msra.mxu0 0
      %1048 = vmatprep.subr.bf16.mxu0 0
      %1049 = vmatpush1.bf16.msra.mxu0 0
      %1050 = vmatprep.subr.bf16.mxu0 0
      %1051 = vmatpush1.bf16.msra.mxu0 0
      %1052 = vmatprep.subr.bf16.mxu0 0
      %1053 = vmatpush1.bf16.msra.mxu0 0
      %1054 = vmatprep.subr.bf16.mxu0 0
      %1055 = vmatpush1.bf16.msra.mxu0 0
      %1056 = vmatprep.subr.bf16.mxu0 0
      %1057 = vmatpush1.bf16.msra.mxu0 0
      %1058 = vmatprep.subr.bf16.mxu0 0
      %1059 = vmatpush1.bf16.msra.mxu0 0
      %1060 = vmatprep.subr.bf16.mxu0 0
      %1061 = vmatpush1.bf16.msra.mxu0 0
      %1062 = vmatprep.subr.bf16.mxu0 0
      %1063 = vmatpush1.bf16.msra.mxu0 0
      %1064 = vmatprep.subr.bf16.mxu0 0
      %1065 = vmatpush1.bf16.msra.mxu0 0
      %1066 = vmatprep.subr.bf16.mxu0 0
      %1067 = vmatpush1.bf16.msra.mxu0 0
      %1068 = vmatprep.subr.bf16.mxu0 0
      %1069 = vmatpush1.bf16.msra.mxu0 0
      %1070 = vmatprep.subr.bf16.mxu0 0
      %1071 = vmatpush1.bf16.msra.mxu0 0
      %1072 = vmatprep.subr.bf16.mxu0 0
      %1073 = vmatpush1.bf16.msra.mxu0 0
      %1074 = vmatprep.subr.bf16.mxu0 0
      %1075 = vmatpush1.bf16.msra.mxu0 0
      %1076 = vmatprep.mubr.bf16.mxu0 0
      %1077 = vmatmul.mubr.bf16.gmra.mrb[0].mxu0 %v1042
      %v1078 = vpop.f32.mrb[0].mxu0
      %v1079 = vadd.f32 0.0, %v1078
      %v1080 = vpop.f32.mrb[0].mxu0
      %v1081 = vpop.f32.mrb[0].mxu0
      %v1082 = vadd.f32 0.0, %v1081
      %v1083 = vpop.f32.mrb[0].mxu0
      %1084 = vdwg.mxu0
      %1085 = vrot.lane.b32.xlu0 %v709, 32
      %v1086 = vpop.permute.xlu0 %1085
      %1087 = vrot.lane.b32.xlu0 %v710, 32
      %v1088 = vpop.permute.xlu0 %1087
      %v1090 = vsel %vm711, %v1086, 0
      %v1093 = vsel %vm711, %v1088, 0
      %1095 = vmatprep.subr.bf16.mxu0 0
      %1096 = vmatpush1.bf16.xpose.msra.mxu0 %v1093
      %1097 = vmatprep.subr.bf16.mxu0 0
      %1098 = vmatpush1.bf16.xpose.msra.mxu0 0
      %1099 = vmatprep.subr.bf16.mxu0 0
      %1100 = vmatpush1.bf16.xpose.msra.mxu0 0
      %1101 = vmatprep.subr.bf16.mxu0 0
      %1102 = vmatpush1.bf16.xpose.msra.mxu0 0
      %1103 = vmatprep.subr.bf16.mxu0 0
      %1104 = vmatpush1.bf16.xpose.msra.mxu0 0
      %1105 = vmatprep.subr.bf16.mxu0 0
      %1106 = vmatpush1.bf16.xpose.msra.mxu0 0
      %1107 = vmatprep.subr.bf16.mxu0 0
      %1108 = vmatpush1.bf16.xpose.msra.mxu0 0
      %1109 = vmatprep.subr.bf16.mxu0 0
      %1110 = vmatpush1.bf16.xpose.msra.mxu0 0
      %1111 = vmatprep.subr.bf16.mxu0 0
      %1112 = vmatpush1.bf16.xpose.msra.mxu0 0
      %1113 = vmatprep.subr.bf16.mxu0 0
      %1114 = vmatpush1.bf16.xpose.msra.mxu0 0
      %1115 = vmatprep.subr.bf16.mxu0 0
      %1116 = vmatpush1.bf16.xpose.msra.mxu0 0
      %1117 = vmatprep.subr.bf16.mxu0 0
      %1118 = vmatpush1.bf16.xpose.msra.mxu0 0
      %1119 = vmatprep.subr.bf16.mxu0 0
      %1120 = vmatpush1.bf16.xpose.msra.mxu0 0
      %1121 = vmatprep.subr.bf16.mxu0 0
      %1122 = vmatpush1.bf16.xpose.msra.mxu0 0
      %1123 = vmatprep.subr.bf16.mxu0 0
      %1124 = vmatpush1.bf16.xpose.msra.mxu0 0
      %1125 = vmatprep.subr.bf16.mxu0 0
      %1126 = vmatpush1.bf16.xpose.msra.mxu0 0
      %1127 = vmatprep.mubr.bf16.mxu0 0
      %1128 = vmatmul.mubr.bf16.gmra.mrb[0].mxu0 %v1090
      %v1129 = vpop.f32.mrb[0].mxu0
      %v1130 = vadd.f32 0.0, %v1129
      %v1131 = vpop.f32.mrb[0].mxu0
      %v1132 = vpop.f32.mrb[0].mxu0
      %v1133 = vadd.f32 0.0, %v1132
      %v1134 = vpop.f32.mrb[0].mxu0
      %1135 = vdwg.mxu0
      %v1136 = vmul.f32 %v1130, 0.17677669
      %v1137 = vmul.f32 %v1133, 0.17677669
      %v1138 = vsel %vm708, %v1136, -1e+30
      %v1139 = vsel %vm708, %v1137, -1e+30
      %v1140 = vsel %vm763, %v1138, -inf
      %1141 = vmax.xlane.f32.xlu0 %v1140
      %v1142 = vpop.xlane.xlu0 %1141
      %v1143 = vsel %vm763, %v1139, -inf
      %1144 = vmax.xlane.f32.xlu0 %v1143
      %v1145 = vpop.xlane.xlu0 %1144
      %v1146 = vsub.f32 %v1138, %v1142
      %v1147 = vsub.f32 %v1139, %v1145
      %v1148 = vmul.f32 %v1146, 1.442695
      %v1149 = vpow.pop %v1148
      %v1150 = vmul.f32 %v1147, 1.442695
      %v1151 = vpow.pop %v1150
      %v1152 = vsel %vm763, %v1149, 0.0
      %1153 = vadd.xlane.f32.xlu0 %v1152
      %v1154 = vpop.xlane.xlu0 %1153
      %v1155 = vsel %vm763, %v1151, 0.0
      %1156 = vadd.xlane.f32.xlu0 %v1155
      %v1157 = vpop.xlane.xlu0 %1156
      %v1158 = vrcp.pop %v1154
      %v1159 = vrcp.pop %v1157
      %v1160 = vmul.f32 %v1149, %v1158
      %v1161 = vmul.f32 %v1151, %v1159
      %v1162 = vpack.c.bf16 %v1161, %v1160
      %1163 = vrot.lane.b32.xlu0 %v787, 32
      %v1164 = vpop.permute.xlu0 %1163
      %v1167 = vsel %vm763, %v1162, 0
      %1169 = vmatprep.subr.bf16.mxu0 0
      %1170 = vmatpush1.bf16.msra.mxu0 %v1164
      %1171 = vmatprep.subr.bf16.mxu0 0
      %1172 = vmatpush1.bf16.msra.mxu0 0
      %1173 = vmatprep.subr.bf16.mxu0 0
      %1174 = vmatpush1.bf16.msra.mxu0 0
      %1175 = vmatprep.subr.bf16.mxu0 0
      %1176 = vmatpush1.bf16.msra.mxu0 0
      %1177 = vmatprep.subr.bf16.mxu0 0
      %1178 = vmatpush1.bf16.msra.mxu0 0
      %1179 = vmatprep.subr.bf16.mxu0 0
      %1180 = vmatpush1.bf16.msra.mxu0 0
      %1181 = vmatprep.subr.bf16.mxu0 0
      %1182 = vmatpush1.bf16.msra.mxu0 0
      %1183 = vmatprep.subr.bf16.mxu0 0
      %1184 = vmatpush1.bf16.msra.mxu0 0
      %1185 = vmatprep.subr.bf16.mxu0 0
      %1186 = vmatpush1.bf16.msra.mxu0 0
      %1187 = vmatprep.subr.bf16.mxu0 0
      %1188 = vmatpush1.bf16.msra.mxu0 0
      %1189 = vmatprep.subr.bf16.mxu0 0
      %1190 = vmatpush1.bf16.msra.mxu0 0
      %1191 = vmatprep.subr.bf16.mxu0 0
      %1192 = vmatpush1.bf16.msra.mxu0 0
      %1193 = vmatprep.subr.bf16.mxu0 0
      %1194 = vmatpush1.bf16.msra.mxu0 0
      %1195 = vmatprep.subr.bf16.mxu0 0
      %1196 = vmatpush1.bf16.msra.mxu0 0
      %1197 = vmatprep.subr.bf16.mxu0 0
      %1198 = vmatpush1.bf16.msra.mxu0 0
      %1199 = vmatprep.subr.bf16.mxu0 0
      %1200 = vmatpush1.bf16.msra.mxu0 0
      %1201 = vmatprep.mubr.bf16.mxu0 0
      %1202 = vmatmul.mubr.bf16.gmra.mrb[0].mxu0 %v1167
      %v1203 = vpop.f32.mrb[0].mxu0
      %v1204 = vadd.f32 0.0, %v1203
      %v1205 = vpop.f32.mrb[0].mxu0
      %v1206 = vpop.f32.mrb[0].mxu0
      %v1207 = vadd.f32 0.0, %v1206
      %v1208 = vpop.f32.mrb[0].mxu0
      %1209 = vdwg.mxu0
      %1212 = vrot.lane.b32.xlu0 %v954, 32
      %v1213 = vpop.permute.xlu0 %1212
      %1214 = vrot.lane.b32.xlu0 %v957, 32
      %v1215 = vpop.permute.xlu0 %1214
      %1220 = vrot.lane.b32.xlu0 %v1079, 64
      %v1221 = vpop.permute.xlu0 %1220
      %1222 = vrot.lane.b32.xlu0 %v1082, 64
      %v1223 = vpop.permute.xlu0 %1222
      %1228 = vrot.lane.b32.xlu0 %v1204, 96
      %v1229 = vpop.permute.xlu0 %1228
      %1230 = vrot.lane.b32.xlu0 %v1207, 96
      %v1231 = vpop.permute.xlu0 %1230
      %v1234 = vsel %vm711, %v826, %v1213
      %v1235 = vsel %vm711, %v829, %v1215
      %vm1236 = vcmask 523264
      %v1237 = vsel %vm1236, %v1234, %v1221
      %v1238 = vsel %vm1236, %v1235, %v1223
      %vm1239 = vcmask 785408
      %v1240 = vsel %vm1239, %v1237, %v1229
      %v1241 = vsel %vm1239, %v1238, %v1231
      %v1242 = vpack.c.bf16 %v1241, %v1240
      %v1243 = vld [vmem:[%s3] sm:$0xf]
      %v1244 = vld [vmem:[%s3 + $0x4] sm:$0xf]
      %v1245 = vld [vmem:[%s3 + $0x8] sm:$0xf]
      %v1246 = vld [vmem:[%s3 + $0xc] sm:$0xf]
      %v1247 = vld [vmem:[%s3 + $0x10] sm:$0xf]
      %v1248 = vld [vmem:[%s3 + $0x14] sm:$0xf]
      %v1249 = vld [vmem:[%s3 + $0x18] sm:$0xf]
      %v1250 = vld [vmem:[%s3 + $0x1c] sm:$0xf]
      %v1251 = vld [vmem:[%s3 + $0x20] sm:$0xf]
      %v1252 = vld [vmem:[%s3 + $0x24] sm:$0xf]
      %v1253 = vld [vmem:[%s3 + $0x28] sm:$0xf]
      %v1254 = vld [vmem:[%s3 + $0x2c] sm:$0xf]
      %v1255 = vld [vmem:[%s3 + $0x30] sm:$0xf]
      %v1256 = vld [vmem:[%s3 + $0x34] sm:$0xf]
      %v1257 = vld [vmem:[%s3 + $0x38] sm:$0xf]
      %v1258 = vld [vmem:[%s3 + $0x3c] sm:$0xf]
      %v1259 = vld [vmem:[%s4] sm:$0x1]
      %v1261 = vlaneseq
      %v1262 = vshrl.u32 %v1261, 7
      %v1263 = vsub.s32 0, %v1262
      %v1264 = vrot.slane %v1259, %v1263
      %v1282 = vunpack.c.l.b16 %v1243
      %v1283 = vunpack.c.l.b16 %v1244
      %v1284 = vunpack.c.l.b16 %v1245
      %v1285 = vunpack.c.l.b16 %v1246
      %v1286 = vunpack.c.l.b16 %v1247
      %v1287 = vunpack.c.l.b16 %v1248
      %v1288 = vunpack.c.l.b16 %v1249
      %v1289 = vunpack.c.l.b16 %v1250
      %v1290 = vunpack.c.l.b16 %v1251
      %v1291 = vunpack.c.l.b16 %v1252
      %v1292 = vunpack.c.l.b16 %v1253
      %v1293 = vunpack.c.l.b16 %v1254
      %v1294 = vunpack.c.l.b16 %v1255
      %v1295 = vunpack.c.l.b16 %v1256
      %v1296 = vunpack.c.l.b16 %v1257
      %v1297 = vunpack.c.l.b16 %v1258
      %v1298 = vpack.c.b16 %v1283, %v1282
      %v1299 = vpack.c.b16 %v1285, %v1284
      %v1300 = vpack.c.b16 %v1287, %v1286
      %v1301 = vpack.c.b16 %v1289, %v1288
      %v1302 = vpack.c.b16 %v1291, %v1290
      %v1303 = vpack.c.b16 %v1293, %v1292
      %v1304 = vpack.c.b16 %v1295, %v1294
      %v1305 = vpack.c.b16 %v1297, %v1296
      %1314 = vmatprep.subr.bf16.mxu0 0
      %1315 = vmatpush1.bf16.msra.mxu0 %v1298
      %1316 = vmatprep.subr.bf16.mxu0 0
      %1317 = vmatpush1.bf16.msra.mxu0 %v1299
      %1318 = vmatprep.subr.bf16.mxu0 0
      %1319 = vmatpush1.bf16.msra.mxu0 %v1300
      %1320 = vmatprep.subr.bf16.mxu0 0
      %1321 = vmatpush1.bf16.msra.mxu0 %v1301
      %1322 = vmatprep.subr.bf16.mxu0 0
      %1323 = vmatpush1.bf16.msra.mxu0 %v1302
      %1324 = vmatprep.subr.bf16.mxu0 0
      %1325 = vmatpush1.bf16.msra.mxu0 %v1303
      %1326 = vmatprep.subr.bf16.mxu0 0
      %1327 = vmatpush1.bf16.msra.mxu0 %v1304
      %1328 = vmatprep.subr.bf16.mxu0 0
      %1329 = vmatpush1.bf16.msra.mxu0 %v1305
      %1330 = vmatprep.subr.bf16.mxu0 0
      %1331 = vmatpush1.bf16.msra.mxu0 0
      %1332 = vmatprep.subr.bf16.mxu0 0
      %1333 = vmatpush1.bf16.msra.mxu0 0
      %1334 = vmatprep.subr.bf16.mxu0 0
      %1335 = vmatpush1.bf16.msra.mxu0 0
      %1336 = vmatprep.subr.bf16.mxu0 0
      %1337 = vmatpush1.bf16.msra.mxu0 0
      %1338 = vmatprep.subr.bf16.mxu0 0
      %1339 = vmatpush1.bf16.msra.mxu0 0
      %1340 = vmatprep.subr.bf16.mxu0 0
      %1341 = vmatpush1.bf16.msra.mxu0 0
      %1342 = vmatprep.subr.bf16.mxu0 0
      %1343 = vmatpush1.bf16.msra.mxu0 0
      %1344 = vmatprep.subr.bf16.mxu0 0
      %1345 = vmatpush1.bf16.msra.mxu0 0
      %1346 = vmatprep.mubr.bf16.mxu0 0
      %1347 = vmatmul.mubr.bf16.gmra.mrb[0].mxu0 %v1242
      %v1348 = vpop.f32.mrb[0].mxu0
      %v1349 = vadd.f32 %v1264, %v1348
      %v1350 = vpop.f32.mrb[0].mxu0
      %v1351 = vpop.f32.mrb[0].mxu0
      %v1352 = vadd.f32 %v1264, %v1351
      %v1353 = vpop.f32.mrb[0].mxu0
      %1354 = vdwg.mxu0
      %v1355 = vadd.f32 %v442, %v1349
      %v1356 = vadd.f32 %v443, %v1352
      %v1357 = vld [vmem:[%s5] sm:$0x1]
      %v1358 = vld [vmem:[%s6] sm:$0x1]
      %1359 = vadd.xlane.f32.xlu0 %v1355
      %v1360 = vpop.xlane.xlu0 %1359
      %1361 = vadd.xlane.f32.xlu0 %v1356
      %v1362 = vpop.xlane.xlu0 %1361
      %v1363 = vrcp.pop 128.0
      %v1364 = vmul.f32 %v1360, %v1363
      %v1365 = vmul.f32 %v1362, %v1363
      %v1366 = vsub.f32 %v1355, %v1364
      %v1367 = vsub.f32 %v1356, %v1365
      %v1368 = vmul.f32 %v1366, %v1366
      %v1369 = vmul.f32 %v1367, %v1367
      %1370 = vadd.xlane.f32.xlu0 %v1368
      %v1371 = vpop.xlane.xlu0 %1370
      %1372 = vadd.xlane.f32.xlu0 %v1369
      %v1373 = vpop.xlane.xlu0 %1372
      %v1374 = vmul.f32 %v1371, %v1363
      %v1375 = vmul.f32 %v1373, %v1363
      %v1376 = vadd.f32 %v1374, 1e-05
      %v1377 = vadd.f32 %v1375, 1e-05
      %v1378 = vrsqrt.pop %v1376
      %v1379 = vrsqrt.pop %v1377
      %v1380 = vmul.f32 %v1366, %v1378
      %v1381 = vmul.f32 %v1367, %v1379
      %v1383 = vlaneseq
      %v1384 = vshrl.u32 %v1383, 7
      %v1385 = vsub.s32 0, %v1384
      %v1386 = vrot.slane %v1357, %v1385
      %v1388 = vmul.f32 %v1380, %v1386
      %v1389 = vmul.f32 %v1381, %v1386
      %v1391 = vlaneseq
      %v1392 = vshrl.u32 %v1391, 7
      %v1393 = vsub.s32 0, %v1392
      %v1394 = vrot.slane %v1358, %v1393
      %v1396 = vadd.f32 %v1388, %v1394
      %v1397 = vadd.f32 %v1389, %v1394
      %v1398 = vpack.c.bf16 %v1397, %v1396
      %v1399 = vld [vmem:[%s7] sm:$0xff]
      %v1400 = vld [vmem:[%s7 + $0x8] sm:$0xff]
      %v1401 = vld [vmem:[%s7 + $0x10] sm:$0xff]
      %v1402 = vld [vmem:[%s7 + $0x18] sm:$0xff]
      %v1403 = vld [vmem:[%s7 + $0x20] sm:$0xff]
      %v1404 = vld [vmem:[%s7 + $0x28] sm:$0xff]
      %v1405 = vld [vmem:[%s7 + $0x30] sm:$0xff]
      %v1406 = vld [vmem:[%s7 + $0x38] sm:$0xff]
      %v1407 = vld [vmem:[%s7 + $0x40] sm:$0xff]
      %v1408 = vld [vmem:[%s7 + $0x48] sm:$0xff]
      %v1409 = vld [vmem:[%s7 + $0x50] sm:$0xff]
      %v1410 = vld [vmem:[%s7 + $0x58] sm:$0xff]
      %v1411 = vld [vmem:[%s7 + $0x60] sm:$0xff]
      %v1412 = vld [vmem:[%s7 + $0x68] sm:$0xff]
      %v1413 = vld [vmem:[%s7 + $0x70] sm:$0xff]
      %v1414 = vld [vmem:[%s7 + $0x78] sm:$0xff]
      %v1415 = vld [vmem:[%s7 + $0x80] sm:$0xff]
      %v1416 = vld [vmem:[%s7 + $0x88] sm:$0xff]
      %v1417 = vld [vmem:[%s7 + $0x90] sm:$0xff]
      %v1418 = vld [vmem:[%s7 + $0x98] sm:$0xff]
      %v1419 = vld [vmem:[%s7 + $0xa0] sm:$0xff]
      %v1420 = vld [vmem:[%s7 + $0xa8] sm:$0xff]
      %v1421 = vld [vmem:[%s7 + $0xb0] sm:$0xff]
      %v1422 = vld [vmem:[%s7 + $0xb8] sm:$0xff]
      %v1423 = vld [vmem:[%s7 + $0xc0] sm:$0xff]
      %v1424 = vld [vmem:[%s7 + $0xc8] sm:$0xff]
      %v1425 = vld [vmem:[%s7 + $0xd0] sm:$0xff]
      %v1426 = vld [vmem:[%s7 + $0xd8] sm:$0xff]
      %v1427 = vld [vmem:[%s7 + $0xe0] sm:$0xff]
      %v1428 = vld [vmem:[%s7 + $0xe8] sm:$0xff]
      %v1429 = vld [vmem:[%s7 + $0xf0] sm:$0xff]
      %v1430 = vld [vmem:[%s7 + $0xf8] sm:$0xff]
      %v1431 = vld [vmem:[%s8] sm:$0xf]
      %v1433 = vlaneseq
      %v1434 = vshrl.u32 %v1433, 7
      %v1435 = vsub.s32 0, %v1434
      %v1436 = vrot.slane %v1431, %v1435
      %v1437 = vlaneseq
      %v1438 = vshrl.u32 %v1437, 7
      %v1439 = vsub.s32 1, %v1438
      %v1440 = vrot.slane %v1431, %v1439
      %v1441 = vlaneseq
      %v1442 = vshrl.u32 %v1441, 7
      %v1443 = vsub.s32 2, %v1442
      %v1444 = vrot.slane %v1431, %v1443
      %v1445 = vlaneseq
      %v1446 = vshrl.u32 %v1445, 7
      %v1447 = vsub.s32 3, %v1446
      %v1448 = vrot.slane %v1431, %v1447
      %v1485 = vunpack.c.l.b16 %v1399
      %v1486 = vunpack.c.h.b16 %v1399
      %v1487 = vunpack.c.l.b16 %v1400
      %v1488 = vunpack.c.h.b16 %v1400
      %v1489 = vunpack.c.l.b16 %v1401
      %v1490 = vunpack.c.h.b16 %v1401
      %v1491 = vunpack.c.l.b16 %v1402
      %v1492 = vunpack.c.h.b16 %v1402
      %v1493 = vunpack.c.l.b16 %v1403
      %v1494 = vunpack.c.h.b16 %v1403
      %v1495 = vunpack.c.l.b16 %v1404
      %v1496 = vunpack.c.h.b16 %v1404
      %v1497 = vunpack.c.l.b16 %v1405
      %v1498 = vunpack.c.h.b16 %v1405
      %v1499 = vunpack.c.l.b16 %v1406
      %v1500 = vunpack.c.h.b16 %v1406
      %v1501 = vunpack.c.l.b16 %v1407
      %v1502 = vunpack.c.h.b16 %v1407
      %v1503 = vunpack.c.l.b16 %v1408
      %v1504 = vunpack.c.h.b16 %v1408
      %v1505 = vunpack.c.l.b16 %v1409
      %v1506 = vunpack.c.h.b16 %v1409
      %v1507 = vunpack.c.l.b16 %v1410
      %v1508 = vunpack.c.h.b16 %v1410
      %v1509 = vunpack.c.l.b16 %v1411
      %v1510 = vunpack.c.h.b16 %v1411
      %v1511 = vunpack.c.l.b16 %v1412
      %v1512 = vunpack.c.h.b16 %v1412
      %v1513 = vunpack.c.l.b16 %v1413
      %v1514 = vunpack.c.h.b16 %v1413
      %v1515 = vunpack.c.l.b16 %v1414
      %v1516 = vunpack.c.h.b16 %v1414
      %v1517 = vunpack.c.l.b16 %v1415
      %v1518 = vunpack.c.h.b16 %v1415
      %v1519 = vunpack.c.l.b16 %v1416
      %v1520 = vunpack.c.h.b16 %v1416
      %v1521 = vunpack.c.l.b16 %v1417
      %v1522 = vunpack.c.h.b16 %v1417
      %v1523 = vunpack.c.l.b16 %v1418
      %v1524 = vunpack.c.h.b16 %v1418
      %v1525 = vunpack.c.l.b16 %v1419
      %v1526 = vunpack.c.h.b16 %v1419
      %v1527 = vunpack.c.l.b16 %v1420
      %v1528 = vunpack.c.h.b16 %v1420
      %v1529 = vunpack.c.l.b16 %v1421
      %v1530 = vunpack.c.h.b16 %v1421
      %v1531 = vunpack.c.l.b16 %v1422
      %v1532 = vunpack.c.h.b16 %v1422
      %v1533 = vunpack.c.l.b16 %v1423
      %v1534 = vunpack.c.h.b16 %v1423
      %v1535 = vunpack.c.l.b16 %v1424
      %v1536 = vunpack.c.h.b16 %v1424
      %v1537 = vunpack.c.l.b16 %v1425
      %v1538 = vunpack.c.h.b16 %v1425
      %v1539 = vunpack.c.l.b16 %v1426
      %v1540 = vunpack.c.h.b16 %v1426
      %v1541 = vunpack.c.l.b16 %v1427
      %v1542 = vunpack.c.h.b16 %v1427
      %v1543 = vunpack.c.l.b16 %v1428
      %v1544 = vunpack.c.h.b16 %v1428
      %v1545 = vunpack.c.l.b16 %v1429
      %v1546 = vunpack.c.h.b16 %v1429
      %v1547 = vunpack.c.l.b16 %v1430
      %v1548 = vunpack.c.h.b16 %v1430
      %v1549 = vpack.c.b16 %v1489, %v1485
      %v1550 = vpack.c.b16 %v1490, %v1486
      %v1551 = vpack.c.b16 %v1491, %v1487
      %v1552 = vpack.c.b16 %v1492, %v1488
      %v1553 = vpack.c.b16 %v1497, %v1493
      %v1554 = vpack.c.b16 %v1498, %v1494
      %v1555 = vpack.c.b16 %v1499, %v1495
      %v1556 = vpack.c.b16 %v1500, %v1496
      %v1557 = vpack.c.b16 %v1505, %v1501
      %v1558 = vpack.c.b16 %v1506, %v1502
      %v1559 = vpack.c.b16 %v1507, %v1503
      %v1560 = vpack.c.b16 %v1508, %v1504
      %v1561 = vpack.c.b16 %v1513, %v1509
      %v1562 = vpack.c.b16 %v1514, %v1510
      %v1563 = vpack.c.b16 %v1515, %v1511
      %v1564 = vpack.c.b16 %v1516, %v1512
      %v1565 = vpack.c.b16 %v1521, %v1517
      %v1566 = vpack.c.b16 %v1522, %v1518
      %v1567 = vpack.c.b16 %v1523, %v1519
      %v1568 = vpack.c.b16 %v1524, %v1520
      %v1569 = vpack.c.b16 %v1529, %v1525
      %v1570 = vpack.c.b16 %v1530, %v1526
      %v1571 = vpack.c.b16 %v1531, %v1527
      %v1572 = vpack.c.b16 %v1532, %v1528
      %v1573 = vpack.c.b16 %v1537, %v1533
      %v1574 = vpack.c.b16 %v1538, %v1534
      %v1575 = vpack.c.b16 %v1539, %v1535
      %v1576 = vpack.c.b16 %v1540, %v1536
      %v1577 = vpack.c.b16 %v1545, %v1541
      %v1578 = vpack.c.b16 %v1546, %v1542
      %v1579 = vpack.c.b16 %v1547, %v1543
      %v1580 = vpack.c.b16 %v1548, %v1544
      %1613 = vmatprep.subr.bf16.mxu0 %v1550
      %1614 = vmatpush1.bf16.msra.mxu0 %v1549
      %1615 = vmatprep.subr.bf16.mxu0 %v1554
      %1616 = vmatpush1.bf16.msra.mxu0 %v1553
      %1617 = vmatprep.subr.bf16.mxu0 %v1558
      %1618 = vmatpush1.bf16.msra.mxu0 %v1557
      %1619 = vmatprep.subr.bf16.mxu0 %v1562
      %1620 = vmatpush1.bf16.msra.mxu0 %v1561
      %1621 = vmatprep.subr.bf16.mxu0 %v1566
      %1622 = vmatpush1.bf16.msra.mxu0 %v1565
      %1623 = vmatprep.subr.bf16.mxu0 %v1570
      %1624 = vmatpush1.bf16.msra.mxu0 %v1569
      %1625 = vmatprep.subr.bf16.mxu0 %v1574
      %1626 = vmatpush1.bf16.msra.mxu0 %v1573
      %1627 = vmatprep.subr.bf16.mxu0 %v1578
      %1628 = vmatpush1.bf16.msra.mxu0 %v1577
      %1629 = vmatprep.subr.bf16.mxu0 0
      %1630 = vmatpush1.bf16.msra.mxu0 0
      %1631 = vmatprep.subr.bf16.mxu0 0
      %1632 = vmatpush1.bf16.msra.mxu0 0
      %1633 = vmatprep.subr.bf16.mxu0 0
      %1634 = vmatpush1.bf16.msra.mxu0 0
      %1635 = vmatprep.subr.bf16.mxu0 0
      %1636 = vmatpush1.bf16.msra.mxu0 0
      %1637 = vmatprep.subr.bf16.mxu0 0
      %1638 = vmatpush1.bf16.msra.mxu0 0
      %1639 = vmatprep.subr.bf16.mxu0 0
      %1640 = vmatpush1.bf16.msra.mxu0 0
      %1641 = vmatprep.subr.bf16.mxu0 0
      %1642 = vmatpush1.bf16.msra.mxu0 0
      %1643 = vmatprep.subr.bf16.mxu0 0
      %1644 = vmatpush1.bf16.msra.mxu0 0
      %1645 = vmatprep.mubr.bf16.mxu0 0
      %1646 = vmatmul.mubr.bf16.gmra.mrb[0].mxu0 %v1398
      %v1647 = vpop.f32.mrb[0].mxu0
      %v1648 = vadd.f32 %v1436, %v1647
      %v1649 = vpop.f32.mrb[0].mxu0
      %v1650 = vadd.f32 %v1440, %v1649
      %v1651 = vpop.f32.mrb[0].mxu0
      %v1652 = vadd.f32 %v1436, %v1651
      %v1653 = vpop.f32.mrb[0].mxu0
      %v1654 = vadd.f32 %v1440, %v1653
      %1655 = vdwg.mxu0
      %1656 = vmatprep.subr.bf16.mxu0 %v1552
      %1657 = vmatpush1.bf16.msra.mxu0 %v1551
      %1658 = vmatprep.subr.bf16.mxu0 %v1556
      %1659 = vmatpush1.bf16.msra.mxu0 %v1555
      %1660 = vmatprep.subr.bf16.mxu0 %v1560
      %1661 = vmatpush1.bf16.msra.mxu0 %v1559
      %1662 = vmatprep.subr.bf16.mxu0 %v1564
      %1663 = vmatpush1.bf16.msra.mxu0 %v1563
      %1664 = vmatprep.subr.bf16.mxu0 %v1568
      %1665 = vmatpush1.bf16.msra.mxu0 %v1567
      %1666 = vmatprep.subr.bf16.mxu0 %v1572
      %1667 = vmatpush1.bf16.msra.mxu0 %v1571
      %1668 = vmatprep.subr.bf16.mxu0 %v1576
      %1669 = vmatpush1.bf16.msra.mxu0 %v1575
      %1670 = vmatprep.subr.bf16.mxu0 %v1580
      %1671 = vmatpush1.bf16.msra.mxu0 %v1579
      %1672 = vmatprep.subr.bf16.mxu0 0
      %1673 = vmatpush1.bf16.msra.mxu0 0
      %1674 = vmatprep.subr.bf16.mxu0 0
      %1675 = vmatpush1.bf16.msra.mxu0 0
      %1676 = vmatprep.subr.bf16.mxu0 0
      %1677 = vmatpush1.bf16.msra.mxu0 0
      %1678 = vmatprep.subr.bf16.mxu0 0
      %1679 = vmatpush1.bf16.msra.mxu0 0
      %1680 = vmatprep.subr.bf16.mxu0 0
      %1681 = vmatpush1.bf16.msra.mxu0 0
      %1682 = vmatprep.subr.bf16.mxu0 0
      %1683 = vmatpush1.bf16.msra.mxu0 0
      %1684 = vmatprep.subr.bf16.mxu0 0
      %1685 = vmatpush1.bf16.msra.mxu0 0
      %1686 = vmatprep.subr.bf16.mxu0 0
      %1687 = vmatpush1.bf16.msra.mxu0 0
      %1688 = vmatprep.mubr.bf16.mxu0 0
      %1689 = vmatmul.mubr.bf16.gmra.mrb[0].mxu0 %v1398
      %v1690 = vpop.f32.mrb[0].mxu0
      %v1691 = vadd.f32 %v1444, %v1690
      %v1692 = vpop.f32.mrb[0].mxu0
      %v1693 = vadd.f32 %v1448, %v1692
      %v1694 = vpop.f32.mrb[0].mxu0
      %v1695 = vadd.f32 %v1444, %v1694
      %v1696 = vpop.f32.mrb[0].mxu0
      %v1697 = vadd.f32 %v1448, %v1696
      %1698 = vdwg.mxu0
      %v1699 = vmul.f32 %v1648, 0.5
      %v1700 = vmul.f32 %v1650, 0.5
      %v1701 = vmul.f32 %v1691, 0.5
      %v1702 = vmul.f32 %v1693, 0.5
      %v1703 = vmul.f32 %v1652, 0.5
      %v1704 = vmul.f32 %v1654, 0.5
      %v1705 = vmul.f32 %v1695, 0.5
      %v1706 = vmul.f32 %v1697, 0.5
      %v1707 = vmul.f32 %v1648, 0.044715
      %v1708 = vmul.f32 %v1650, 0.044715
      %v1709 = vmul.f32 %v1691, 0.044715
      %v1710 = vmul.f32 %v1693, 0.044715
      %v1711 = vmul.f32 %v1652, 0.044715
      %v1712 = vmul.f32 %v1654, 0.044715
      %v1713 = vmul.f32 %v1695, 0.044715
      %v1714 = vmul.f32 %v1697, 0.044715
      %v1715 = vmul.f32 %v1707, %v1648
      %v1716 = vmul.f32 %v1708, %v1650
      %v1717 = vmul.f32 %v1709, %v1691
      %v1718 = vmul.f32 %v1710, %v1693
      %v1719 = vmul.f32 %v1711, %v1652
      %v1720 = vmul.f32 %v1712, %v1654
      %v1721 = vmul.f32 %v1713, %v1695
      %v1722 = vmul.f32 %v1714, %v1697
      %v1723 = vmul.f32 %v1715, %v1648
      %v1724 = vmul.f32 %v1716, %v1650
      %v1725 = vmul.f32 %v1717, %v1691
      %v1726 = vmul.f32 %v1718, %v1693
      %v1727 = vmul.f32 %v1719, %v1652
      %v1728 = vmul.f32 %v1720, %v1654
      %v1729 = vmul.f32 %v1721, %v1695
      %v1730 = vmul.f32 %v1722, %v1697
      %v1731 = vadd.f32 %v1648, %v1723
      %v1732 = vadd.f32 %v1650, %v1724
      %v1733 = vadd.f32 %v1691, %v1725
      %v1734 = vadd.f32 %v1693, %v1726
      %v1735 = vadd.f32 %v1652, %v1727
      %v1736 = vadd.f32 %v1654, %v1728
      %v1737 = vadd.f32 %v1695, %v1729
      %v1738 = vadd.f32 %v1697, %v1730
      %v1739 = vmul.f32 %v1731, 0.7978846
      %v1740 = vmul.f32 %v1732, 0.7978846
      %v1741 = vmul.f32 %v1733, 0.7978846
      %v1742 = vmul.f32 %v1734, 0.7978846
      %v1743 = vmul.f32 %v1735, 0.7978846
      %v1744 = vmul.f32 %v1736, 0.7978846
      %v1745 = vmul.f32 %v1737, 0.7978846
      %v1746 = vmul.f32 %v1738, 0.7978846
      %v1747 = vtanh.pop %v1739
      %v1748 = vtanh.pop %v1740
      %v1749 = vtanh.pop %v1741
      %v1750 = vtanh.pop %v1742
      %v1751 = vtanh.pop %v1743
      %v1752 = vtanh.pop %v1744
      %v1753 = vtanh.pop %v1745
      %v1754 = vtanh.pop %v1746
      %v1755 = vadd.f32 %v1747, 1.0
      %v1756 = vadd.f32 %v1748, 1.0
      %v1757 = vadd.f32 %v1749, 1.0
      %v1758 = vadd.f32 %v1750, 1.0
      %v1759 = vadd.f32 %v1751, 1.0
      %v1760 = vadd.f32 %v1752, 1.0
      %v1761 = vadd.f32 %v1753, 1.0
      %v1762 = vadd.f32 %v1754, 1.0
      %v1763 = vmul.f32 %v1699, %v1755
      %v1764 = vmul.f32 %v1700, %v1756
      %v1765 = vmul.f32 %v1701, %v1757
      %v1766 = vmul.f32 %v1702, %v1758
      %v1767 = vmul.f32 %v1703, %v1759
      %v1768 = vmul.f32 %v1704, %v1760
      %v1769 = vmul.f32 %v1705, %v1761
      %v1770 = vmul.f32 %v1706, %v1762
      %v1771 = vpack.c.bf16 %v1767, %v1763
      %v1772 = vpack.c.bf16 %v1768, %v1764
      %v1773 = vpack.c.bf16 %v1769, %v1765
      %v1774 = vpack.c.bf16 %v1770, %v1766
      %v1775 = vld [vmem:[%s9] sm:$0xf]
      %v1776 = vld [vmem:[%s9 + $0x4] sm:$0xf]
      %v1777 = vld [vmem:[%s9 + $0x8] sm:$0xf]
      %v1778 = vld [vmem:[%s9 + $0xc] sm:$0xf]
      %v1779 = vld [vmem:[%s9 + $0x10] sm:$0xf]
      %v1780 = vld [vmem:[%s9 + $0x14] sm:$0xf]
      %v1781 = vld [vmem:[%s9 + $0x18] sm:$0xf]
      %v1782 = vld [vmem:[%s9 + $0x1c] sm:$0xf]
      %v1783 = vld [vmem:[%s9 + $0x20] sm:$0xf]
      %v1784 = vld [vmem:[%s9 + $0x24] sm:$0xf]
      %v1785 = vld [vmem:[%s9 + $0x28] sm:$0xf]
      %v1786 = vld [vmem:[%s9 + $0x2c] sm:$0xf]
      %v1787 = vld [vmem:[%s9 + $0x30] sm:$0xf]
      %v1788 = vld [vmem:[%s9 + $0x34] sm:$0xf]
      %v1789 = vld [vmem:[%s9 + $0x38] sm:$0xf]
      %v1790 = vld [vmem:[%s9 + $0x3c] sm:$0xf]
      %v1791 = vld [vmem:[%s9 + $0x40] sm:$0xf]
      %v1792 = vld [vmem:[%s9 + $0x44] sm:$0xf]
      %v1793 = vld [vmem:[%s9 + $0x48] sm:$0xf]
      %v1794 = vld [vmem:[%s9 + $0x4c] sm:$0xf]
      %v1795 = vld [vmem:[%s9 + $0x50] sm:$0xf]
      %v1796 = vld [vmem:[%s9 + $0x54] sm:$0xf]
      %v1797 = vld [vmem:[%s9 + $0x58] sm:$0xf]
      %v1798 = vld [vmem:[%s9 + $0x5c] sm:$0xf]
      %v1799 = vld [vmem:[%s9 + $0x60] sm:$0xf]
      %v1800 = vld [vmem:[%s9 + $0x64] sm:$0xf]
      %v1801 = vld [vmem:[%s9 + $0x68] sm:$0xf]
      %v1802 = vld [vmem:[%s9 + $0x6c] sm:$0xf]
      %v1803 = vld [vmem:[%s9 + $0x70] sm:$0xf]
      %v1804 = vld [vmem:[%s9 + $0x74] sm:$0xf]
      %v1805 = vld [vmem:[%s9 + $0x78] sm:$0xf]
      %v1806 = vld [vmem:[%s9 + $0x7c] sm:$0xf]
      %v1807 = vld [vmem:[%s9 + $0x80] sm:$0xf]
      %v1808 = vld [vmem:[%s9 + $0x84] sm:$0xf]
      %v1809 = vld [vmem:[%s9 + $0x88] sm:$0xf]
      %v1810 = vld [vmem:[%s9 + $0x8c] sm:$0xf]
      %v1811 = vld [vmem:[%s9 + $0x90] sm:$0xf]
      %v1812 = vld [vmem:[%s9 + $0x94] sm:$0xf]
      %v1813 = vld [vmem:[%s9 + $0x98] sm:$0xf]
      %v1814 = vld [vmem:[%s9 + $0x9c] sm:$0xf]
      %v1815 = vld [vmem:[%s9 + $0xa0] sm:$0xf]
      %v1816 = vld [vmem:[%s9 + $0xa4] sm:$0xf]
      %v1817 = vld [vmem:[%s9 + $0xa8] sm:$0xf]
      %v1818 = vld [vmem:[%s9 + $0xac] sm:$0xf]
      %v1819 = vld [vmem:[%s9 + $0xb0] sm:$0xf]
      %v1820 = vld [vmem:[%s9 + $0xb4] sm:$0xf]
      %v1821 = vld [vmem:[%s9 + $0xb8] sm:$0xf]
      %v1822 = vld [vmem:[%s9 + $0xbc] sm:$0xf]
      %v1823 = vld [vmem:[%s9 + $0xc0] sm:$0xf]
      %v1824 = vld [vmem:[%s9 + $0xc4] sm:$0xf]
      %v1825 = vld [vmem:[%s9 + $0xc8] sm:$0xf]
      %v1826 = vld [vmem:[%s9 + $0xcc] sm:$0xf]
      %v1827 = vld [vmem:[%s9 + $0xd0] sm:$0xf]
      %v1828 = vld [vmem:[%s9 + $0xd4] sm:$0xf]
      %v1829 = vld [vmem:[%s9 + $0xd8] sm:$0xf]
      %v1830 = vld [vmem:[%s9 + $0xdc] sm:$0xf]
      %v1831 = vld [vmem:[%s9 + $0xe0] sm:$0xf]
      %v1832 = vld [vmem:[%s9 + $0xe4] sm:$0xf]
      %v1833 = vld [vmem:[%s9 + $0xe8] sm:$0xf]
      %v1834 = vld [vmem:[%s9 + $0xec] sm:$0xf]
      %v1835 = vld [vmem:[%s9 + $0xf0] sm:$0xf]
      %v1836 = vld [vmem:[%s9 + $0xf4] sm:$0xf]
      %v1837 = vld [vmem:[%s9 + $0xf8] sm:$0xf]
      %v1838 = vld [vmem:[%s9 + $0xfc] sm:$0xf]
      %v1839 = vld [vmem:[%s10] sm:$0x1]
      %v1841 = vlaneseq
      %v1842 = vshrl.u32 %v1841, 7
      %v1843 = vsub.s32 0, %v1842
      %v1844 = vrot.slane %v1839, %v1843
      %v1910 = vunpack.c.l.b16 %v1775
      %v1911 = vunpack.c.l.b16 %v1776
      %v1912 = vunpack.c.l.b16 %v1777
      %v1913 = vunpack.c.l.b16 %v1778
      %v1914 = vunpack.c.l.b16 %v1779
      %v1915 = vunpack.c.l.b16 %v1780
      %v1916 = vunpack.c.l.b16 %v1781
      %v1917 = vunpack.c.l.b16 %v1782
      %v1918 = vunpack.c.l.b16 %v1783
      %v1919 = vunpack.c.l.b16 %v1784
      %v1920 = vunpack.c.l.b16 %v1785
      %v1921 = vunpack.c.l.b16 %v1786
      %v1922 = vunpack.c.l.b16 %v1787
      %v1923 = vunpack.c.l.b16 %v1788
      %v1924 = vunpack.c.l.b16 %v1789
      %v1925 = vunpack.c.l.b16 %v1790
      %v1926 = vunpack.c.l.b16 %v1791
      %v1927 = vunpack.c.l.b16 %v1792
      %v1928 = vunpack.c.l.b16 %v1793
      %v1929 = vunpack.c.l.b16 %v1794
      %v1930 = vunpack.c.l.b16 %v1795
      %v1931 = vunpack.c.l.b16 %v1796
      %v1932 = vunpack.c.l.b16 %v1797
      %v1933 = vunpack.c.l.b16 %v1798
      %v1934 = vunpack.c.l.b16 %v1799
      %v1935 = vunpack.c.l.b16 %v1800
      %v1936 = vunpack.c.l.b16 %v1801
      %v1937 = vunpack.c.l.b16 %v1802
      %v1938 = vunpack.c.l.b16 %v1803
      %v1939 = vunpack.c.l.b16 %v1804
      %v1940 = vunpack.c.l.b16 %v1805
      %v1941 = vunpack.c.l.b16 %v1806
      %v1942 = vunpack.c.l.b16 %v1807
      %v1943 = vunpack.c.l.b16 %v1808
      %v1944 = vunpack.c.l.b16 %v1809
      %v1945 = vunpack.c.l.b16 %v1810
      %v1946 = vunpack.c.l.b16 %v1811
      %v1947 = vunpack.c.l.b16 %v1812
      %v1948 = vunpack.c.l.b16 %v1813
      %v1949 = vunpack.c.l.b16 %v1814
      %v1950 = vunpack.c.l.b16 %v1815
      %v1951 = vunpack.c.l.b16 %v1816
      %v1952 = vunpack.c.l.b16 %v1817
      %v1953 = vunpack.c.l.b16 %v1818
      %v1954 = vunpack.c.l.b16 %v1819
      %v1955 = vunpack.c.l.b16 %v1820
      %v1956 = vunpack.c.l.b16 %v1821
      %v1957 = vunpack.c.l.b16 %v1822
      %v1958 = vunpack.c.l.b16 %v1823
      %v1959 = vunpack.c.l.b16 %v1824
      %v1960 = vunpack.c.l.b16 %v1825
      %v1961 = vunpack.c.l.b16 %v1826
      %v1962 = vunpack.c.l.b16 %v1827
      %v1963 = vunpack.c.l.b16 %v1828
      %v1964 = vunpack.c.l.b16 %v1829
      %v1965 = vunpack.c.l.b16 %v1830
      %v1966 = vunpack.c.l.b16 %v1831
      %v1967 = vunpack.c.l.b16 %v1832
      %v1968 = vunpack.c.l.b16 %v1833
      %v1969 = vunpack.c.l.b16 %v1834
      %v1970 = vunpack.c.l.b16 %v1835
      %v1971 = vunpack.c.l.b16 %v1836
      %v1972 = vunpack.c.l.b16 %v1837
      %v1973 = vunpack.c.l.b16 %v1838
      %v1974 = vpack.c.b16 %v1911, %v1910
      %v1975 = vpack.c.b16 %v1913, %v1912
      %v1976 = vpack.c.b16 %v1915, %v1914
      %v1977 = vpack.c.b16 %v1917, %v1916
      %v1978 = vpack.c.b16 %v1919, %v1918
      %v1979 = vpack.c.b16 %v1921, %v1920
      %v1980 = vpack.c.b16 %v1923, %v1922
      %v1981 = vpack.c.b16 %v1925, %v1924
      %v1982 = vpack.c.b16 %v1927, %v1926
      %v1983 = vpack.c.b16 %v1929, %v1928
      %v1984 = vpack.c.b16 %v1931, %v1930
      %v1985 = vpack.c.b16 %v1933, %v1932
      %v1986 = vpack.c.b16 %v1935, %v1934
      %v1987 = vpack.c.b16 %v1937, %v1936
      %v1988 = vpack.c.b16 %v1939, %v1938
      %v1989 = vpack.c.b16 %v1941, %v1940
      %v1990 = vpack.c.b16 %v1943, %v1942
      %v1991 = vpack.c.b16 %v1945, %v1944
      %v1992 = vpack.c.b16 %v1947, %v1946
      %v1993 = vpack.c.b16 %v1949, %v1948
      %v1994 = vpack.c.b16 %v1951, %v1950
      %v1995 = vpack.c.b16 %v1953, %v1952
      %v1996 = vpack.c.b16 %v1955, %v1954
      %v1997 = vpack.c.b16 %v1957, %v1956
      %v1998 = vpack.c.b16 %v1959, %v1958
      %v1999 = vpack.c.b16 %v1961, %v1960
      %v2000 = vpack.c.b16 %v1963, %v1962
      %v2001 = vpack.c.b16 %v1965, %v1964
      %v2002 = vpack.c.b16 %v1967, %v1966
      %v2003 = vpack.c.b16 %v1969, %v1968
      %v2004 = vpack.c.b16 %v1971, %v1970
      %v2005 = vpack.c.b16 %v1973, %v1972
      %2038 = vmatprep.subr.bf16.mxu0 0
      %2039 = vmatpush1.bf16.msra.mxu0 %v1974
      %2040 = vmatprep.subr.bf16.mxu0 0
      %2041 = vmatpush1.bf16.msra.mxu0 %v1975
      %2042 = vmatprep.subr.bf16.mxu0 0
      %2043 = vmatpush1.bf16.msra.mxu0 %v1976
      %2044 = vmatprep.subr.bf16.mxu0 0
      %2045 = vmatpush1.bf16.msra.mxu0 %v1977
      %2046 = vmatprep.subr.bf16.mxu0 0
      %2047 = vmatpush1.bf16.msra.mxu0 %v1978
      %2048 = vmatprep.subr.bf16.mxu0 0
      %2049 = vmatpush1.bf16.msra.mxu0 %v1979
      %2050 = vmatprep.subr.bf16.mxu0 0
      %2051 = vmatpush1.bf16.msra.mxu0 %v1980
      %2052 = vmatprep.subr.bf16.mxu0 0
      %2053 = vmatpush1.bf16.msra.mxu0 %v1981
      %2054 = vmatprep.subr.bf16.mxu0 0
      %2055 = vmatpush1.bf16.msra.mxu0 %v1982
      %2056 = vmatprep.subr.bf16.mxu0 0
      %2057 = vmatpush1.bf16.msra.mxu0 %v1983
      %2058 = vmatprep.subr.bf16.mxu0 0
      %2059 = vmatpush1.bf16.msra.mxu0 %v1984
      %2060 = vmatprep.subr.bf16.mxu0 0
      %2061 = vmatpush1.bf16.msra.mxu0 %v1985
      %2062 = vmatprep.subr.bf16.mxu0 0
      %2063 = vmatpush1.bf16.msra.mxu0 %v1986
      %2064 = vmatprep.subr.bf16.mxu0 0
      %2065 = vmatpush1.bf16.msra.mxu0 %v1987
      %2066 = vmatprep.subr.bf16.mxu0 0
      %2067 = vmatpush1.bf16.msra.mxu0 %v1988
      %2068 = vmatprep.subr.bf16.mxu0 0
      %2069 = vmatpush1.bf16.msra.mxu0 %v1989
      %2070 = vmatprep.mubr.bf16.mxu0 %v1772
      %2071 = vmatmul.mubr.bf16.gmra.mrb[0].mxu0 %v1771
      %v2072 = vpop.f32.mrb[0].mxu0
      %v2073 = vadd.f32 %v1844, %v2072
      %v2074 = vpop.f32.mrb[0].mxu0
      %v2075 = vpop.f32.mrb[0].mxu0
      %v2076 = vadd.f32 %v1844, %v2075
      %v2077 = vpop.f32.mrb[0].mxu0
      %2078 = vdwg.mxu0
      %2079 = vmatprep.subr.bf16.mxu0 0
      %2080 = vmatpush1.bf16.msra.mxu0 %v1990
      %2081 = vmatprep.subr.bf16.mxu0 0
      %2082 = vmatpush1.bf16.msra.mxu0 %v1991
      %2083 = vmatprep.subr.bf16.mxu0 0
      %2084 = vmatpush1.bf16.msra.mxu0 %v1992
      %2085 = vmatprep.subr.bf16.mxu0 0
      %2086 = vmatpush1.bf16.msra.mxu0 %v1993
      %2087 = vmatprep.subr.bf16.mxu0 0
      %2088 = vmatpush1.bf16.msra.mxu0 %v1994
      %2089 = vmatprep.subr.bf16.mxu0 0
      %2090 = vmatpush1.bf16.msra.mxu0 %v1995
      %2091 = vmatprep.subr.bf16.mxu0 0
      %2092 = vmatpush1.bf16.msra.mxu0 %v1996
      %2093 = vmatprep.subr.bf16.mxu0 0
      %2094 = vmatpush1.bf16.msra.mxu0 %v1997
      %2095 = vmatprep.subr.bf16.mxu0 0
      %2096 = vmatpush1.bf16.msra.mxu0 %v1998
      %2097 = vmatprep.subr.bf16.mxu0 0
      %2098 = vmatpush1.bf16.msra.mxu0 %v1999
      %2099 = vmatprep.subr.bf16.mxu0 0
      %2100 = vmatpush1.bf16.msra.mxu0 %v2000
      %2101 = vmatprep.subr.bf16.mxu0 0
      %2102 = vmatpush1.bf16.msra.mxu0 %v2001
      %2103 = vmatprep.subr.bf16.mxu0 0
      %2104 = vmatpush1.bf16.msra.mxu0 %v2002
      %2105 = vmatprep.subr.bf16.mxu0 0
      %2106 = vmatpush1.bf16.msra.mxu0 %v2003
      %2107 = vmatprep.subr.bf16.mxu0 0
      %2108 = vmatpush1.bf16.msra.mxu0 %v2004
      %2109 = vmatprep.subr.bf16.mxu0 0
      %2110 = vmatpush1.bf16.msra.mxu0 %v2005
      %2111 = vmatprep.mubr.bf16.mxu0 %v1774
      %2112 = vmatmul.mubr.bf16.gmra.mrb[0].mxu0 %v1773
      %v2113 = vpop.f32.mrb[0].mxu0
      %v2114 = vadd.f32 %v2073, %v2113
      %v2115 = vpop.f32.mrb[0].mxu0
      %v2116 = vpop.f32.mrb[0].mxu0
      %v2117 = vadd.f32 %v2076, %v2116
      %v2118 = vpop.f32.mrb[0].mxu0
      %2119 = vdwg.mxu0
      %v2120 = vadd.f32 %v1396, %v2114
      %v2121 = vadd.f32 %v1397, %v2117
      %v2122 = vld [vmem:[%s11] sm:$0x1]
      %v2123 = vld [vmem:[%s12] sm:$0x1]
      %2124 = vadd.xlane.f32.xlu0 %v2120
      %v2125 = vpop.xlane.xlu0 %2124
      %2126 = vadd.xlane.f32.xlu0 %v2121
      %v2127 = vpop.xlane.xlu0 %2126
      %v2128 = vmul.f32 %v2125, %v1363
      %v2129 = vmul.f32 %v2127, %v1363
      %v2130 = vsub.f32 %v2120, %v2128
      %v2131 = vsub.f32 %v2121, %v2129
      %v2132 = vmul.f32 %v2130, %v2130
      %v2133 = vmul.f32 %v2131, %v2131
      %2134 = vadd.xlane.f32.xlu0 %v2132
      %v2135 = vpop.xlane.xlu0 %2134
      %2136 = vadd.xlane.f32.xlu0 %v2133
      %v2137 = vpop.xlane.xlu0 %2136
      %v2138 = vmul.f32 %v2135, %v1363
      %v2139 = vmul.f32 %v2137, %v1363
      %v2140 = vadd.f32 %v2138, 1e-05
      %v2141 = vadd.f32 %v2139, 1e-05
      %v2142 = vrsqrt.pop %v2140
      %v2143 = vrsqrt.pop %v2141
      %v2144 = vmul.f32 %v2130, %v2142
      %v2145 = vmul.f32 %v2131, %v2143
      %v2147 = vlaneseq
      %v2148 = vshrl.u32 %v2147, 7
      %v2149 = vsub.s32 0, %v2148
      %v2150 = vrot.slane %v2122, %v2149
      %v2152 = vmul.f32 %v2144, %v2150
      %v2153 = vmul.f32 %v2145, %v2150
      %v2155 = vlaneseq
      %v2156 = vshrl.u32 %v2155, 7
      %v2157 = vsub.s32 0, %v2156
      %v2158 = vrot.slane %v2123, %v2157
      %v2160 = vadd.f32 %v2152, %v2158
      %v2161 = vadd.f32 %v2153, %v2158
      %2162 = vst [vmem:[%s440] sm:$0xff] %v2160
      %2163 = vst [vmem:[%s440 + $0x8] sm:$0xff] %v2161
      %p2164 = scmp.lt.s32.totalorder %s24, 1
      %s2165 = scalar_select %p2164, %s24, 1
      %s2166 = smul.addr %s2165, 2
      %s2167 = smul.addr %s2166, 8
      %s2168 = scalar_lea.vmem %s13, %s2167
      // Predicated region
      $region73: #{vit3d_forward.5} parent=71 // pred_check
        %p2169 = pneg %p320
      $region74: #{vit3d_forward.5} parent=71 // pred_check_branch
        %2171 = sbr.rel (%p2169) target = $region76
      $region75: #{vit3d_forward.5} parent=71 // pred_region
        _
      $region76: #{vit3d_forward.5} parent=71 // pred_fallthru
        _
    $region72: #{vit3d_forward.5} parent=5 // pred_fallthru
      _
    %p2172 = scmp.le.s32.totalorder 2, %s19
    // Predicated region
    $region77: #{vit3d_forward.5} parent=5 // pred_check
      %p2173 = pneg %p2172
    $region78: #{vit3d_forward.5} parent=5 // pred_check_branch
      %2175 = sbr.rel (%p2173) target = $region80
    $region79: #{vit3d_forward.5} parent=5 // pred_region
      %s2176 = ssub.s32 %s19, 2
      // Predicated region
      $region81: #{vit3d_forward.5} parent=79 // pred_check
        %p2177 = pneg %p326
      $region82: #{vit3d_forward.5} parent=79 // pred_check_branch
        %2179 = sbr.rel (%p2177) target = $region84
      $region83: #{vit3d_forward.5} parent=79 // pred_region
        %p2180 = scmp.lt.s32.totalorder %s25, 1
        %s2181 = scalar_select %p2180, %s25, 1
        %s2182 = smul.addr %s2181, 2
        %s2183 = smul.addr %s2182, 8
        %s2184 = scalar_lea.vmem %s13, %s2183
      $region84: #{vit3d_forward.5} parent=79 // pred_fallthru
        _
    $region80: #{vit3d_forward.5} parent=5 // pred_fallthru
      _
  $region6: #{vit3d_forward.5} parent=0 // loop_footer
    %s23 = sadd.s32 1, %s19
  $region7: #{vit3d_forward.5} parent=0 // loop_footer_branch
    %18 = sbr.rel target = $region3
  $region8: #{vit3d_forward.5} parent=0 // loop_exit
    _

</llo_original>
